<compile_context>
chip_gen: v6e
topology: v6e:2x2x1
jax: 0.10.0
libtpu: 0.0.40
codegen_flags: <defaults>
</compile_context>

<pallas_src>
import numpy as np
import jax
import jax.numpy as jnp
from jax.experimental import pallas as pl
from jax.experimental.pallas import tpu as pltpu


# --------------------------------------------------------------------------
# Host-side constant / weight re-packing (tiny, trace-time only).
# --------------------------------------------------------------------------

def _conv_band_weights(w, w_in, w_out):
    """w: (Cout, Cin, KH, KW) -> (KH, w_in*Cin, w_out*Cout) banded matrices.

    T[kh, wi*Cin+ci, wo*Cout+co] = w[co, ci, kh, wi-wo] if 0 <= wi-wo < KW.
    Then conv(x)[oh, wo*Cout+co] = sum_kh (x_row[oh+kh] @ T[kh])."""
    cout, cin, kh, kw = w.shape
    wi = np.arange(w_in)[:, None]
    wo = np.arange(w_out)[None, :]
    d = wi - wo                                       # (w_in, w_out)
    valid = ((d >= 0) & (d < kw)).astype(np.float32)
    dc = np.clip(d, 0, kw - 1)
    wt = jnp.transpose(w, (2, 1, 0, 3))               # (KH, Cin, Cout, KW)
    g = wt[:, :, :, dc]                               # (KH, Cin, Cout, w_in, w_out)
    g = g * jnp.asarray(valid)[None, None, None, :, :]
    g = jnp.transpose(g, (0, 3, 1, 4, 2))             # (KH, w_in, Cin, w_out, Cout)
    return g.reshape(kh, w_in * cin, w_out * cout)


def _pool_row_select(h_in):
    """Even / odd row selection matrices (h_in//2, h_in)."""
    h_out = h_in // 2
    rows = np.arange(h_in)[None, :]
    base = 2 * np.arange(h_out)[:, None]
    even = (rows == base).astype(np.float32)
    odd = (rows == base + 1).astype(np.float32)
    return jnp.asarray(even), jnp.asarray(odd)


def _pool_col_select(w_in, c):
    """Even / odd column-group selection matrices (w_in*c, (w_in//2)*c)."""
    w_out = w_in // 2
    ri = np.arange(w_in * c)
    ci = np.arange(w_out * c)
    rw, rc = ri // c, ri % c
    cw, cc = ci // c, ci % c
    same_c = rc[:, None] == cc[None, :]
    even = (same_c & (rw[:, None] == 2 * cw[None, :])).astype(np.float32)
    odd = (same_c & (rw[:, None] == 2 * cw[None, :] + 1)).astype(np.float32)
    return jnp.asarray(even), jnp.asarray(odd)


# --------------------------------------------------------------------------
# The fused Pallas kernel (one image per grid step).
# --------------------------------------------------------------------------

def _lenet_kernel(x_ref, t1_ref, b1_ref, e1v_ref, o1v_ref, e1h_ref, o1h_ref,
                  t2_ref, b2_ref, e2v_ref, o2v_ref, e2h_ref, o2h_ref,
                  wf1_ref, fb1_ref, wf2_ref, fb2_ref, wf3_ref, fb3_ref,
                  out_ref, p1_ref, p2_ref):
    f32 = jnp.float32

    def mm(a, b):
        return jnp.dot(a, b, preferred_element_type=f32)

    # ---- conv1 + bias + relu : (32, 32*3) -> (28, 28*6) -------------------
    a1 = mm(x_ref[0, 0:28, :], t1_ref[0])
    for kh in range(1, 5):
        a1 = a1 + mm(x_ref[0, kh:kh + 28, :], t1_ref[kh])
    a1 = jnp.maximum(a1 + b1_ref[...], 0.0)

    # ---- pool1 (2x2 max) : (28, 28*6) -> (14, 14*6) ------------------------
    r1 = jnp.maximum(mm(e1v_ref[...], a1), mm(o1v_ref[...], a1))
    p1_ref[...] = jnp.maximum(mm(r1, e1h_ref[...]), mm(r1, o1h_ref[...]))

    # ---- conv2 + bias + relu : (14, 14*6) -> (10, 10*16) -------------------
    a2 = mm(p1_ref[0:10, :], t2_ref[0])
    for kh in range(1, 5):
        a2 = a2 + mm(p1_ref[kh:kh + 10, :], t2_ref[kh])
    a2 = jnp.maximum(a2 + b2_ref[...], 0.0)

    # ---- pool2 (2x2 max) : (10, 10*16) -> (5, 5*16) ------------------------
    r2 = jnp.maximum(mm(e2v_ref[...], a2), mm(o2v_ref[...], a2))
    p2_ref[...] = jnp.maximum(mm(r2, e2h_ref[...]), mm(r2, o2h_ref[...]))

    # ---- fc1 + relu (flatten permutation folded into wf1) ------------------
    z = fb1_ref[...]                                  # (1, 120)
    for oh in range(5):
        z = z + mm(p2_ref[oh:oh + 1, :], wf1_ref[oh])
    z = jnp.maximum(z, 0.0)

    # ---- fc2 + relu ---------------------------------------------------------
    z = jnp.maximum(mm(z, wf2_ref[...]) + fb2_ref[...], 0.0)

    # ---- fc3 (output padded to 128 lanes -> lane-dense store) --------------
    out_ref[0] = mm(z, wf3_ref[...]) + fb3_ref[...]


# --------------------------------------------------------------------------
# Wrapper: host-side weight packing + the single pallas_call.
# --------------------------------------------------------------------------

def net_forward(x_nchw, params):
    (w1, b1, w2, b2, fw1, fb1, fw2, fb2, fw3, fb3) = params
    n = x_nchw.shape[0]
    f32 = jnp.float32

    # Input NCHW -> per-image (H, W*Cin) interleaved layout (one tiny transform).
    x = jnp.transpose(x_nchw, (0, 2, 3, 1)).reshape(n, 32, 32 * 3).astype(f32)

    t1 = _conv_band_weights(w1, 32, 28)               # (5, 96, 168)
    t2 = _conv_band_weights(w2, 14, 10)               # (5, 84, 160)
    b1r = jnp.tile(b1, 28).reshape(1, 28 * 6)         # (1, 168)
    b2r = jnp.tile(b2, 10).reshape(1, 10 * 16)        # (1, 160)
    e1v, o1v = _pool_row_select(28)                   # (14, 28)
    e1h, o1h = _pool_col_select(28, 6)                # (168, 84)
    e2v, o2v = _pool_row_select(10)                   # (5, 10)
    e2h, o2h = _pool_col_select(10, 16)               # (160, 80)

    # fc1 weight with the PyTorch view(-1, 16*5*5) flatten folded in:
    # wf1[oh, ow*16+c, j] = fw1[j, c*25 + oh*5 + ow]
    wf1 = jnp.transpose(fw1.reshape(120, 16, 5, 5),
                        (2, 3, 1, 0)).reshape(5, 80, 120)
    fb1r = fb1.reshape(1, 120)
    wf2 = fw2.T                                       # (120, 84)
    fb2r = fb2.reshape(1, 84)
    wf3 = jnp.zeros((84, 128), f32).at[:, :10].set(fw3.T)   # pad to 128 lanes
    fb3r = jnp.zeros((1, 128), f32).at[0, :10].set(fb3)

    inputs = (x, t1, b1r, e1v, o1v, e1h, o1h, t2, b2r, e2v, o2v, e2h, o2h,
              wf1, fb1r, wf2, fb2r, wf3, fb3r)

    def full_spec(a):
        nd = a.ndim
        return pl.BlockSpec(a.shape, lambda i, _nd=nd: (0,) * _nd)

    in_specs = [pl.BlockSpec((1, 32, 96), lambda i: (i, 0, 0))]
    in_specs += [full_spec(a) for a in inputs[1:]]

    flops_per_image = 2 * (5 * 28 * 96 * 168 + 2 * 14 * 28 * 168 +
                           2 * 14 * 168 * 84 + 5 * 10 * 84 * 160 +
                           2 * 5 * 10 * 160 + 2 * 5 * 160 * 80 +
                           5 * 80 * 120 + 120 * 84 + 84 * 128)
    bytes_accessed = 4 * (sum(int(np.prod(a.shape)) for a in inputs) + n * 128)

    out = pl.pallas_call(
        _lenet_kernel,
        out_shape=jax.ShapeDtypeStruct((n, 1, 128), f32),
        grid=(n,),
        in_specs=in_specs,
        out_specs=pl.BlockSpec((1, 1, 128), lambda i: (i, 0, 0)),
        scratch_shapes=[pltpu.VMEM((14, 84), f32),    # pool1 output
                        pltpu.VMEM((5, 80), f32)],    # pool2 output
        compiler_params=pltpu.CompilerParams(
            dimension_semantics=("parallel",),
            vmem_limit_bytes=32 * 1024 * 1024),
        cost_estimate=pl.CostEstimate(flops=n * flops_per_image,
                                      transcendentals=0,
                                      bytes_accessed=bytes_accessed),
    )(*inputs)
    return out[:, 0, :10]


# --------------------------------------------------------------------------
# Pure-JAX reference (for a numerical sanity check) and parameter init.
# --------------------------------------------------------------------------

def net_forward_reference(x, params):
    (w1, b1, w2, b2, fw1, fb1, fw2, fb2, fw3, fb3) = params
    dn = ('NCHW', 'OIHW', 'NCHW')
    h = jax.lax.conv_general_dilated(x, w1, (1, 1), 'VALID',
                                     dimension_numbers=dn)
    h = jnp.maximum(h + b1[None, :, None, None], 0.0)
    n, c, hh, ww = h.shape
    h = h.reshape(n, c, hh // 2, 2, ww // 2, 2).max(axis=(3, 5))
    h = jax.lax.conv_general_dilated(h, w2, (1, 1), 'VALID',
                                     dimension_numbers=dn)
    h = jnp.maximum(h + b2[None, :, None, None], 0.0)
    n, c, hh, ww = h.shape
    h = h.reshape(n, c, hh // 2, 2, ww // 2, 2).max(axis=(3, 5))
    flat = h.reshape(n, -1)
    h = jnp.maximum(flat @ fw1.T + fb1, 0.0)
    h = jnp.maximum(h @ fw2.T + fb2, 0.0)
    return h @ fw3.T + fb3


def init_params(key):
    """Deterministic init mirroring Net.initialize_weights(): xavier-normal
    conv weights, N(0, 0.01) linear weights, zero biases."""
    ks = jax.random.split(key, 5)

    def xavier_conv(k, cout, cin, kh, kw):
        fan_in, fan_out = cin * kh * kw, cout * kh * kw
        std = (2.0 / (fan_in + fan_out)) ** 0.5
        return std * jax.random.normal(k, (cout, cin, kh, kw), jnp.float32)

    def lin(k, out_f, in_f):
        return 0.01 * jax.random.normal(k, (out_f, in_f), jnp.float32)

    w1 = xavier_conv(ks[0], 6, 3, 5, 5)
    b1 = jnp.zeros((6,), jnp.float32)
    w2 = xavier_conv(ks[1], 16, 6, 5, 5)
    b2 = jnp.zeros((16,), jnp.float32)
    fw1 = lin(ks[2], 120, 400)
    fb1 = jnp.zeros((120,), jnp.float32)
    fw2 = lin(ks[3], 84, 120)
    fb2 = jnp.zeros((84,), jnp.float32)
    fw3 = lin(ks[4], 10, 84)
    fb3 = jnp.zeros((10,), jnp.float32)
    return (w1, b1, w2, b2, fw1, fb1, fw2, fb2, fw3, fb3)


if __name__ == "__main__":
    key = jax.random.PRNGKey(0)
    k_x, k_p = jax.random.split(key)
    # Spatial size must be 32x32 so the flatten is exactly 16*5*5 = 400.
    x = jax.random.normal(k_x, (2, 3, 32, 32), jnp.float32)   # NCHW, batch=2
    params = init_params(k_p)

    out = jax.block_until_ready(jax.jit(net_forward)(x, params))
    assert out.shape == (2, 10) and out.dtype == jnp.float32

    with jax.default_matmul_precision("highest"):
        ref = jax.block_until_ready(jax.jit(net_forward_reference)(x, params))
    max_diff = float(jnp.max(jnp.abs(out - ref)))
    assert jnp.allclose(out, ref, rtol=2e-2, atol=2e-5), max_diff

    print("KERNEL_OK")
</pallas_src>

<mosaic_0001>
module attributes {stable_mosaic.version = 11 : i64} {
  func.func @_lenet_kernel(%arg0: i32, %arg1: memref<1x32x96xf32, #tpu.memory_space<vmem>>, %arg2: memref<5x96x168xf32, #tpu.memory_space<vmem>>, %arg3: memref<1x168xf32, #tpu.memory_space<vmem>>, %arg4: memref<14x28xf32, #tpu.memory_space<vmem>>, %arg5: memref<14x28xf32, #tpu.memory_space<vmem>>, %arg6: memref<168x84xf32, #tpu.memory_space<vmem>>, %arg7: memref<168x84xf32, #tpu.memory_space<vmem>>, %arg8: memref<5x84x160xf32, #tpu.memory_space<vmem>>, %arg9: memref<1x160xf32, #tpu.memory_space<vmem>>, %arg10: memref<5x10xf32, #tpu.memory_space<vmem>>, %arg11: memref<5x10xf32, #tpu.memory_space<vmem>>, %arg12: memref<160x80xf32, #tpu.memory_space<vmem>>, %arg13: memref<160x80xf32, #tpu.memory_space<vmem>>, %arg14: memref<5x80x120xf32, #tpu.memory_space<vmem>>, %arg15: memref<1x120xf32, #tpu.memory_space<vmem>>, %arg16: memref<120x84xf32, #tpu.memory_space<vmem>>, %arg17: memref<1x84xf32, #tpu.memory_space<vmem>>, %arg18: memref<84x128xf32, #tpu.memory_space<vmem>>, %arg19: memref<1x128xf32, #tpu.memory_space<vmem>>, %arg20: memref<1x1x128xf32, #tpu.memory_space<vmem>>, %arg21: memref<14x84xf32, #tpu.memory_space<vmem>>, %arg22: memref<5x80xf32, #tpu.memory_space<vmem>>) attributes {dimension_semantics = [#tpu.dimension_semantics<parallel>], iteration_bounds = array<i64: 2>, scalar_prefetch = 0 : i64, scratch_operands = 2 : i64, tpu.core_type = #tpu.core_type<tc>, window_params = [{transform_indices = @transform_0, window_bounds = array<i64: 1, 32, 96>}, {pipeline_mode = #tpu.pipeline_mode<synchronous>, transform_indices = @transform_1, window_bounds = array<i64: 5, 96, 168>}, {pipeline_mode = #tpu.pipeline_mode<synchronous>, transform_indices = @transform_2, window_bounds = array<i64: 1, 168>}, {pipeline_mode = #tpu.pipeline_mode<synchronous>, transform_indices = @transform_3, window_bounds = array<i64: 14, 28>}, {pipeline_mode = #tpu.pipeline_mode<synchronous>, transform_indices = @transform_4, window_bounds = array<i64: 14, 28>}, {pipeline_mode = #tpu.pipeline_mode<synchronous>, transform_indices = @transform_5, window_bounds = array<i64: 168, 84>}, {pipeline_mode = #tpu.pipeline_mode<synchronous>, transform_indices = @transform_6, window_bounds = array<i64: 168, 84>}, {pipeline_mode = #tpu.pipeline_mode<synchronous>, transform_indices = @transform_7, window_bounds = array<i64: 5, 84, 160>}, {pipeline_mode = #tpu.pipeline_mode<synchronous>, transform_indices = @transform_8, window_bounds = array<i64: 1, 160>}, {pipeline_mode = #tpu.pipeline_mode<synchronous>, transform_indices = @transform_9, window_bounds = array<i64: 5, 10>}, {pipeline_mode = #tpu.pipeline_mode<synchronous>, transform_indices = @transform_10, window_bounds = array<i64: 5, 10>}, {pipeline_mode = #tpu.pipeline_mode<synchronous>, transform_indices = @transform_11, window_bounds = array<i64: 160, 80>}, {pipeline_mode = #tpu.pipeline_mode<synchronous>, transform_indices = @transform_12, window_bounds = array<i64: 160, 80>}, {pipeline_mode = #tpu.pipeline_mode<synchronous>, transform_indices = @transform_13, window_bounds = array<i64: 5, 80, 120>}, {pipeline_mode = #tpu.pipeline_mode<synchronous>, transform_indices = @transform_14, window_bounds = array<i64: 1, 120>}, {pipeline_mode = #tpu.pipeline_mode<synchronous>, transform_indices = @transform_15, window_bounds = array<i64: 120, 84>}, {pipeline_mode = #tpu.pipeline_mode<synchronous>, transform_indices = @transform_16, window_bounds = array<i64: 1, 84>}, {pipeline_mode = #tpu.pipeline_mode<synchronous>, transform_indices = @transform_17, window_bounds = array<i64: 84, 128>}, {pipeline_mode = #tpu.pipeline_mode<synchronous>, transform_indices = @transform_18, window_bounds = array<i64: 1, 128>}, {transform_indices = @transform_19, window_bounds = array<i64: 1, 1, 128>}]} {
    %c0 = arith.constant 0 : index
    %c0_0 = arith.constant 0 : index
    %c0_1 = arith.constant 0 : index
    %0 = vector.load %arg1[%c0, %c0_0, %c0_1] : memref<1x32x96xf32, #tpu.memory_space<vmem>>, vector<1x28x96xf32>
    %1 = vector.shape_cast %0 : vector<1x28x96xf32> to vector<28x96xf32>
    %c0_2 = arith.constant 0 : index
    %c0_3 = arith.constant 0 : index
    %c0_4 = arith.constant 0 : index
    %2 = vector.load %arg2[%c0_2, %c0_3, %c0_4] : memref<5x96x168xf32, #tpu.memory_space<vmem>>, vector<1x96x168xf32>
    %3 = vector.shape_cast %2 : vector<1x96x168xf32> to vector<96x168xf32>
    %cst = arith.constant dense<0.000000e+00> : vector<28x168xf32>
    %4 = tpu.matmul %1, %3, %cst {dimension_numbers = #tpu.dot_dimension_numbers<[1], [0], [0], [1], [0, 0, 1, 1], [], []>} : vector<28x96xf32>, vector<96x168xf32>, vector<28x168xf32> -> vector<28x168xf32>
    %c0_5 = arith.constant 0 : index
    %c1 = arith.constant 1 : index
    %c0_6 = arith.constant 0 : index
    %5 = vector.load %arg1[%c0_5, %c1, %c0_6] : memref<1x32x96xf32, #tpu.memory_space<vmem>>, vector<1x28x96xf32>
    %6 = vector.shape_cast %5 : vector<1x28x96xf32> to vector<28x96xf32>
    %c1_7 = arith.constant 1 : index
    %c0_8 = arith.constant 0 : index
    %c0_9 = arith.constant 0 : index
    %7 = vector.load %arg2[%c1_7, %c0_8, %c0_9] : memref<5x96x168xf32, #tpu.memory_space<vmem>>, vector<1x96x168xf32>
    %8 = vector.shape_cast %7 : vector<1x96x168xf32> to vector<96x168xf32>
    %cst_10 = arith.constant dense<0.000000e+00> : vector<28x168xf32>
    %9 = tpu.matmul %6, %8, %cst_10 {dimension_numbers = #tpu.dot_dimension_numbers<[1], [0], [0], [1], [0, 0, 1, 1], [], []>} : vector<28x96xf32>, vector<96x168xf32>, vector<28x168xf32> -> vector<28x168xf32>
    %10 = arith.addf %4, %9 : vector<28x168xf32>
    %c0_11 = arith.constant 0 : index
    %c2 = arith.constant 2 : index
    %c0_12 = arith.constant 0 : index
    %11 = vector.load %arg1[%c0_11, %c2, %c0_12] : memref<1x32x96xf32, #tpu.memory_space<vmem>>, vector<1x28x96xf32>
    %12 = vector.shape_cast %11 : vector<1x28x96xf32> to vector<28x96xf32>
    %c2_13 = arith.constant 2 : index
    %c0_14 = arith.constant 0 : index
    %c0_15 = arith.constant 0 : index
    %13 = vector.load %arg2[%c2_13, %c0_14, %c0_15] : memref<5x96x168xf32, #tpu.memory_space<vmem>>, vector<1x96x168xf32>
    %14 = vector.shape_cast %13 : vector<1x96x168xf32> to vector<96x168xf32>
    %cst_16 = arith.constant dense<0.000000e+00> : vector<28x168xf32>
    %15 = tpu.matmul %12, %14, %cst_16 {dimension_numbers = #tpu.dot_dimension_numbers<[1], [0], [0], [1], [0, 0, 1, 1], [], []>} : vector<28x96xf32>, vector<96x168xf32>, vector<28x168xf32> -> vector<28x168xf32>
    %16 = arith.addf %10, %15 : vector<28x168xf32>
    %c0_17 = arith.constant 0 : index
    %c3 = arith.constant 3 : index
    %c0_18 = arith.constant 0 : index
    %17 = vector.load %arg1[%c0_17, %c3, %c0_18] : memref<1x32x96xf32, #tpu.memory_space<vmem>>, vector<1x28x96xf32>
    %18 = vector.shape_cast %17 : vector<1x28x96xf32> to vector<28x96xf32>
    %c3_19 = arith.constant 3 : index
    %c0_20 = arith.constant 0 : index
    %c0_21 = arith.constant 0 : index
    %19 = vector.load %arg2[%c3_19, %c0_20, %c0_21] : memref<5x96x168xf32, #tpu.memory_space<vmem>>, vector<1x96x168xf32>
    %20 = vector.shape_cast %19 : vector<1x96x168xf32> to vector<96x168xf32>
    %cst_22 = arith.constant dense<0.000000e+00> : vector<28x168xf32>
    %21 = tpu.matmul %18, %20, %cst_22 {dimension_numbers = #tpu.dot_dimension_numbers<[1], [0], [0], [1], [0, 0, 1, 1], [], []>} : vector<28x96xf32>, vector<96x168xf32>, vector<28x168xf32> -> vector<28x168xf32>
    %22 = arith.addf %16, %21 : vector<28x168xf32>
    %c0_23 = arith.constant 0 : index
    %c4 = arith.constant 4 : index
    %c0_24 = arith.constant 0 : index
    %23 = vector.load %arg1[%c0_23, %c4, %c0_24] : memref<1x32x96xf32, #tpu.memory_space<vmem>>, vector<1x28x96xf32>
    %24 = vector.shape_cast %23 : vector<1x28x96xf32> to vector<28x96xf32>
    %c4_25 = arith.constant 4 : index
    %c0_26 = arith.constant 0 : index
    %c0_27 = arith.constant 0 : index
    %25 = vector.load %arg2[%c4_25, %c0_26, %c0_27] : memref<5x96x168xf32, #tpu.memory_space<vmem>>, vector<1x96x168xf32>
    %26 = vector.shape_cast %25 : vector<1x96x168xf32> to vector<96x168xf32>
    %cst_28 = arith.constant dense<0.000000e+00> : vector<28x168xf32>
    %27 = tpu.matmul %24, %26, %cst_28 {dimension_numbers = #tpu.dot_dimension_numbers<[1], [0], [0], [1], [0, 0, 1, 1], [], []>} : vector<28x96xf32>, vector<96x168xf32>, vector<28x168xf32> -> vector<28x168xf32>
    %28 = arith.addf %22, %27 : vector<28x168xf32>
    %c0_29 = arith.constant 0 : index
    %c0_30 = arith.constant 0 : index
    %29 = vector.load %arg3[%c0_29, %c0_30] : memref<1x168xf32, #tpu.memory_space<vmem>>, vector<1x168xf32>
    %30 = vector.broadcast %29 : vector<1x168xf32> to vector<28x168xf32>
    %31 = arith.addf %28, %30 : vector<28x168xf32>
    %cst_31 = arith.constant 0.000000e+00 : f32
    %32 = vector.broadcast %cst_31 : f32 to vector<28x168xf32>
    %33 = arith.maximumf %31, %32 : vector<28x168xf32>
    %c0_32 = arith.constant 0 : index
    %c0_33 = arith.constant 0 : index
    %34 = vector.load %arg4[%c0_32, %c0_33] : memref<14x28xf32, #tpu.memory_space<vmem>>, vector<14x28xf32>
    %cst_34 = arith.constant dense<0.000000e+00> : vector<14x168xf32>
    %35 = tpu.matmul %34, %33, %cst_34 {dimension_numbers = #tpu.dot_dimension_numbers<[1], [0], [0], [1], [0, 0, 1, 1], [], []>} : vector<14x28xf32>, vector<28x168xf32>, vector<14x168xf32> -> vector<14x168xf32>
    %c0_35 = arith.constant 0 : index
    %c0_36 = arith.constant 0 : index
    %36 = vector.load %arg5[%c0_35, %c0_36] : memref<14x28xf32, #tpu.memory_space<vmem>>, vector<14x28xf32>
    %cst_37 = arith.constant dense<0.000000e+00> : vector<14x168xf32>
    %37 = tpu.matmul %36, %33, %cst_37 {dimension_numbers = #tpu.dot_dimension_numbers<[1], [0], [0], [1], [0, 0, 1, 1], [], []>} : vector<14x28xf32>, vector<28x168xf32>, vector<14x168xf32> -> vector<14x168xf32>
    %38 = arith.maximumf %35, %37 : vector<14x168xf32>
    %c0_38 = arith.constant 0 : index
    %c0_39 = arith.constant 0 : index
    %39 = vector.load %arg6[%c0_38, %c0_39] : memref<168x84xf32, #tpu.memory_space<vmem>>, vector<168x84xf32>
    %cst_40 = arith.constant dense<0.000000e+00> : vector<14x84xf32>
    %40 = tpu.matmul %38, %39, %cst_40 {dimension_numbers = #tpu.dot_dimension_numbers<[1], [0], [0], [1], [0, 0, 1, 1], [], []>} : vector<14x168xf32>, vector<168x84xf32>, vector<14x84xf32> -> vector<14x84xf32>
    %c0_41 = arith.constant 0 : index
    %c0_42 = arith.constant 0 : index
    %41 = vector.load %arg7[%c0_41, %c0_42] : memref<168x84xf32, #tpu.memory_space<vmem>>, vector<168x84xf32>
    %cst_43 = arith.constant dense<0.000000e+00> : vector<14x84xf32>
    %42 = tpu.matmul %38, %41, %cst_43 {dimension_numbers = #tpu.dot_dimension_numbers<[1], [0], [0], [1], [0, 0, 1, 1], [], []>} : vector<14x168xf32>, vector<168x84xf32>, vector<14x84xf32> -> vector<14x84xf32>
    %43 = arith.maximumf %40, %42 : vector<14x84xf32>
    %c0_44 = arith.constant 0 : index
    %c0_45 = arith.constant 0 : index
    %44 = vector.load %arg21[%c0_44, %c0_45] : memref<14x84xf32, #tpu.memory_space<vmem>>, vector<14x84xf32>
    tpu.vector_store %arg21[%c0_44, %c0_45], %43 {strides = array<i32>} : memref<14x84xf32, #tpu.memory_space<vmem>>, vector<14x84xf32>,
    %c0_46 = arith.constant 0 : index
    %c0_47 = arith.constant 0 : index
    %45 = vector.load %arg21[%c0_46, %c0_47] : memref<14x84xf32, #tpu.memory_space<vmem>>, vector<10x84xf32>
    %c0_48 = arith.constant 0 : index
    %c0_49 = arith.constant 0 : index
    %c0_50 = arith.constant 0 : index
    %46 = vector.load %arg8[%c0_48, %c0_49, %c0_50] : memref<5x84x160xf32, #tpu.memory_space<vmem>>, vector<1x84x160xf32>
    %47 = vector.shape_cast %46 : vector<1x84x160xf32> to vector<84x160xf32>
    %cst_51 = arith.constant dense<0.000000e+00> : vector<10x160xf32>
    %48 = tpu.matmul %45, %47, %cst_51 {dimension_numbers = #tpu.dot_dimension_numbers<[1], [0], [0], [1], [0, 0, 1, 1], [], []>} : vector<10x84xf32>, vector<84x160xf32>, vector<10x160xf32> -> vector<10x160xf32>
    %c1_52 = arith.constant 1 : index
    %c0_53 = arith.constant 0 : index
    %49 = vector.load %arg21[%c1_52, %c0_53] : memref<14x84xf32, #tpu.memory_space<vmem>>, vector<10x84xf32>
    %c1_54 = arith.constant 1 : index
    %c0_55 = arith.constant 0 : index
    %c0_56 = arith.constant 0 : index
    %50 = vector.load %arg8[%c1_54, %c0_55, %c0_56] : memref<5x84x160xf32, #tpu.memory_space<vmem>>, vector<1x84x160xf32>
    %51 = vector.shape_cast %50 : vector<1x84x160xf32> to vector<84x160xf32>
    %cst_57 = arith.constant dense<0.000000e+00> : vector<10x160xf32>
    %52 = tpu.matmul %49, %51, %cst_57 {dimension_numbers = #tpu.dot_dimension_numbers<[1], [0], [0], [1], [0, 0, 1, 1], [], []>} : vector<10x84xf32>, vector<84x160xf32>, vector<10x160xf32> -> vector<10x160xf32>
    %53 = arith.addf %48, %52 : vector<10x160xf32>
    %c2_58 = arith.constant 2 : index
    %c0_59 = arith.constant 0 : index
    %54 = vector.load %arg21[%c2_58, %c0_59] : memref<14x84xf32, #tpu.memory_space<vmem>>, vector<10x84xf32>
    %c2_60 = arith.constant 2 : index
    %c0_61 = arith.constant 0 : index
    %c0_62 = arith.constant 0 : index
    %55 = vector.load %arg8[%c2_60, %c0_61, %c0_62] : memref<5x84x160xf32, #tpu.memory_space<vmem>>, vector<1x84x160xf32>
    %56 = vector.shape_cast %55 : vector<1x84x160xf32> to vector<84x160xf32>
    %cst_63 = arith.constant dense<0.000000e+00> : vector<10x160xf32>
    %57 = tpu.matmul %54, %56, %cst_63 {dimension_numbers = #tpu.dot_dimension_numbers<[1], [0], [0], [1], [0, 0, 1, 1], [], []>} : vector<10x84xf32>, vector<84x160xf32>, vector<10x160xf32> -> vector<10x160xf32>
    %58 = arith.addf %53, %57 : vector<10x160xf32>
    %c3_64 = arith.constant 3 : index
    %c0_65 = arith.constant 0 : index
    %59 = vector.load %arg21[%c3_64, %c0_65] : memref<14x84xf32, #tpu.memory_space<vmem>>, vector<10x84xf32>
    %c3_66 = arith.constant 3 : index
    %c0_67 = arith.constant 0 : index
    %c0_68 = arith.constant 0 : index
    %60 = vector.load %arg8[%c3_66, %c0_67, %c0_68] : memref<5x84x160xf32, #tpu.memory_space<vmem>>, vector<1x84x160xf32>
    %61 = vector.shape_cast %60 : vector<1x84x160xf32> to vector<84x160xf32>
    %cst_69 = arith.constant dense<0.000000e+00> : vector<10x160xf32>
    %62 = tpu.matmul %59, %61, %cst_69 {dimension_numbers = #tpu.dot_dimension_numbers<[1], [0], [0], [1], [0, 0, 1, 1], [], []>} : vector<10x84xf32>, vector<84x160xf32>, vector<10x160xf32> -> vector<10x160xf32>
    %63 = arith.addf %58, %62 : vector<10x160xf32>
    %c4_70 = arith.constant 4 : index
    %c0_71 = arith.constant 0 : index
    %64 = vector.load %arg21[%c4_70, %c0_71] : memref<14x84xf32, #tpu.memory_space<vmem>>, vector<10x84xf32>
    %c4_72 = arith.constant 4 : index
    %c0_73 = arith.constant 0 : index
    %c0_74 = arith.constant 0 : index
    %65 = vector.load %arg8[%c4_72, %c0_73, %c0_74] : memref<5x84x160xf32, #tpu.memory_space<vmem>>, vector<1x84x160xf32>
    %66 = vector.shape_cast %65 : vector<1x84x160xf32> to vector<84x160xf32>
    %cst_75 = arith.constant dense<0.000000e+00> : vector<10x160xf32>
    %67 = tpu.matmul %64, %66, %cst_75 {dimension_numbers = #tpu.dot_dimension_numbers<[1], [0], [0], [1], [0, 0, 1, 1], [], []>} : vector<10x84xf32>, vector<84x160xf32>, vector<10x160xf32> -> vector<10x160xf32>
    %68 = arith.addf %63, %67 : vector<10x160xf32>
    %c0_76 = arith.constant 0 : index
    %c0_77 = arith.constant 0 : index
    %69 = vector.load %arg9[%c0_76, %c0_77] : memref<1x160xf32, #tpu.memory_space<vmem>>, vector<1x160xf32>
    %70 = vector.broadcast %69 : vector<1x160xf32> to vector<10x160xf32>
    %71 = arith.addf %68, %70 : vector<10x160xf32>
    %cst_78 = arith.constant 0.000000e+00 : f32
    %72 = vector.broadcast %cst_78 : f32 to vector<10x160xf32>
    %73 = arith.maximumf %71, %72 : vector<10x160xf32>
    %c0_79 = arith.constant 0 : index
    %c0_80 = arith.constant 0 : index
    %74 = vector.load %arg10[%c0_79, %c0_80] : memref<5x10xf32, #tpu.memory_space<vmem>>, vector<5x10xf32>
    %cst_81 = arith.constant dense<0.000000e+00> : vector<5x160xf32>
    %75 = tpu.matmul %74, %73, %cst_81 {dimension_numbers = #tpu.dot_dimension_numbers<[1], [0], [0], [1], [0, 0, 1, 1], [], []>} : vector<5x10xf32>, vector<10x160xf32>, vector<5x160xf32> -> vector<5x160xf32>
    %c0_82 = arith.constant 0 : index
    %c0_83 = arith.constant 0 : index
    %76 = vector.load %arg11[%c0_82, %c0_83] : memref<5x10xf32, #tpu.memory_space<vmem>>, vector<5x10xf32>
    %cst_84 = arith.constant dense<0.000000e+00> : vector<5x160xf32>
    %77 = tpu.matmul %76, %73, %cst_84 {dimension_numbers = #tpu.dot_dimension_numbers<[1], [0], [0], [1], [0, 0, 1, 1], [], []>} : vector<5x10xf32>, vector<10x160xf32>, vector<5x160xf32> -> vector<5x160xf32>
    %78 = arith.maximumf %75, %77 : vector<5x160xf32>
    %c0_85 = arith.constant 0 : index
    %c0_86 = arith.constant 0 : index
    %79 = vector.load %arg12[%c0_85, %c0_86] : memref<160x80xf32, #tpu.memory_space<vmem>>, vector<160x80xf32>
    %cst_87 = arith.constant dense<0.000000e+00> : vector<5x80xf32>
    %80 = tpu.matmul %78, %79, %cst_87 {dimension_numbers = #tpu.dot_dimension_numbers<[1], [0], [0], [1], [0, 0, 1, 1], [], []>} : vector<5x160xf32>, vector<160x80xf32>, vector<5x80xf32> -> vector<5x80xf32>
    %c0_88 = arith.constant 0 : index
    %c0_89 = arith.constant 0 : index
    %81 = vector.load %arg13[%c0_88, %c0_89] : memref<160x80xf32, #tpu.memory_space<vmem>>, vector<160x80xf32>
    %cst_90 = arith.constant dense<0.000000e+00> : vector<5x80xf32>
    %82 = tpu.matmul %78, %81, %cst_90 {dimension_numbers = #tpu.dot_dimension_numbers<[1], [0], [0], [1], [0, 0, 1, 1], [], []>} : vector<5x160xf32>, vector<160x80xf32>, vector<5x80xf32> -> vector<5x80xf32>
    %83 = arith.maximumf %80, %82 : vector<5x80xf32>
    %c0_91 = arith.constant 0 : index
    %c0_92 = arith.constant 0 : index
    %84 = vector.load %arg22[%c0_91, %c0_92] : memref<5x80xf32, #tpu.memory_space<vmem>>, vector<5x80xf32>
    tpu.vector_store %arg22[%c0_91, %c0_92], %83 {strides = array<i32>} : memref<5x80xf32, #tpu.memory_space<vmem>>, vector<5x80xf32>,
    %c0_93 = arith.constant 0 : index
    %c0_94 = arith.constant 0 : index
    %85 = vector.load %arg15[%c0_93, %c0_94] : memref<1x120xf32, #tpu.memory_space<vmem>>, vector<1x120xf32>
    %c0_95 = arith.constant 0 : index
    %c0_96 = arith.constant 0 : index
    %86 = vector.load %arg22[%c0_95, %c0_96] : memref<5x80xf32, #tpu.memory_space<vmem>>, vector<1x80xf32>
    %c0_97 = arith.constant 0 : index
    %c0_98 = arith.constant 0 : index
    %c0_99 = arith.constant 0 : index
    %87 = vector.load %arg14[%c0_97, %c0_98, %c0_99] : memref<5x80x120xf32, #tpu.memory_space<vmem>>, vector<1x80x120xf32>
    %88 = vector.shape_cast %87 : vector<1x80x120xf32> to vector<80x120xf32>
    %cst_100 = arith.constant dense<0.000000e+00> : vector<1x120xf32>
    %89 = tpu.matmul %86, %88, %cst_100 {dimension_numbers = #tpu.dot_dimension_numbers<[1], [0], [0], [1], [0, 0, 1, 1], [], []>} : vector<1x80xf32>, vector<80x120xf32>, vector<1x120xf32> -> vector<1x120xf32>
    %90 = arith.addf %85, %89 : vector<1x120xf32>
    %c1_101 = arith.constant 1 : index
    %c0_102 = arith.constant 0 : index
    %91 = vector.load %arg22[%c1_101, %c0_102] : memref<5x80xf32, #tpu.memory_space<vmem>>, vector<1x80xf32>
    %c1_103 = arith.constant 1 : index
    %c0_104 = arith.constant 0 : index
    %c0_105 = arith.constant 0 : index
    %92 = vector.load %arg14[%c1_103, %c0_104, %c0_105] : memref<5x80x120xf32, #tpu.memory_space<vmem>>, vector<1x80x120xf32>
    %93 = vector.shape_cast %92 : vector<1x80x120xf32> to vector<80x120xf32>
    %cst_106 = arith.constant dense<0.000000e+00> : vector<1x120xf32>
    %94 = tpu.matmul %91, %93, %cst_106 {dimension_numbers = #tpu.dot_dimension_numbers<[1], [0], [0], [1], [0, 0, 1, 1], [], []>} : vector<1x80xf32>, vector<80x120xf32>, vector<1x120xf32> -> vector<1x120xf32>
    %95 = arith.addf %90, %94 : vector<1x120xf32>
    %c2_107 = arith.constant 2 : index
    %c0_108 = arith.constant 0 : index
    %96 = vector.load %arg22[%c2_107, %c0_108] : memref<5x80xf32, #tpu.memory_space<vmem>>, vector<1x80xf32>
    %c2_109 = arith.constant 2 : index
    %c0_110 = arith.constant 0 : index
    %c0_111 = arith.constant 0 : index
    %97 = vector.load %arg14[%c2_109, %c0_110, %c0_111] : memref<5x80x120xf32, #tpu.memory_space<vmem>>, vector<1x80x120xf32>
    %98 = vector.shape_cast %97 : vector<1x80x120xf32> to vector<80x120xf32>
    %cst_112 = arith.constant dense<0.000000e+00> : vector<1x120xf32>
    %99 = tpu.matmul %96, %98, %cst_112 {dimension_numbers = #tpu.dot_dimension_numbers<[1], [0], [0], [1], [0, 0, 1, 1], [], []>} : vector<1x80xf32>, vector<80x120xf32>, vector<1x120xf32> -> vector<1x120xf32>
    %100 = arith.addf %95, %99 : vector<1x120xf32>
    %c3_113 = arith.constant 3 : index
    %c0_114 = arith.constant 0 : index
    %101 = vector.load %arg22[%c3_113, %c0_114] : memref<5x80xf32, #tpu.memory_space<vmem>>, vector<1x80xf32>
    %c3_115 = arith.constant 3 : index
    %c0_116 = arith.constant 0 : index
    %c0_117 = arith.constant 0 : index
    %102 = vector.load %arg14[%c3_115, %c0_116, %c0_117] : memref<5x80x120xf32, #tpu.memory_space<vmem>>, vector<1x80x120xf32>
    %103 = vector.shape_cast %102 : vector<1x80x120xf32> to vector<80x120xf32>
    %cst_118 = arith.constant dense<0.000000e+00> : vector<1x120xf32>
    %104 = tpu.matmul %101, %103, %cst_118 {dimension_numbers = #tpu.dot_dimension_numbers<[1], [0], [0], [1], [0, 0, 1, 1], [], []>} : vector<1x80xf32>, vector<80x120xf32>, vector<1x120xf32> -> vector<1x120xf32>
    %105 = arith.addf %100, %104 : vector<1x120xf32>
    %c4_119 = arith.constant 4 : index
    %c0_120 = arith.constant 0 : index
    %106 = vector.load %arg22[%c4_119, %c0_120] : memref<5x80xf32, #tpu.memory_space<vmem>>, vector<1x80xf32>
    %c4_121 = arith.constant 4 : index
    %c0_122 = arith.constant 0 : index
    %c0_123 = arith.constant 0 : index
    %107 = vector.load %arg14[%c4_121, %c0_122, %c0_123] : memref<5x80x120xf32, #tpu.memory_space<vmem>>, vector<1x80x120xf32>
    %108 = vector.shape_cast %107 : vector<1x80x120xf32> to vector<80x120xf32>
    %cst_124 = arith.constant dense<0.000000e+00> : vector<1x120xf32>
    %109 = tpu.matmul %106, %108, %cst_124 {dimension_numbers = #tpu.dot_dimension_numbers<[1], [0], [0], [1], [0, 0, 1, 1], [], []>} : vector<1x80xf32>, vector<80x120xf32>, vector<1x120xf32> -> vector<1x120xf32>
    %110 = arith.addf %105, %109 : vector<1x120xf32>
    %cst_125 = arith.constant 0.000000e+00 : f32
    %111 = vector.broadcast %cst_125 : f32 to vector<1x120xf32>
    %112 = arith.maximumf %110, %111 : vector<1x120xf32>
    %c0_126 = arith.constant 0 : index
    %c0_127 = arith.constant 0 : index
    %113 = vector.load %arg16[%c0_126, %c0_127] : memref<120x84xf32, #tpu.memory_space<vmem>>, vector<120x84xf32>
    %cst_128 = arith.constant dense<0.000000e+00> : vector<1x84xf32>
    %114 = tpu.matmul %112, %113, %cst_128 {dimension_numbers = #tpu.dot_dimension_numbers<[1], [0], [0], [1], [0, 0, 1, 1], [], []>} : vector<1x120xf32>, vector<120x84xf32>, vector<1x84xf32> -> vector<1x84xf32>
    %c0_129 = arith.constant 0 : index
    %c0_130 = arith.constant 0 : index
    %115 = vector.load %arg17[%c0_129, %c0_130] : memref<1x84xf32, #tpu.memory_space<vmem>>, vector<1x84xf32>
    %116 = arith.addf %114, %115 : vector<1x84xf32>
    %cst_131 = arith.constant 0.000000e+00 : f32
    %117 = vector.broadcast %cst_131 : f32 to vector<1x84xf32>
    %118 = arith.maximumf %116, %117 : vector<1x84xf32>
    %c0_132 = arith.constant 0 : index
    %c0_133 = arith.constant 0 : index
    %119 = vector.load %arg18[%c0_132, %c0_133] : memref<84x128xf32, #tpu.memory_space<vmem>>, vector<84x128xf32>
    %cst_134 = arith.constant dense<0.000000e+00> : vector<1x128xf32>
    %120 = tpu.matmul %118, %119, %cst_134 {dimension_numbers = #tpu.dot_dimension_numbers<[1], [0], [0], [1], [0, 0, 1, 1], [], []>} : vector<1x84xf32>, vector<84x128xf32>, vector<1x128xf32> -> vector<1x128xf32>
    %c0_135 = arith.constant 0 : index
    %c0_136 = arith.constant 0 : index
    %121 = vector.load %arg19[%c0_135, %c0_136] : memref<1x128xf32, #tpu.memory_space<vmem>>, vector<1x128xf32>
    %122 = arith.addf %120, %121 : vector<1x128xf32>
    %c0_137 = arith.constant 0 : index
    %c0_138 = arith.constant 0 : index
    %c0_139 = arith.constant 0 : index
    %123 = vector.load %arg20[%c0_137, %c0_138, %c0_139] : memref<1x1x128xf32, #tpu.memory_space<vmem>>, vector<1x1x128xf32>
    %124 = vector.shape_cast %123 : vector<1x1x128xf32> to vector<1x128xf32>
    %125 = vector.shape_cast %122 : vector<1x128xf32> to vector<1x1x128xf32>
    tpu.vector_store %arg20[%c0_137, %c0_138, %c0_139], %125 {strides = array<i32>} : memref<1x1x128xf32, #tpu.memory_space<vmem>>, vector<1x1x128xf32>,
    return
  }
  func.func @transform_0(%arg0: i32) -> (i32, i32, i32) {
    %c0_i32 = arith.constant 0 : i32
    %c0_i32_0 = arith.constant 0 : i32
    %c0_i32_1 = arith.constant 0 : i32
    return %arg0, %c0_i32, %c0_i32_0 : i32, i32, i32
  }
  func.func @transform_1(%arg0: i32) -> (i32, i32, i32) {
    %c0_i32 = arith.constant 0 : i32
    %c0_i32_0 = arith.constant 0 : i32
    %c0_i32_1 = arith.constant 0 : i32
    %c0_i32_2 = arith.constant 0 : i32
    return %c0_i32, %c0_i32_0, %c0_i32_1 : i32, i32, i32
  }
  func.func @transform_2(%arg0: i32) -> (i32, i32) {
    %c0_i32 = arith.constant 0 : i32
    %c0_i32_0 = arith.constant 0 : i32
    %c0_i32_1 = arith.constant 0 : i32
    return %c0_i32, %c0_i32_0 : i32, i32
  }
  func.func @transform_3(%arg0: i32) -> (i32, i32) {
    %c0_i32 = arith.constant 0 : i32
    %c0_i32_0 = arith.constant 0 : i32
    %c0_i32_1 = arith.constant 0 : i32
    return %c0_i32, %c0_i32_0 : i32, i32
  }
  func.func @transform_4(%arg0: i32) -> (i32, i32) {
    %c0_i32 = arith.constant 0 : i32
    %c0_i32_0 = arith.constant 0 : i32
    %c0_i32_1 = arith.constant 0 : i32
    return %c0_i32, %c0_i32_0 : i32, i32
  }
  func.func @transform_5(%arg0: i32) -> (i32, i32) {
    %c0_i32 = arith.constant 0 : i32
    %c0_i32_0 = arith.constant 0 : i32
    %c0_i32_1 = arith.constant 0 : i32
    return %c0_i32, %c0_i32_0 : i32, i32
  }
  func.func @transform_6(%arg0: i32) -> (i32, i32) {
    %c0_i32 = arith.constant 0 : i32
    %c0_i32_0 = arith.constant 0 : i32
    %c0_i32_1 = arith.constant 0 : i32
    return %c0_i32, %c0_i32_0 : i32, i32
  }
  func.func @transform_7(%arg0: i32) -> (i32, i32, i32) {
    %c0_i32 = arith.constant 0 : i32
    %c0_i32_0 = arith.constant 0 : i32
    %c0_i32_1 = arith.constant 0 : i32
    %c0_i32_2 = arith.constant 0 : i32
    return %c0_i32, %c0_i32_0, %c0_i32_1 : i32, i32, i32
  }
  func.func @transform_8(%arg0: i32) -> (i32, i32) {
    %c0_i32 = arith.constant 0 : i32
    %c0_i32_0 = arith.constant 0 : i32
    %c0_i32_1 = arith.constant 0 : i32
    return %c0_i32, %c0_i32_0 : i32, i32
  }
  func.func @transform_9(%arg0: i32) -> (i32, i32) {
    %c0_i32 = arith.constant 0 : i32
    %c0_i32_0 = arith.constant 0 : i32
    %c0_i32_1 = arith.constant 0 : i32
    return %c0_i32, %c0_i32_0 : i32, i32
  }
  func.func @transform_10(%arg0: i32) -> (i32, i32) {
    %c0_i32 = arith.constant 0 : i32
    %c0_i32_0 = arith.constant 0 : i32
    %c0_i32_1 = arith.constant 0 : i32
    return %c0_i32, %c0_i32_0 : i32, i32
  }
  func.func @transform_11(%arg0: i32) -> (i32, i32) {
    %c0_i32 = arith.constant 0 : i32
    %c0_i32_0 = arith.constant 0 : i32
    %c0_i32_1 = arith.constant 0 : i32
    return %c0_i32, %c0_i32_0 : i32, i32
  }
  func.func @transform_12(%arg0: i32) -> (i32, i32) {
    %c0_i32 = arith.constant 0 : i32
    %c0_i32_0 = arith.constant 0 : i32
    %c0_i32_1 = arith.constant 0 : i32
    return %c0_i32, %c0_i32_0 : i32, i32
  }
  func.func @transform_13(%arg0: i32) -> (i32, i32, i32) {
    %c0_i32 = arith.constant 0 : i32
    %c0_i32_0 = arith.constant 0 : i32
    %c0_i32_1 = arith.constant 0 : i32
    %c0_i32_2 = arith.constant 0 : i32
    return %c0_i32, %c0_i32_0, %c0_i32_1 : i32, i32, i32
  }
  func.func @transform_14(%arg0: i32) -> (i32, i32) {
    %c0_i32 = arith.constant 0 : i32
    %c0_i32_0 = arith.constant 0 : i32
    %c0_i32_1 = arith.constant 0 : i32
    return %c0_i32, %c0_i32_0 : i32, i32
  }
  func.func @transform_15(%arg0: i32) -> (i32, i32) {
    %c0_i32 = arith.constant 0 : i32
    %c0_i32_0 = arith.constant 0 : i32
    %c0_i32_1 = arith.constant 0 : i32
    return %c0_i32, %c0_i32_0 : i32, i32
  }
  func.func @transform_16(%arg0: i32) -> (i32, i32) {
    %c0_i32 = arith.constant 0 : i32
    %c0_i32_0 = arith.constant 0 : i32
    %c0_i32_1 = arith.constant 0 : i32
    return %c0_i32, %c0_i32_0 : i32, i32
  }
  func.func @transform_17(%arg0: i32) -> (i32, i32) {
    %c0_i32 = arith.constant 0 : i32
    %c0_i32_0 = arith.constant 0 : i32
    %c0_i32_1 = arith.constant 0 : i32
    return %c0_i32, %c0_i32_0 : i32, i32
  }
  func.func @transform_18(%arg0: i32) -> (i32, i32) {
    %c0_i32 = arith.constant 0 : i32
    %c0_i32_0 = arith.constant 0 : i32
    %c0_i32_1 = arith.constant 0 : i32
    return %c0_i32, %c0_i32_0 : i32, i32
  }
  func.func @transform_19(%arg0: i32) -> (i32, i32, i32) {
    %c0_i32 = arith.constant 0 : i32
    %c0_i32_0 = arith.constant 0 : i32
    %c0_i32_1 = arith.constant 0 : i32
    return %arg0, %c0_i32, %c0_i32_0 : i32, i32, i32
  }
}

</mosaic_0001>

<llo_original>
// kernel: tile.13
$region0: #{tile.13}
  #allocation0 [shape = 's32[1]{0}', space=sflag, size = 0x4, scoped, tag = 'scoped memory for tile.13']
  %s0 = inlined_call_operand.vmem [shape: f32[6], index: 0, kind: input, shape index: {}]
  %s1 = inlined_call_operand.vmem [shape: f32[28,6], index: 1, kind: output, shape index: {}]
  // Predicated region
  $region2: #{tile.13} parent=0 // pred_check
    _
  $region3: #{tile.13} parent=0 // pred_check_branch
    %3 = sbr.rel (0) target = $region5
  $region4: #{tile.13} parent=0 // pred_region
    _
  $region5: #{tile.13} parent=0 // pred_fallthru
    _
  %v4 = vld [vmem:[%s0] ss:$0 sm:$0xff]
  %5 = vst [vmem:[%s1] sm:$0xff] %v4
  %s6 = scalar_lea.vmem %s1, 8
  %7 = vst [vmem:[%s6] sm:$0xff] %v4
  %s8 = scalar_lea.vmem %s1, 16
  %9 = vst [vmem:[%s8] sm:$0xff] %v4
  %s10 = scalar_lea.vmem %s1, 24
  %11 = vst [vmem:[%s10] sm:$0xff] %v4

// kernel: tile.14
$region0: #{tile.14}
  %s0 = inlined_call_operand.vmem [shape: f32[28,6], index: 0, kind: input, shape index: {}]
  %s1 = inlined_call_operand.vmem [shape: f32[1,168], index: 1, kind: output, shape index: {}]
  $region1: #{tile.14} parent=0
    #allocation0 [shape = 'u8[8192]{0}', space=vmem, size = 0x2000, scoped, tag = 'scoped mem for output reshape']
    %v2 = vld [vmem:[%s0] sm:$0x1]
    %vm3 = vcmask 48128
    %4 = vst.msk [vmem:[#allocation0] sm:$0x1] %vm3, %v2
    %s5 = scalar_lea.vmem %s0, 21
    %v6 = vld [vmem:[%s5] sm:$0x1]
    %s7 = scalar_lea.vmem %s0, 21
    %v8 = vld [vmem:[%s7] sm:$0x1]
    %vm9 = vcmask 15360
    %v10 = vsel %vm9, %v8, %v6
    %11 = vrot.lane.b32.xlu0 %v10, 126
    %v12 = vpop.permute.xlu0 %11
    %vm13 = vcmask 31744
    %s14 = scalar_lea.vmem [#allocation0], 8
    %15 = vst.msk [vmem:[%s14] sm:$0x1] %vm13, %v12
    %vm16 = vcmask 1048560
    %17 = vst.msk [vmem:[#allocation0] sm:$0x1] %vm16, %v12
    %s18 = scalar_lea.vmem %s0, 20
    %v19 = vld [vmem:[%s18] sm:$0x1]
    %20 = vrot.lane.b32.xlu0 %v19, 120
    %v21 = vpop.permute.xlu0 %20
    %vm22 = vcmask 1032128
    %23 = vst.msk [vmem:[#allocation0] sm:$0x1] %vm22, %v21
    %s24 = scalar_lea.vmem %s0, 19
    %v25 = vld [vmem:[%s24] sm:$0x1]
    %26 = vrot.lane.b32.xlu0 %v25, 114
    %v27 = vpop.permute.xlu0 %26
    %vm28 = vcmask 982928
    %29 = vst.msk [vmem:[#allocation0] sm:$0x1] %vm28, %v27
    %s30 = scalar_lea.vmem %s0, 18
    %v31 = vld [vmem:[%s30] sm:$0x1]
    %32 = vrot.lane.b32.xlu0 %v31, 108
    %v33 = vpop.permute.xlu0 %32
    %vm34 = vcmask 933728
    %35 = vst.msk [vmem:[#allocation0] sm:$0x1] %vm34, %v33
    %s36 = scalar_lea.vmem %s0, 17
    %v37 = vld [vmem:[%s36] sm:$0x1]
    %38 = vrot.lane.b32.xlu0 %v37, 102
    %v39 = vpop.permute.xlu0 %38
    %vm40 = vcmask 884528
    %41 = vst.msk [vmem:[#allocation0] sm:$0x1] %vm40, %v39
    %s42 = scalar_lea.vmem %s0, 16
    %v43 = vld [vmem:[%s42] sm:$0x1]
    %44 = vrot.lane.b32.xlu0 %v43, 96
    %v45 = vpop.permute.xlu0 %44
    %vm46 = vcmask 835328
    %47 = vst.msk [vmem:[#allocation0] sm:$0x1] %vm46, %v45
    %s48 = scalar_lea.vmem %s0, 15
    %v49 = vld [vmem:[%s48] sm:$0x1]
    %50 = vrot.lane.b32.xlu0 %v49, 90
    %v51 = vpop.permute.xlu0 %50
    %vm52 = vcmask 786128
    %53 = vst.msk [vmem:[#allocation0] sm:$0x1] %vm52, %v51
    %s54 = scalar_lea.vmem %s0, 14
    %v55 = vld [vmem:[%s54] sm:$0x1]
    %56 = vrot.lane.b32.xlu0 %v55, 84
    %v57 = vpop.permute.xlu0 %56
    %vm58 = vcmask 736928
    %59 = vst.msk [vmem:[#allocation0] sm:$0x1] %vm58, %v57
    %s60 = scalar_lea.vmem %s0, 13
    %v61 = vld [vmem:[%s60] sm:$0x1]
    %62 = vrot.lane.b32.xlu0 %v61, 78
    %v63 = vpop.permute.xlu0 %62
    %vm64 = vcmask 687728
    %65 = vst.msk [vmem:[#allocation0] sm:$0x1] %vm64, %v63
    %s66 = scalar_lea.vmem %s0, 12
    %v67 = vld [vmem:[%s66] sm:$0x1]
    %68 = vrot.lane.b32.xlu0 %v67, 72
    %v69 = vpop.permute.xlu0 %68
    %vm70 = vcmask 638528
    %71 = vst.msk [vmem:[#allocation0] sm:$0x1] %vm70, %v69
    %s72 = scalar_lea.vmem %s0, 11
    %v73 = vld [vmem:[%s72] sm:$0x1]
    %74 = vrot.lane.b32.xlu0 %v73, 66
    %v75 = vpop.permute.xlu0 %74
    %vm76 = vcmask 589328
    %77 = vst.msk [vmem:[#allocation0] sm:$0x1] %vm76, %v75
    %s78 = scalar_lea.vmem %s0, 10
    %v79 = vld [vmem:[%s78] sm:$0x1]
    %80 = vrot.lane.b32.xlu0 %v79, 60
    %v81 = vpop.permute.xlu0 %80
    %vm82 = vcmask 540128
    %83 = vst.msk [vmem:[#allocation0] sm:$0x1] %vm82, %v81
    %s84 = scalar_lea.vmem %s0, 9
    %v85 = vld [vmem:[%s84] sm:$0x1]
    %86 = vrot.lane.b32.xlu0 %v85, 54
    %v87 = vpop.permute.xlu0 %86
    %vm88 = vcmask 490928
    %89 = vst.msk [vmem:[#allocation0] sm:$0x1] %vm88, %v87
    %s90 = scalar_lea.vmem %s0, 8
    %v91 = vld [vmem:[%s90] sm:$0x1]
    %92 = vrot.lane.b32.xlu0 %v91, 48
    %v93 = vpop.permute.xlu0 %92
    %vm94 = vcmask 441728
    %95 = vst.msk [vmem:[#allocation0] sm:$0x1] %vm94, %v93
    %s96 = scalar_lea.vmem %s0, 7
    %v97 = vld [vmem:[%s96] sm:$0x1]
    %98 = vrot.lane.b32.xlu0 %v97, 42
    %v99 = vpop.permute.xlu0 %98
    %vm100 = vcmask 392528
    %101 = vst.msk [vmem:[#allocation0] sm:$0x1] %vm100, %v99
    %s102 = scalar_lea.vmem %s0, 6
    %v103 = vld [vmem:[%s102] sm:$0x1]
    %104 = vrot.lane.b32.xlu0 %v103, 36
    %v105 = vpop.permute.xlu0 %104
    %vm106 = vcmask 343328
    %107 = vst.msk [vmem:[#allocation0] sm:$0x1] %vm106, %v105
    %s108 = scalar_lea.vmem %s0, 27
    %v109 = vld [vmem:[%s108] sm:$0x1]
    %110 = vrot.lane.b32.xlu0 %v109, 34
    %v111 = vpop.permute.xlu0 %110
    %vm112 = vcmask 326928
    %s113 = scalar_lea.vmem [#allocation0], 8
    %114 = vst.msk [vmem:[%s113] sm:$0x1] %vm112, %v111
    %s115 = scalar_lea.vmem %s0, 5
    %v116 = vld [vmem:[%s115] sm:$0x1]
    %117 = vrot.lane.b32.xlu0 %v116, 30
    %v118 = vpop.permute.xlu0 %117
    %vm119 = vcmask 294128
    %120 = vst.msk [vmem:[#allocation0] sm:$0x1] %vm119, %v118
    %s121 = scalar_lea.vmem %s0, 26
    %v122 = vld [vmem:[%s121] sm:$0x1]
    %123 = vrot.lane.b32.xlu0 %v122, 28
    %v124 = vpop.permute.xlu0 %123
    %vm125 = vcmask 277728
    %s126 = scalar_lea.vmem [#allocation0], 8
    %127 = vst.msk [vmem:[%s126] sm:$0x1] %vm125, %v124
    %s128 = scalar_lea.vmem %s0, 4
    %v129 = vld [vmem:[%s128] sm:$0x1]
    %130 = vrot.lane.b32.xlu0 %v129, 24
    %v131 = vpop.permute.xlu0 %130
    %vm132 = vcmask 244928
    %133 = vst.msk [vmem:[#allocation0] sm:$0x1] %vm132, %v131
    %s134 = scalar_lea.vmem %s0, 25
    %v135 = vld [vmem:[%s134] sm:$0x1]
    %136 = vrot.lane.b32.xlu0 %v135, 22
    %v137 = vpop.permute.xlu0 %136
    %vm138 = vcmask 228528
    %s139 = scalar_lea.vmem [#allocation0], 8
    %140 = vst.msk [vmem:[%s139] sm:$0x1] %vm138, %v137
    %s141 = scalar_lea.vmem %s0, 3
    %v142 = vld [vmem:[%s141] sm:$0x1]
    %143 = vrot.lane.b32.xlu0 %v142, 18
    %v144 = vpop.permute.xlu0 %143
    %vm145 = vcmask 195728
    %146 = vst.msk [vmem:[#allocation0] sm:$0x1] %vm145, %v144
    %s147 = scalar_lea.vmem %s0, 24
    %v148 = vld [vmem:[%s147] sm:$0x1]
    %149 = vrot.lane.b32.xlu0 %v148, 16
    %v150 = vpop.permute.xlu0 %149
    %vm151 = vcmask 179328
    %s152 = scalar_lea.vmem [#allocation0], 8
    %153 = vst.msk [vmem:[%s152] sm:$0x1] %vm151, %v150
    %s154 = scalar_lea.vmem %s0, 2
    %v155 = vld [vmem:[%s154] sm:$0x1]
    %156 = vrot.lane.b32.xlu0 %v155, 12
    %v157 = vpop.permute.xlu0 %156
    %vm158 = vcmask 146528
    %159 = vst.msk [vmem:[#allocation0] sm:$0x1] %vm158, %v157
    %s160 = scalar_lea.vmem %s0, 23
    %v161 = vld [vmem:[%s160] sm:$0x1]
    %162 = vrot.lane.b32.xlu0 %v161, 10
    %v163 = vpop.permute.xlu0 %162
    %vm164 = vcmask 130128
    %s165 = scalar_lea.vmem [#allocation0], 8
    %166 = vst.msk [vmem:[%s165] sm:$0x1] %vm164, %v163
    %s167 = scalar_lea.vmem %s0, 1
    %v168 = vld [vmem:[%s167] sm:$0x1]
    %169 = vrot.lane.b32.xlu0 %v168, 6
    %v170 = vpop.permute.xlu0 %169
    %vm171 = vcmask 97328
    %172 = vst.msk [vmem:[#allocation0] sm:$0x1] %vm171, %v170
    %s173 = scalar_lea.vmem %s0, 22
    %v174 = vld [vmem:[%s173] sm:$0x1]
    %175 = vrot.lane.b32.xlu0 %v174, 4
    %v176 = vpop.permute.xlu0 %175
    %vm177 = vcmask 80928
    %s178 = scalar_lea.vmem [#allocation0], 8
    %179 = vst.msk [vmem:[%s178] sm:$0x1] %vm177, %v176
    %s181 = sshll.u32 1, 1
    %s182 = ssub.s32 %s181, 1
    %v184 = vld [vmem:[#allocation0] sm:%s182]
    %s185 = sshll.u32 1, 1
    %s186 = ssub.s32 %s185, 1
    %187 = vst [vmem:[%s1] sm:%s186] %v184
    %s188 = scalar_lea.vmem [#allocation0], 8
    %v189 = vld [vmem:[%s188] sm:%s182]
    %s190 = sshll.u32 1, 1
    %s191 = ssub.s32 %s190, 1
    %s192 = scalar_lea.vmem %s1, 1
    %193 = vst [vmem:[%s192] sm:%s191] %v189

// kernel: tile.18
$region0: #{tile.18}
  #allocation0 [shape = 's32[1]{0}', space=sflag, size = 0x4, scoped, tag = 'scoped memory for tile.18']
  %s0 = inlined_call_operand.vmem [shape: f32[16], index: 0, kind: input, shape index: {}]
  %s1 = inlined_call_operand.vmem [shape: f32[10,16], index: 1, kind: output, shape index: {}]
  // Predicated region
  $region2: #{tile.18} parent=0 // pred_check
    _
  $region3: #{tile.18} parent=0 // pred_check_branch
    %3 = sbr.rel (0) target = $region5
  $region4: #{tile.18} parent=0 // pred_region
    _
  $region5: #{tile.18} parent=0 // pred_fallthru
    _
  %v4 = vld [vmem:[%s0] ss:$0 sm:$0xff]
  %5 = vst [vmem:[%s1] sm:$0xff] %v4
  %s6 = scalar_lea.vmem %s1, 8
  %7 = vst [vmem:[%s6] sm:$0xff] %v4

// kernel: tile.19
$region0: #{tile.19}
  %s0 = inlined_call_operand.vmem [shape: f32[10,16], index: 0, kind: input, shape index: {}]
  %s1 = inlined_call_operand.vmem [shape: f32[1,160], index: 1, kind: output, shape index: {}]
  $region1: #{tile.19} parent=0
    #allocation0 [shape = 'u8[8192]{0}', space=vmem, size = 0x2000, scoped, tag = 'scoped mem for output reshape']
    %s2 = smov 3
    %v3 = vld [vmem:[%s0] ss:$8 sm:%s2]
    %vm4 = vcmask 130048
    %5 = vst.msk [vmem:[#allocation0] ss:$8 sm:$0x3] %vm4, %v3
    %s6 = scalar_lea.vmem %s0, 7
    %v7 = vld [vmem:[%s6] sm:$0x1]
    %8 = vrot.lane.b32.xlu0 %v7, 112
    %v9 = vpop.permute.xlu0 %8
    %vm10 = vcmask 1048448
    %11 = vst.msk [vmem:[#allocation0] sm:$0x1] %vm10, %v9
    %s12 = scalar_lea.vmem %s0, 6
    %v13 = vld [vmem:[%s12] sm:$0x1]
    %14 = vrot.lane.b32.xlu0 %v13, 96
    %v15 = vpop.permute.xlu0 %14
    %vm16 = vcmask 917248
    %17 = vst.msk [vmem:[#allocation0] sm:$0x1] %vm16, %v15
    %s18 = scalar_lea.vmem %s0, 5
    %v19 = vld [vmem:[%s18] sm:$0x1]
    %20 = vrot.lane.b32.xlu0 %v19, 80
    %v21 = vpop.permute.xlu0 %20
    %vm22 = vcmask 786048
    %23 = vst.msk [vmem:[#allocation0] sm:$0x1] %vm22, %v21
    %s24 = scalar_lea.vmem %s0, 4
    %v25 = vld [vmem:[%s24] sm:$0x1]
    %26 = vrot.lane.b32.xlu0 %v25, 64
    %v27 = vpop.permute.xlu0 %26
    %vm28 = vcmask 654848
    %29 = vst.msk [vmem:[#allocation0] sm:$0x1] %vm28, %v27
    %s30 = scalar_lea.vmem %s0, 3
    %v31 = vld [vmem:[%s30] sm:$0x1]
    %32 = vrot.lane.b32.xlu0 %v31, 48
    %v33 = vpop.permute.xlu0 %32
    %vm34 = vcmask 523648
    %35 = vst.msk [vmem:[#allocation0] sm:$0x1] %vm34, %v33
    %s36 = scalar_lea.vmem %s0, 2
    %v37 = vld [vmem:[%s36] sm:$0x1]
    %38 = vrot.lane.b32.xlu0 %v37, 32
    %v39 = vpop.permute.xlu0 %38
    %vm40 = vcmask 392448
    %41 = vst.msk [vmem:[#allocation0] sm:$0x1] %vm40, %v39
    %s42 = scalar_lea.vmem %s0, 1
    %s43 = smov 3
    %v44 = vld [vmem:[%s42] ss:$8 sm:%s43]
    %45 = vrot.lane.b32.xlu0 %v44, 16
    %v46 = vpop.permute.xlu0 %45
    %vm47 = vcmask 261248
    %48 = vst.msk [vmem:[#allocation0] ss:$8 sm:$0x3] %vm47, %v46
    %s50 = sshll.u32 1, 1
    %s51 = ssub.s32 %s50, 1
    %v53 = vld [vmem:[#allocation0] sm:%s51]
    %s54 = sshll.u32 1, 1
    %s55 = ssub.s32 %s54, 1
    %56 = vst [vmem:[%s1] sm:%s55] %v53
    %s57 = scalar_lea.vmem [#allocation0], 8
    %v58 = vld [vmem:[%s57] sm:%s51]
    %s59 = sshll.u32 1, 1
    %s60 = ssub.s32 %s59, 1
    %s61 = scalar_lea.vmem %s1, 1
    %62 = vst [vmem:[%s61] sm:%s60] %v58

// kernel: net_forward.1
$region0: #{net_forward.1}
  #allocation0 [shape = 'u32[]', space=smem, size = 0x4, offset = 0x4, fixed_abs, tag = 'smem constant byte address 0x4 - core index']
  #allocation1 [shape = 'u32[144,128]{1,0:T(1,128)}', space=vmem, size = 0x12000, scoped, tag = 'internal scratch']
  #allocation2 [shape = 'f32[14,84]{1,0:T(8,128)}', space=vmem, size = 0x2000, scoped, tag = 'scratch operand']
  #allocation3 [shape = 'f32[5,80]{1,0:T(8,128)}', space=vmem, size = 0x1000, scoped, tag = 'scratch operand']
  %s0 = inlined_call_operand.vmem [shape: f32[2,32,96], index: 0, kind: input, shape index: {}]
  %s1 = inlined_call_operand.vmem [shape: f32[5,96,168], index: 1, kind: input, shape index: {}]
  %s2 = inlined_call_operand.vmem [shape: f32[1,168], index: 2, kind: input, shape index: {}]
  %s3 = inlined_call_operand.vmem [shape: f32[14,28], index: 3, kind: input, shape index: {}]
  %s4 = inlined_call_operand.vmem [shape: f32[14,28], index: 4, kind: input, shape index: {}]
  %s5 = inlined_call_operand.vmem [shape: f32[168,84], index: 5, kind: input, shape index: {}]
  %s6 = inlined_call_operand.vmem [shape: f32[168,84], index: 6, kind: input, shape index: {}]
  %s7 = inlined_call_operand.vmem [shape: f32[5,84,160], index: 7, kind: input, shape index: {}]
  %s8 = inlined_call_operand.vmem [shape: f32[1,160], index: 8, kind: input, shape index: {}]
  %s9 = inlined_call_operand.vmem [shape: f32[5,10], index: 9, kind: input, shape index: {}]
  %s10 = inlined_call_operand.vmem [shape: f32[5,10], index: 10, kind: input, shape index: {}]
  %s11 = inlined_call_operand.vmem [shape: f32[160,80], index: 11, kind: input, shape index: {}]
  %s12 = inlined_call_operand.vmem [shape: f32[160,80], index: 12, kind: input, shape index: {}]
  %s13 = inlined_call_operand.vmem [shape: f32[5,80,120], index: 13, kind: input, shape index: {}]
  %s14 = inlined_call_operand.vmem [shape: f32[1,120], index: 14, kind: input, shape index: {}]
  %s15 = inlined_call_operand.vmem [shape: f32[120,84], index: 15, kind: input, shape index: {}]
  %s16 = inlined_call_operand.vmem [shape: f32[1,84], index: 16, kind: input, shape index: {}]
  %s17 = inlined_call_operand.vmem [shape: f32[84,128], index: 17, kind: input, shape index: {}]
  %s18 = inlined_call_operand.vmem [shape: f32[1,128], index: 18, kind: input, shape index: {}]
  %s19 = inlined_call_operand.hbm [shape: f32[2,1,128], index: 19, kind: output, shape index: {}]
  %s20 = sld [smem:[#allocation0]]
  $region109: #{net_forward.1} parent=0
    _
  %s22 = ssub.s32 1, %s20
  %s23 = scalar_select 0, %s22, %s20
  $region1: #{net_forward.1} parent=0
    #allocation4 [shape = 'u8[1024]{0}', space=vmem, size = 0x400, scoped, tag = 'output window, operand 0']
    #allocation5 [shape = 's32[2]{0}', space=sflag, size = 0x8, scoped, tag = 'scoped memory for net_forward.1']
    %24 = vsyncpa [#allocation5], 0
    %s25 = scalar_lea.sflag [#allocation5], 1
    %26 = vsyncpa %s25, 0
    loop: start=0, step=1, limit=4
    $region2: #{net_forward.1} parent=1 // loop_pre_header
      _
    $region3: #{net_forward.1} parent=1 // loop_header
      %s28 = sphi 0, %s32
      %p29 = scmp.ge.s32.totalorder %s28, 4
      %s38 = sphi 0, %s40
      %s41 = sphi 0, %s38
      %s42 = sphi 0, %s41
      %s58 = sphi 0, %s42
      %s62 = sphi 0, %s62
      %s64 = sphi 0, %s62
      %s65 = sphi 0, %s64
      %s79 = sphi 0, %s65
      %s83 = sphi 0, %s83
      %s85 = sphi 0, %s83
      %s86 = sphi 0, %s85
      %s100 = sphi 0, %s86
      %s104 = sphi 0, %s104
      %s106 = sphi 0, %s104
      %s107 = sphi 0, %s106
      %s121 = sphi 0, %s107
      %s125 = sphi 0, %s125
      %s127 = sphi 0, %s125
      %s128 = sphi 0, %s127
      %s142 = sphi 0, %s128
      %s146 = sphi 0, %s146
      %s148 = sphi 0, %s146
      %s149 = sphi 0, %s148
      %s163 = sphi 0, %s149
      %s167 = sphi 0, %s167
      %s169 = sphi 0, %s167
      %s170 = sphi 0, %s169
      %s184 = sphi 0, %s170
      %s188 = sphi 0, %s188
      %s190 = sphi 0, %s188
      %s191 = sphi 0, %s190
      %s205 = sphi 0, %s191
      %s209 = sphi 0, %s209
      %s211 = sphi 0, %s209
      %s212 = sphi 0, %s211
      %s226 = sphi 0, %s212
      %s230 = sphi 0, %s230
      %s232 = sphi 0, %s230
      %s233 = sphi 0, %s232
      %s247 = sphi 0, %s233
      %s251 = sphi 0, %s251
      %s253 = sphi 0, %s251
      %s254 = sphi 0, %s253
      %s268 = sphi 0, %s254
      %s272 = sphi 0, %s272
      %s274 = sphi 0, %s272
      %s275 = sphi 0, %s274
      %s289 = sphi 0, %s275
      %s293 = sphi 0, %s293
      %s295 = sphi 0, %s293
      %s296 = sphi 0, %s295
      %s310 = sphi 0, %s296
      %s314 = sphi 0, %s314
      %s316 = sphi 0, %s314
      %s317 = sphi 0, %s316
      %s331 = sphi 0, %s317
      %s335 = sphi 0, %s335
      %s337 = sphi 0, %s335
      %s338 = sphi 0, %s337
      %s352 = sphi 0, %s338
      %s356 = sphi 0, %s356
      %s358 = sphi 0, %s356
      %s359 = sphi 0, %s358
      %s373 = sphi 0, %s359
      %s377 = sphi 0, %s377
      %s379 = sphi 0, %s377
      %s380 = sphi 0, %s379
      %s394 = sphi 0, %s380
      %s398 = sphi 0, %s398
      %s400 = sphi 0, %s398
      %s401 = sphi 0, %s400
      %s415 = sphi 0, %s401
      %s419 = sphi 0, %s419
      %s421 = sphi 0, %s419
      %s422 = sphi 0, %s421
      %s436 = sphi 0, %s422
      %s442 = sphi 0, %s444
      %s445 = sphi 0, %s442
      %s446 = sphi 0, %s445
      %s462 = sphi 0, %s446
    $region4: #{net_forward.1} parent=1 // loop_header_branch
      %31 = sbr.rel (%p29) target = $region8
    $region5: #{net_forward.1} parent=1 // loop_body
      %s33 = ssub.s32 %s28, 1
      %s34 = ssub.s32 %s28, 2
      %s35 = sadd.s32 %s28, 1
      %s36 = ssub.s32 %s28, %s35
      %p37 = scmp.eq.s32.totalorder %s36, 0
      %s39 = sadd.s32 %s38, 1
      %s40 = scalar_select %p37, %s38, %s39
      %p43 = pneg %p37
      %p44 = scmp.eq.s32.totalorder %s28, 1
      %p45 = por %p43, %p44
      %p46 = scmp.ne.s32.totalorder %s38, %s41
      %p47 = scmp.eq.s32.totalorder %s28, 0
      %p48 = por %p46, %p47
      %p49 = scmp.ne.s32.totalorder %s38, %s41
      %p50 = scmp.eq.s32.totalorder %s33, 1
      %p51 = por %p49, %p50
      %p52 = scmp.ne.s32.totalorder %s41, %s42
      %p53 = scmp.eq.s32.totalorder %s33, 0
      %p54 = por %p52, %p53
      %p55 = scmp.ne.s32.totalorder %s41, %s42
      %p56 = scmp.eq.s32.totalorder %s34, 1
      %p57 = por %p55, %p56
      %p59 = scmp.ne.s32.totalorder %s42, %s58
      %p60 = scmp.eq.s32.totalorder %s34, 0
      %p61 = por %p59, %p60
      %s63 = sadd.s32 %s62, 1
      %p66 = scmp.eq.s32.totalorder %s28, 1
      %p67 = scmp.ne.s32.totalorder %s62, %s64
      %p68 = scmp.eq.s32.totalorder %s28, 0
      %p69 = por %p67, %p68
      %p70 = scmp.ne.s32.totalorder %s62, %s64
      %p71 = scmp.eq.s32.totalorder %s33, 1
      %p72 = por %p70, %p71
      %p73 = scmp.ne.s32.totalorder %s64, %s65
      %p74 = scmp.eq.s32.totalorder %s33, 0
      %p75 = por %p73, %p74
      %p76 = scmp.ne.s32.totalorder %s64, %s65
      %p77 = scmp.eq.s32.totalorder %s34, 1
      %p78 = por %p76, %p77
      %p80 = scmp.ne.s32.totalorder %s65, %s79
      %p81 = scmp.eq.s32.totalorder %s34, 0
      %p82 = por %p80, %p81
      %s84 = sadd.s32 %s83, 1
      %p87 = scmp.eq.s32.totalorder %s28, 1
      %p88 = scmp.ne.s32.totalorder %s83, %s85
      %p89 = scmp.eq.s32.totalorder %s28, 0
      %p90 = por %p88, %p89
      %p91 = scmp.ne.s32.totalorder %s83, %s85
      %p92 = scmp.eq.s32.totalorder %s33, 1
      %p93 = por %p91, %p92
      %p94 = scmp.ne.s32.totalorder %s85, %s86
      %p95 = scmp.eq.s32.totalorder %s33, 0
      %p96 = por %p94, %p95
      %p97 = scmp.ne.s32.totalorder %s85, %s86
      %p98 = scmp.eq.s32.totalorder %s34, 1
      %p99 = por %p97, %p98
      %p101 = scmp.ne.s32.totalorder %s86, %s100
      %p102 = scmp.eq.s32.totalorder %s34, 0
      %p103 = por %p101, %p102
      %s105 = sadd.s32 %s104, 1
      %p108 = scmp.eq.s32.totalorder %s28, 1
      %p109 = scmp.ne.s32.totalorder %s104, %s106
      %p110 = scmp.eq.s32.totalorder %s28, 0
      %p111 = por %p109, %p110
      %p112 = scmp.ne.s32.totalorder %s104, %s106
      %p113 = scmp.eq.s32.totalorder %s33, 1
      %p114 = por %p112, %p113
      %p115 = scmp.ne.s32.totalorder %s106, %s107
      %p116 = scmp.eq.s32.totalorder %s33, 0
      %p117 = por %p115, %p116
      %p118 = scmp.ne.s32.totalorder %s106, %s107
      %p119 = scmp.eq.s32.totalorder %s34, 1
      %p120 = por %p118, %p119
      %p122 = scmp.ne.s32.totalorder %s107, %s121
      %p123 = scmp.eq.s32.totalorder %s34, 0
      %p124 = por %p122, %p123
      %s126 = sadd.s32 %s125, 1
      %p129 = scmp.eq.s32.totalorder %s28, 1
      %p130 = scmp.ne.s32.totalorder %s125, %s127
      %p131 = scmp.eq.s32.totalorder %s28, 0
      %p132 = por %p130, %p131
      %p133 = scmp.ne.s32.totalorder %s125, %s127
      %p134 = scmp.eq.s32.totalorder %s33, 1
      %p135 = por %p133, %p134
      %p136 = scmp.ne.s32.totalorder %s127, %s128
      %p137 = scmp.eq.s32.totalorder %s33, 0
      %p138 = por %p136, %p137
      %p139 = scmp.ne.s32.totalorder %s127, %s128
      %p140 = scmp.eq.s32.totalorder %s34, 1
      %p141 = por %p139, %p140
      %p143 = scmp.ne.s32.totalorder %s128, %s142
      %p144 = scmp.eq.s32.totalorder %s34, 0
      %p145 = por %p143, %p144
      %s147 = sadd.s32 %s146, 1
      %p150 = scmp.eq.s32.totalorder %s28, 1
      %p151 = scmp.ne.s32.totalorder %s146, %s148
      %p152 = scmp.eq.s32.totalorder %s28, 0
      %p153 = por %p151, %p152
      %p154 = scmp.ne.s32.totalorder %s146, %s148
      %p155 = scmp.eq.s32.totalorder %s33, 1
      %p156 = por %p154, %p155
      %p157 = scmp.ne.s32.totalorder %s148, %s149
      %p158 = scmp.eq.s32.totalorder %s33, 0
      %p159 = por %p157, %p158
      %p160 = scmp.ne.s32.totalorder %s148, %s149
      %p161 = scmp.eq.s32.totalorder %s34, 1
      %p162 = por %p160, %p161
      %p164 = scmp.ne.s32.totalorder %s149, %s163
      %p165 = scmp.eq.s32.totalorder %s34, 0
      %p166 = por %p164, %p165
      %s168 = sadd.s32 %s167, 1
      %p171 = scmp.eq.s32.totalorder %s28, 1
      %p172 = scmp.ne.s32.totalorder %s167, %s169
      %p173 = scmp.eq.s32.totalorder %s28, 0
      %p174 = por %p172, %p173
      %p175 = scmp.ne.s32.totalorder %s167, %s169
      %p176 = scmp.eq.s32.totalorder %s33, 1
      %p177 = por %p175, %p176
      %p178 = scmp.ne.s32.totalorder %s169, %s170
      %p179 = scmp.eq.s32.totalorder %s33, 0
      %p180 = por %p178, %p179
      %p181 = scmp.ne.s32.totalorder %s169, %s170
      %p182 = scmp.eq.s32.totalorder %s34, 1
      %p183 = por %p181, %p182
      %p185 = scmp.ne.s32.totalorder %s170, %s184
      %p186 = scmp.eq.s32.totalorder %s34, 0
      %p187 = por %p185, %p186
      %s189 = sadd.s32 %s188, 1
      %p192 = scmp.eq.s32.totalorder %s28, 1
      %p193 = scmp.ne.s32.totalorder %s188, %s190
      %p194 = scmp.eq.s32.totalorder %s28, 0
      %p195 = por %p193, %p194
      %p196 = scmp.ne.s32.totalorder %s188, %s190
      %p197 = scmp.eq.s32.totalorder %s33, 1
      %p198 = por %p196, %p197
      %p199 = scmp.ne.s32.totalorder %s190, %s191
      %p200 = scmp.eq.s32.totalorder %s33, 0
      %p201 = por %p199, %p200
      %p202 = scmp.ne.s32.totalorder %s190, %s191
      %p203 = scmp.eq.s32.totalorder %s34, 1
      %p204 = por %p202, %p203
      %p206 = scmp.ne.s32.totalorder %s191, %s205
      %p207 = scmp.eq.s32.totalorder %s34, 0
      %p208 = por %p206, %p207
      %s210 = sadd.s32 %s209, 1
      %p213 = scmp.eq.s32.totalorder %s28, 1
      %p214 = scmp.ne.s32.totalorder %s209, %s211
      %p215 = scmp.eq.s32.totalorder %s28, 0
      %p216 = por %p214, %p215
      %p217 = scmp.ne.s32.totalorder %s209, %s211
      %p218 = scmp.eq.s32.totalorder %s33, 1
      %p219 = por %p217, %p218
      %p220 = scmp.ne.s32.totalorder %s211, %s212
      %p221 = scmp.eq.s32.totalorder %s33, 0
      %p222 = por %p220, %p221
      %p223 = scmp.ne.s32.totalorder %s211, %s212
      %p224 = scmp.eq.s32.totalorder %s34, 1
      %p225 = por %p223, %p224
      %p227 = scmp.ne.s32.totalorder %s212, %s226
      %p228 = scmp.eq.s32.totalorder %s34, 0
      %p229 = por %p227, %p228
      %s231 = sadd.s32 %s230, 1
      %p234 = scmp.eq.s32.totalorder %s28, 1
      %p235 = scmp.ne.s32.totalorder %s230, %s232
      %p236 = scmp.eq.s32.totalorder %s28, 0
      %p237 = por %p235, %p236
      %p238 = scmp.ne.s32.totalorder %s230, %s232
      %p239 = scmp.eq.s32.totalorder %s33, 1
      %p240 = por %p238, %p239
      %p241 = scmp.ne.s32.totalorder %s232, %s233
      %p242 = scmp.eq.s32.totalorder %s33, 0
      %p243 = por %p241, %p242
      %p244 = scmp.ne.s32.totalorder %s232, %s233
      %p245 = scmp.eq.s32.totalorder %s34, 1
      %p246 = por %p244, %p245
      %p248 = scmp.ne.s32.totalorder %s233, %s247
      %p249 = scmp.eq.s32.totalorder %s34, 0
      %p250 = por %p248, %p249
      %s252 = sadd.s32 %s251, 1
      %p255 = scmp.eq.s32.totalorder %s28, 1
      %p256 = scmp.ne.s32.totalorder %s251, %s253
      %p257 = scmp.eq.s32.totalorder %s28, 0
      %p258 = por %p256, %p257
      %p259 = scmp.ne.s32.totalorder %s251, %s253
      %p260 = scmp.eq.s32.totalorder %s33, 1
      %p261 = por %p259, %p260
      %p262 = scmp.ne.s32.totalorder %s253, %s254
      %p263 = scmp.eq.s32.totalorder %s33, 0
      %p264 = por %p262, %p263
      %p265 = scmp.ne.s32.totalorder %s253, %s254
      %p266 = scmp.eq.s32.totalorder %s34, 1
      %p267 = por %p265, %p266
      %p269 = scmp.ne.s32.totalorder %s254, %s268
      %p270 = scmp.eq.s32.totalorder %s34, 0
      %p271 = por %p269, %p270
      %s273 = sadd.s32 %s272, 1
      %p276 = scmp.eq.s32.totalorder %s28, 1
      %p277 = scmp.ne.s32.totalorder %s272, %s274
      %p278 = scmp.eq.s32.totalorder %s28, 0
      %p279 = por %p277, %p278
      %p280 = scmp.ne.s32.totalorder %s272, %s274
      %p281 = scmp.eq.s32.totalorder %s33, 1
      %p282 = por %p280, %p281
      %p283 = scmp.ne.s32.totalorder %s274, %s275
      %p284 = scmp.eq.s32.totalorder %s33, 0
      %p285 = por %p283, %p284
      %p286 = scmp.ne.s32.totalorder %s274, %s275
      %p287 = scmp.eq.s32.totalorder %s34, 1
      %p288 = por %p286, %p287
      %p290 = scmp.ne.s32.totalorder %s275, %s289
      %p291 = scmp.eq.s32.totalorder %s34, 0
      %p292 = por %p290, %p291
      %s294 = sadd.s32 %s293, 1
      %p297 = scmp.eq.s32.totalorder %s28, 1
      %p298 = scmp.ne.s32.totalorder %s293, %s295
      %p299 = scmp.eq.s32.totalorder %s28, 0
      %p300 = por %p298, %p299
      %p301 = scmp.ne.s32.totalorder %s293, %s295
      %p302 = scmp.eq.s32.totalorder %s33, 1
      %p303 = por %p301, %p302
      %p304 = scmp.ne.s32.totalorder %s295, %s296
      %p305 = scmp.eq.s32.totalorder %s33, 0
      %p306 = por %p304, %p305
      %p307 = scmp.ne.s32.totalorder %s295, %s296
      %p308 = scmp.eq.s32.totalorder %s34, 1
      %p309 = por %p307, %p308
      %p311 = scmp.ne.s32.totalorder %s296, %s310
      %p312 = scmp.eq.s32.totalorder %s34, 0
      %p313 = por %p311, %p312
      %s315 = sadd.s32 %s314, 1
      %p318 = scmp.eq.s32.totalorder %s28, 1
      %p319 = scmp.ne.s32.totalorder %s314, %s316
      %p320 = scmp.eq.s32.totalorder %s28, 0
      %p321 = por %p319, %p320
      %p322 = scmp.ne.s32.totalorder %s314, %s316
      %p323 = scmp.eq.s32.totalorder %s33, 1
      %p324 = por %p322, %p323
      %p325 = scmp.ne.s32.totalorder %s316, %s317
      %p326 = scmp.eq.s32.totalorder %s33, 0
      %p327 = por %p325, %p326
      %p328 = scmp.ne.s32.totalorder %s316, %s317
      %p329 = scmp.eq.s32.totalorder %s34, 1
      %p330 = por %p328, %p329
      %p332 = scmp.ne.s32.totalorder %s317, %s331
      %p333 = scmp.eq.s32.totalorder %s34, 0
      %p334 = por %p332, %p333
      %s336 = sadd.s32 %s335, 1
      %p339 = scmp.eq.s32.totalorder %s28, 1
      %p340 = scmp.ne.s32.totalorder %s335, %s337
      %p341 = scmp.eq.s32.totalorder %s28, 0
      %p342 = por %p340, %p341
      %p343 = scmp.ne.s32.totalorder %s335, %s337
      %p344 = scmp.eq.s32.totalorder %s33, 1
      %p345 = por %p343, %p344
      %p346 = scmp.ne.s32.totalorder %s337, %s338
      %p347 = scmp.eq.s32.totalorder %s33, 0
      %p348 = por %p346, %p347
      %p349 = scmp.ne.s32.totalorder %s337, %s338
      %p350 = scmp.eq.s32.totalorder %s34, 1
      %p351 = por %p349, %p350
      %p353 = scmp.ne.s32.totalorder %s338, %s352
      %p354 = scmp.eq.s32.totalorder %s34, 0
      %p355 = por %p353, %p354
      %s357 = sadd.s32 %s356, 1
      %p360 = scmp.eq.s32.totalorder %s28, 1
      %p361 = scmp.ne.s32.totalorder %s356, %s358
      %p362 = scmp.eq.s32.totalorder %s28, 0
      %p363 = por %p361, %p362
      %p364 = scmp.ne.s32.totalorder %s356, %s358
      %p365 = scmp.eq.s32.totalorder %s33, 1
      %p366 = por %p364, %p365
      %p367 = scmp.ne.s32.totalorder %s358, %s359
      %p368 = scmp.eq.s32.totalorder %s33, 0
      %p369 = por %p367, %p368
      %p370 = scmp.ne.s32.totalorder %s358, %s359
      %p371 = scmp.eq.s32.totalorder %s34, 1
      %p372 = por %p370, %p371
      %p374 = scmp.ne.s32.totalorder %s359, %s373
      %p375 = scmp.eq.s32.totalorder %s34, 0
      %p376 = por %p374, %p375
      %s378 = sadd.s32 %s377, 1
      %p381 = scmp.eq.s32.totalorder %s28, 1
      %p382 = scmp.ne.s32.totalorder %s377, %s379
      %p383 = scmp.eq.s32.totalorder %s28, 0
      %p384 = por %p382, %p383
      %p385 = scmp.ne.s32.totalorder %s377, %s379
      %p386 = scmp.eq.s32.totalorder %s33, 1
      %p387 = por %p385, %p386
      %p388 = scmp.ne.s32.totalorder %s379, %s380
      %p389 = scmp.eq.s32.totalorder %s33, 0
      %p390 = por %p388, %p389
      %p391 = scmp.ne.s32.totalorder %s379, %s380
      %p392 = scmp.eq.s32.totalorder %s34, 1
      %p393 = por %p391, %p392
      %p395 = scmp.ne.s32.totalorder %s380, %s394
      %p396 = scmp.eq.s32.totalorder %s34, 0
      %p397 = por %p395, %p396
      %s399 = sadd.s32 %s398, 1
      %p402 = scmp.eq.s32.totalorder %s28, 1
      %p403 = scmp.ne.s32.totalorder %s398, %s400
      %p404 = scmp.eq.s32.totalorder %s28, 0
      %p405 = por %p403, %p404
      %p406 = scmp.ne.s32.totalorder %s398, %s400
      %p407 = scmp.eq.s32.totalorder %s33, 1
      %p408 = por %p406, %p407
      %p409 = scmp.ne.s32.totalorder %s400, %s401
      %p410 = scmp.eq.s32.totalorder %s33, 0
      %p411 = por %p409, %p410
      %p412 = scmp.ne.s32.totalorder %s400, %s401
      %p413 = scmp.eq.s32.totalorder %s34, 1
      %p414 = por %p412, %p413
      %p416 = scmp.ne.s32.totalorder %s401, %s415
      %p417 = scmp.eq.s32.totalorder %s34, 0
      %p418 = por %p416, %p417
      %s420 = sadd.s32 %s419, 1
      %p423 = scmp.eq.s32.totalorder %s28, 1
      %p424 = scmp.ne.s32.totalorder %s419, %s421
      %p425 = scmp.eq.s32.totalorder %s28, 0
      %p426 = por %p424, %p425
      %p427 = scmp.ne.s32.totalorder %s419, %s421
      %p428 = scmp.eq.s32.totalorder %s33, 1
      %p429 = por %p427, %p428
      %p430 = scmp.ne.s32.totalorder %s421, %s422
      %p431 = scmp.eq.s32.totalorder %s33, 0
      %p432 = por %p430, %p431
      %p433 = scmp.ne.s32.totalorder %s421, %s422
      %p434 = scmp.eq.s32.totalorder %s34, 1
      %p435 = por %p433, %p434
      %p437 = scmp.ne.s32.totalorder %s422, %s436
      %p438 = scmp.eq.s32.totalorder %s34, 0
      %p439 = por %p437, %p438
      %s440 = ssub.s32 %s28, %s35
      %p441 = scmp.eq.s32.totalorder %s440, 0
      %s443 = sadd.s32 %s442, 1
      %s444 = scalar_select %p441, %s442, %s443
      %p447 = pneg %p441
      %p448 = scmp.eq.s32.totalorder %s28, 1
      %p449 = por %p447, %p448
      %p450 = scmp.ne.s32.totalorder %s442, %s445
      %p451 = scmp.eq.s32.totalorder %s28, 0
      %p452 = por %p450, %p451
      %p453 = scmp.ne.s32.totalorder %s442, %s445
      %p454 = scmp.eq.s32.totalorder %s33, 1
      %p455 = por %p453, %p454
      %p456 = scmp.ne.s32.totalorder %s445, %s446
      %p457 = scmp.eq.s32.totalorder %s33, 0
      %p458 = por %p456, %p457
      %p459 = scmp.ne.s32.totalorder %s445, %s446
      %p460 = scmp.eq.s32.totalorder %s34, 1
      %p461 = por %p459, %p460
      %p463 = scmp.ne.s32.totalorder %s446, %s462
      %p464 = scmp.eq.s32.totalorder %s34, 0
      %p465 = por %p463, %p464
      %p466 = scmp.le.s32.totalorder 1, %s28
      %p467 = scmp.lt.s32.totalorder %s28, 3
      %p468 = pnand %p466, %p467
      %p469 = pneg %p468
      // Predicated region
      $region9: #{net_forward.1} parent=5 // pred_check
        _
      $region10: #{net_forward.1} parent=5 // pred_check_branch
        %471 = sbr.rel (%p468) target = $region12
      $region11: #{net_forward.1} parent=5 // pred_region
        %s472 = ssub.s32 %s28, 1
        // Predicated region
        $region13: #{net_forward.1} parent=11 // pred_check
          %p473 = pneg %p75
        $region14: #{net_forward.1} parent=11 // pred_check_branch
          %475 = sbr.rel (%p473) target = $region16
        $region15: #{net_forward.1} parent=11 // pred_region
          _
        $region16: #{net_forward.1} parent=11 // pred_fallthru
          _
        // Predicated region
        $region17: #{net_forward.1} parent=11 // pred_check
          %p476 = pneg %p96
        $region18: #{net_forward.1} parent=11 // pred_check_branch
          %478 = sbr.rel (%p476) target = $region20
        $region19: #{net_forward.1} parent=11 // pred_region
          _
        $region20: #{net_forward.1} parent=11 // pred_fallthru
          _
        // Predicated region
        $region21: #{net_forward.1} parent=11 // pred_check
          %p479 = pneg %p117
        $region22: #{net_forward.1} parent=11 // pred_check_branch
          %481 = sbr.rel (%p479) target = $region24
        $region23: #{net_forward.1} parent=11 // pred_region
          _
        $region24: #{net_forward.1} parent=11 // pred_fallthru
          _
        // Predicated region
        $region25: #{net_forward.1} parent=11 // pred_check
          %p482 = pneg %p138
        $region26: #{net_forward.1} parent=11 // pred_check_branch
          %484 = sbr.rel (%p482) target = $region28
        $region27: #{net_forward.1} parent=11 // pred_region
          _
        $region28: #{net_forward.1} parent=11 // pred_fallthru
          _
        // Predicated region
        $region29: #{net_forward.1} parent=11 // pred_check
          %p485 = pneg %p159
        $region30: #{net_forward.1} parent=11 // pred_check_branch
          %487 = sbr.rel (%p485) target = $region32
        $region31: #{net_forward.1} parent=11 // pred_region
          _
        $region32: #{net_forward.1} parent=11 // pred_fallthru
          _
        // Predicated region
        $region33: #{net_forward.1} parent=11 // pred_check
          %p488 = pneg %p180
        $region34: #{net_forward.1} parent=11 // pred_check_branch
          %490 = sbr.rel (%p488) target = $region36
        $region35: #{net_forward.1} parent=11 // pred_region
          _
        $region36: #{net_forward.1} parent=11 // pred_fallthru
          _
        // Predicated region
        $region37: #{net_forward.1} parent=11 // pred_check
          %p491 = pneg %p201
        $region38: #{net_forward.1} parent=11 // pred_check_branch
          %493 = sbr.rel (%p491) target = $region40
        $region39: #{net_forward.1} parent=11 // pred_region
          _
        $region40: #{net_forward.1} parent=11 // pred_fallthru
          _
        // Predicated region
        $region41: #{net_forward.1} parent=11 // pred_check
          %p494 = pneg %p222
        $region42: #{net_forward.1} parent=11 // pred_check_branch
          %496 = sbr.rel (%p494) target = $region44
        $region43: #{net_forward.1} parent=11 // pred_region
          _
        $region44: #{net_forward.1} parent=11 // pred_fallthru
          _
        // Predicated region
        $region45: #{net_forward.1} parent=11 // pred_check
          %p497 = pneg %p243
        $region46: #{net_forward.1} parent=11 // pred_check_branch
          %499 = sbr.rel (%p497) target = $region48
        $region47: #{net_forward.1} parent=11 // pred_region
          _
        $region48: #{net_forward.1} parent=11 // pred_fallthru
          _
        // Predicated region
        $region49: #{net_forward.1} parent=11 // pred_check
          %p500 = pneg %p264
        $region50: #{net_forward.1} parent=11 // pred_check_branch
          %502 = sbr.rel (%p500) target = $region52
        $region51: #{net_forward.1} parent=11 // pred_region
          _
        $region52: #{net_forward.1} parent=11 // pred_fallthru
          _
        // Predicated region
        $region53: #{net_forward.1} parent=11 // pred_check
          %p503 = pneg %p285
        $region54: #{net_forward.1} parent=11 // pred_check_branch
          %505 = sbr.rel (%p503) target = $region56
        $region55: #{net_forward.1} parent=11 // pred_region
          _
        $region56: #{net_forward.1} parent=11 // pred_fallthru
          _
        // Predicated region
        $region57: #{net_forward.1} parent=11 // pred_check
          %p506 = pneg %p306
        $region58: #{net_forward.1} parent=11 // pred_check_branch
          %508 = sbr.rel (%p506) target = $region60
        $region59: #{net_forward.1} parent=11 // pred_region
          _
        $region60: #{net_forward.1} parent=11 // pred_fallthru
          _
        // Predicated region
        $region61: #{net_forward.1} parent=11 // pred_check
          %p509 = pneg %p327
        $region62: #{net_forward.1} parent=11 // pred_check_branch
          %511 = sbr.rel (%p509) target = $region64
        $region63: #{net_forward.1} parent=11 // pred_region
          _
        $region64: #{net_forward.1} parent=11 // pred_fallthru
          _
        // Predicated region
        $region65: #{net_forward.1} parent=11 // pred_check
          %p512 = pneg %p348
        $region66: #{net_forward.1} parent=11 // pred_check_branch
          %514 = sbr.rel (%p512) target = $region68
        $region67: #{net_forward.1} parent=11 // pred_region
          _
        $region68: #{net_forward.1} parent=11 // pred_fallthru
          _
        // Predicated region
        $region69: #{net_forward.1} parent=11 // pred_check
          %p515 = pneg %p369
        $region70: #{net_forward.1} parent=11 // pred_check_branch
          %517 = sbr.rel (%p515) target = $region72
        $region71: #{net_forward.1} parent=11 // pred_region
          _
        $region72: #{net_forward.1} parent=11 // pred_fallthru
          _
        // Predicated region
        $region73: #{net_forward.1} parent=11 // pred_check
          %p518 = pneg %p390
        $region74: #{net_forward.1} parent=11 // pred_check_branch
          %520 = sbr.rel (%p518) target = $region76
        $region75: #{net_forward.1} parent=11 // pred_region
          _
        $region76: #{net_forward.1} parent=11 // pred_fallthru
          _
        // Predicated region
        $region77: #{net_forward.1} parent=11 // pred_check
          %p521 = pneg %p411
        $region78: #{net_forward.1} parent=11 // pred_check_branch
          %523 = sbr.rel (%p521) target = $region80
        $region79: #{net_forward.1} parent=11 // pred_region
          _
        $region80: #{net_forward.1} parent=11 // pred_fallthru
          _
        // Predicated region
        $region81: #{net_forward.1} parent=11 // pred_check
          %p524 = pneg %p432
        $region82: #{net_forward.1} parent=11 // pred_check_branch
          %526 = sbr.rel (%p524) target = $region84
        $region83: #{net_forward.1} parent=11 // pred_region
          _
        $region84: #{net_forward.1} parent=11 // pred_fallthru
          _
      $region12: #{net_forward.1} parent=5 // pred_fallthru
        _
      %p527 = scmp.lt.s32.totalorder %s28, 2
      // Predicated region
      $region85: #{net_forward.1} parent=5 // pred_check
        %p528 = pneg %p527
      $region86: #{net_forward.1} parent=5 // pred_check_branch
        %530 = sbr.rel (%p528) target = $region88
      $region87: #{net_forward.1} parent=5 // pred_region
        // Predicated region
        $region89: #{net_forward.1} parent=87 // pred_check
          %p531 = pneg %p48
        $region90: #{net_forward.1} parent=87 // pred_check_branch
          %533 = sbr.rel (%p531) target = $region92
        $region91: #{net_forward.1} parent=87 // pred_region
          %p534 = scmp.lt.s32.totalorder %s28, 1
          %s535 = scalar_select %p534, %s28, 1
          %s536 = smul.addr %s535, 4
          %s537 = smul.addr %s536, 8
          %s538 = scalar_lea.vmem %s0, %s537
        $region92: #{net_forward.1} parent=87 // pred_fallthru
          _
      $region88: #{net_forward.1} parent=5 // pred_fallthru
        _
      %p539 = scmp.le.s32.totalorder 1, %s28
      %p540 = scmp.lt.s32.totalorder %s28, 3
      %p541 = pnand %p539, %p540
      %p542 = pneg %p541
      // Predicated region
      $region93: #{net_forward.1} parent=5 // pred_check
        _
      $region94: #{net_forward.1} parent=5 // pred_check_branch
        %544 = sbr.rel (%p541) target = $region96
      $region95: #{net_forward.1} parent=5 // pred_region
        %s545 = ssub.s32 %s28, 1
        %p546 = scmp.lt.s32.totalorder %s33, 1
        %s547 = scalar_select %p546, %s33, 1
        %s548 = smul.addr %s547, 4
        %s549 = smul.addr %s548, 8
        %s550 = scalar_lea.vmem %s0, %s549
        %p551 = pneg %p54
        %p552 = pneg %p51
        %p553 = pneg %p75
        %p554 = pneg %p72
        %p555 = pneg %p96
        %p556 = pneg %p93
        %p557 = pneg %p117
        %p558 = pneg %p114
        %p559 = pneg %p138
        %p560 = pneg %p135
        %p561 = pneg %p159
        %p562 = pneg %p156
        %p563 = pneg %p180
        %p564 = pneg %p177
        %p565 = pneg %p201
        %p566 = pneg %p198
        %p567 = pneg %p222
        %p568 = pneg %p219
        %p569 = pneg %p243
        %p570 = pneg %p240
        %p571 = pneg %p264
        %p572 = pneg %p261
        %p573 = pneg %p285
        %p574 = pneg %p282
        %p575 = pneg %p306
        %p576 = pneg %p303
        %p577 = pneg %p327
        %p578 = pneg %p324
        %p579 = pneg %p348
        %p580 = pneg %p345
        %p581 = pneg %p369
        %p582 = pneg %p366
        %p583 = pneg %p390
        %p584 = pneg %p387
        %p585 = pneg %p411
        %p586 = pneg %p408
        %p587 = pneg %p432
        %p588 = pneg %p429
        %p589 = pneg %p458
        %p590 = pneg %p455
        %s591 = sand.u32 %s445, 1
        %s592 = scalar_lea.sflag [#allocation5], %s591
        %s593 = sand.u32 %s445, 1
        %s594 = scalar_lea.vmem [#allocation4], %s593
        %p595 = scmp.lt.s32.totalorder %s33, 1
        %s596 = scalar_select %p595, %s33, 1
        %s597 = smul.addr %s596, 4
        %s598 = smul.addr %s597, 8
        %s599 = scalar_lea.vmem %s0, %s598
        %v600 = vld [vmem:[%s599] sm:$0xff]
        %v601 = vld [vmem:[%s599 + $0x8] sm:$0xff]
        %v602 = vld [vmem:[%s599 + $0x10] sm:$0xff]
        %v603 = vld [vmem:[%s599 + $0x18] sm:$0xf]
        %v604 = vld [vmem:[%s1] sm:$0xff]
        %v605 = vld [vmem:[%s1 + $0x8] sm:$0xff]
        %v606 = vld [vmem:[%s1 + $0x10] sm:$0xff]
        %v607 = vld [vmem:[%s1 + $0x18] sm:$0xff]
        %v608 = vld [vmem:[%s1 + $0x20] sm:$0xff]
        %v609 = vld [vmem:[%s1 + $0x28] sm:$0xff]
        %v610 = vld [vmem:[%s1 + $0x30] sm:$0xff]
        %v611 = vld [vmem:[%s1 + $0x38] sm:$0xff]
        %v612 = vld [vmem:[%s1 + $0x40] sm:$0xff]
        %v613 = vld [vmem:[%s1 + $0x48] sm:$0xff]
        %v614 = vld [vmem:[%s1 + $0x50] sm:$0xff]
        %v615 = vld [vmem:[%s1 + $0x58] sm:$0xff]
        %v616 = vld [vmem:[%s1 + $0x60] sm:$0xff]
        %v617 = vld [vmem:[%s1 + $0x68] sm:$0xff]
        %v618 = vld [vmem:[%s1 + $0x70] sm:$0xff]
        %v619 = vld [vmem:[%s1 + $0x78] sm:$0xff]
        %v620 = vld [vmem:[%s1 + $0x80] sm:$0xff]
        %v621 = vld [vmem:[%s1 + $0x88] sm:$0xff]
        %v622 = vld [vmem:[%s1 + $0x90] sm:$0xff]
        %v623 = vld [vmem:[%s1 + $0x98] sm:$0xff]
        %v624 = vld [vmem:[%s1 + $0xa0] sm:$0xff]
        %v625 = vld [vmem:[%s1 + $0xa8] sm:$0xff]
        %v626 = vld [vmem:[%s1 + $0xb0] sm:$0xff]
        %v627 = vld [vmem:[%s1 + $0xb8] sm:$0xff]
        %v628 = vld [vmem:[%s599 + $0x1] sm:$0xff]
        %v629 = vld [vmem:[%s599 + $0x9] sm:$0xff]
        %v630 = vld [vmem:[%s599 + $0x11] sm:$0xff]
        %v631 = vld [vmem:[%s599 + $0x19] sm:$0xf]
        %s632 = scalar_lea.vmem %s1, 192
        %v633 = vld [vmem:[%s632] sm:$0xff]
        %v634 = vld [vmem:[%s632 + $0x8] sm:$0xff]
        %v635 = vld [vmem:[%s632 + $0x10] sm:$0xff]
        %v636 = vld [vmem:[%s632 + $0x18] sm:$0xff]
        %v637 = vld [vmem:[%s632 + $0x20] sm:$0xff]
        %v638 = vld [vmem:[%s632 + $0x28] sm:$0xff]
        %v639 = vld [vmem:[%s632 + $0x30] sm:$0xff]
        %v640 = vld [vmem:[%s632 + $0x38] sm:$0xff]
        %v641 = vld [vmem:[%s632 + $0x40] sm:$0xff]
        %v642 = vld [vmem:[%s632 + $0x48] sm:$0xff]
        %v643 = vld [vmem:[%s632 + $0x50] sm:$0xff]
        %v644 = vld [vmem:[%s632 + $0x58] sm:$0xff]
        %v645 = vld [vmem:[%s632 + $0x60] sm:$0xff]
        %v646 = vld [vmem:[%s632 + $0x68] sm:$0xff]
        %v647 = vld [vmem:[%s632 + $0x70] sm:$0xff]
        %v648 = vld [vmem:[%s632 + $0x78] sm:$0xff]
        %v649 = vld [vmem:[%s632 + $0x80] sm:$0xff]
        %v650 = vld [vmem:[%s632 + $0x88] sm:$0xff]
        %v651 = vld [vmem:[%s632 + $0x90] sm:$0xff]
        %v652 = vld [vmem:[%s632 + $0x98] sm:$0xff]
        %v653 = vld [vmem:[%s632 + $0xa0] sm:$0xff]
        %v654 = vld [vmem:[%s632 + $0xa8] sm:$0xff]
        %v655 = vld [vmem:[%s632 + $0xb0] sm:$0xff]
        %v656 = vld [vmem:[%s632 + $0xb8] sm:$0xff]
        %vm657 = vcmask 785408
        %v659 = vsel %vm657, %v628, 0
        %v662 = vsel %vm657, %v629, 0
        %v665 = vsel %vm657, %v630, 0
        %v668 = vsel %vm657, %v631, 0
        %670 = vmatprep.subr.mxu0 0.0
        %671 = vmatpush1.msra.mxu0 0.0
        %672 = vmatprep.subr.mxu0 0.0
        %673 = vmatpush1.msra.mxu0 0.0
        %674 = vmatprep.subr.mxu0 0.0
        %675 = vmatpush1.msra.mxu0 0.0
        %676 = vmatprep.subr.mxu0 0.0
        %677 = vmatpush1.msra.mxu0 0.0
        %678 = vmatprep.subr.mxu0 %v656
        %679 = vmatpush1.msra.mxu0 %v655
        %680 = vmatprep.subr.mxu0 %v654
        %681 = vmatpush1.msra.mxu0 %v653
        %682 = vmatprep.subr.mxu0 %v652
        %683 = vmatpush1.msra.mxu0 %v651
        %684 = vmatprep.subr.mxu0 %v650
        %685 = vmatpush1.msra.mxu0 %v649
        %686 = vmatprep.subr.mxu0 %v648
        %687 = vmatpush1.msra.mxu0 %v647
        %688 = vmatprep.subr.mxu0 %v646
        %689 = vmatpush1.msra.mxu0 %v645
        %690 = vmatprep.subr.mxu0 %v644
        %691 = vmatpush1.msra.mxu0 %v643
        %692 = vmatprep.subr.mxu0 %v642
        %693 = vmatpush1.msra.mxu0 %v641
        %694 = vmatprep.subr.mxu0 %v640
        %695 = vmatpush1.msra.mxu0 %v639
        %696 = vmatprep.subr.mxu0 %v638
        %697 = vmatpush1.msra.mxu0 %v637
        %698 = vmatprep.subr.mxu0 %v636
        %699 = vmatpush1.msra.mxu0 %v635
        %700 = vmatprep.subr.mxu0 %v634
        %701 = vmatpush1.msra.mxu0 %v633
        %702 = vmatprep.subr.mxu0 0.0
        %703 = vmatpush2.msra.mxu0 0.0
        %704 = vmatprep.subr.mxu0 0.0
        %705 = vmatpush2.msra.mxu0 0.0
        %706 = vmatprep.subr.mxu0 0.0
        %707 = vmatpush2.msra.mxu0 0.0
        %708 = vmatprep.subr.mxu0 0.0
        %709 = vmatpush2.msra.mxu0 0.0
        %710 = vmatprep.subr.mxu0 0.0
        %711 = vmatpush2.msra.mxu0 0.0
        %712 = vmatprep.subr.mxu0 0.0
        %713 = vmatpush2.msra.mxu0 0.0
        %714 = vmatprep.subr.mxu0 0.0
        %715 = vmatpush2.msra.mxu0 0.0
        %716 = vmatprep.subr.mxu0 0.0
        %717 = vmatpush2.msra.mxu0 0.0
        %718 = vmatprep.subr.mxu0 0.0
        %719 = vmatpush2.msra.mxu0 0.0
        %720 = vmatprep.subr.mxu0 0.0
        %721 = vmatpush2.msra.mxu0 0.0
        %722 = vmatprep.subr.mxu0 0.0
        %723 = vmatpush2.msra.mxu0 0.0
        %724 = vmatprep.subr.mxu0 0.0
        %725 = vmatpush2.msra.mxu0 0.0
        %726 = vmatprep.subr.mxu0 0.0
        %727 = vmatpush2.msra.mxu0 0.0
        %728 = vmatprep.subr.mxu0 0.0
        %729 = vmatpush2.msra.mxu0 0.0
        %730 = vmatprep.subr.mxu0 0.0
        %731 = vmatpush2.msra.mxu0 0.0
        %732 = vmatprep.subr.mxu0 0.0
        %733 = vmatpush2.msra.mxu0 0.0
        %734 = vmatprep.mubr.f32.mxu0 0.0
        %735 = vmatmul.mubr.f32.gmra.mxu0 %v659
        %v736 = vpop.f32.mrf.mxu0
        %v737 = vadd.f32 0.0, %v736
        %v738 = vpop.f32.mrf.mxu0
        %v739 = vadd.f32 0.0, %v738
        %740 = vmatprep.mubr.f32.mxu0 0.0
        %741 = vmatmul.mubr.f32.gmra.mxu0 %v662
        %v742 = vpop.f32.mrf.mxu0
        %v743 = vadd.f32 0.0, %v742
        %v744 = vpop.f32.mrf.mxu0
        %v745 = vadd.f32 0.0, %v744
        %746 = vmatprep.mubr.f32.mxu0 0.0
        %747 = vmatmul.mubr.f32.gmra.mxu0 %v665
        %v748 = vpop.f32.mrf.mxu0
        %v749 = vadd.f32 0.0, %v748
        %v750 = vpop.f32.mrf.mxu0
        %v751 = vadd.f32 0.0, %v750
        %752 = vmatprep.mubr.f32.mxu0 0.0
        %753 = vmatmul.mubr.f32.gmra.mxu0 %v668
        %v754 = vpop.f32.mrf.mxu0
        %v755 = vadd.f32 0.0, %v754
        %v756 = vpop.f32.mrf.mxu0
        %v757 = vadd.f32 0.0, %v756
        %758 = vdwg.mxu0
        %v760 = vsel %vm657, %v600, 0
        %v763 = vsel %vm657, %v601, 0
        %v766 = vsel %vm657, %v602, 0
        %v769 = vsel %vm657, %v603, 0
        %771 = vmatprep.subr.mxu0 0.0
        %772 = vmatpush1.msra.mxu0 0.0
        %773 = vmatprep.subr.mxu0 0.0
        %774 = vmatpush1.msra.mxu0 0.0
        %775 = vmatprep.subr.mxu0 0.0
        %776 = vmatpush1.msra.mxu0 0.0
        %777 = vmatprep.subr.mxu0 0.0
        %778 = vmatpush1.msra.mxu0 0.0
        %779 = vmatprep.subr.mxu0 %v627
        %780 = vmatpush1.msra.mxu0 %v626
        %781 = vmatprep.subr.mxu0 %v625
        %782 = vmatpush1.msra.mxu0 %v624
        %783 = vmatprep.subr.mxu0 %v623
        %784 = vmatpush1.msra.mxu0 %v622
        %785 = vmatprep.subr.mxu0 %v621
        %786 = vmatpush1.msra.mxu0 %v620
        %787 = vmatprep.subr.mxu0 %v619
        %788 = vmatpush1.msra.mxu0 %v618
        %789 = vmatprep.subr.mxu0 %v617
        %790 = vmatpush1.msra.mxu0 %v616
        %791 = vmatprep.subr.mxu0 %v615
        %792 = vmatpush1.msra.mxu0 %v614
        %793 = vmatprep.subr.mxu0 %v613
        %794 = vmatpush1.msra.mxu0 %v612
        %795 = vmatprep.subr.mxu0 %v611
        %796 = vmatpush1.msra.mxu0 %v610
        %797 = vmatprep.subr.mxu0 %v609
        %798 = vmatpush1.msra.mxu0 %v608
        %799 = vmatprep.subr.mxu0 %v607
        %800 = vmatpush1.msra.mxu0 %v606
        %801 = vmatprep.subr.mxu0 %v605
        %802 = vmatpush1.msra.mxu0 %v604
        %803 = vmatprep.subr.mxu0 0.0
        %804 = vmatpush2.msra.mxu0 0.0
        %805 = vmatprep.subr.mxu0 0.0
        %806 = vmatpush2.msra.mxu0 0.0
        %807 = vmatprep.subr.mxu0 0.0
        %808 = vmatpush2.msra.mxu0 0.0
        %809 = vmatprep.subr.mxu0 0.0
        %810 = vmatpush2.msra.mxu0 0.0
        %811 = vmatprep.subr.mxu0 0.0
        %812 = vmatpush2.msra.mxu0 0.0
        %813 = vmatprep.subr.mxu0 0.0
        %814 = vmatpush2.msra.mxu0 0.0
        %815 = vmatprep.subr.mxu0 0.0
        %816 = vmatpush2.msra.mxu0 0.0
        %817 = vmatprep.subr.mxu0 0.0
        %818 = vmatpush2.msra.mxu0 0.0
        %819 = vmatprep.subr.mxu0 0.0
        %820 = vmatpush2.msra.mxu0 0.0
        %821 = vmatprep.subr.mxu0 0.0
        %822 = vmatpush2.msra.mxu0 0.0
        %823 = vmatprep.subr.mxu0 0.0
        %824 = vmatpush2.msra.mxu0 0.0
        %825 = vmatprep.subr.mxu0 0.0
        %826 = vmatpush2.msra.mxu0 0.0
        %827 = vmatprep.subr.mxu0 0.0
        %828 = vmatpush2.msra.mxu0 0.0
        %829 = vmatprep.subr.mxu0 0.0
        %830 = vmatpush2.msra.mxu0 0.0
        %831 = vmatprep.subr.mxu0 0.0
        %832 = vmatpush2.msra.mxu0 0.0
        %833 = vmatprep.subr.mxu0 0.0
        %834 = vmatpush2.msra.mxu0 0.0
        %835 = vmatprep.mubr.f32.mxu0 0.0
        %836 = vmatmul.mubr.f32.gmra.mxu0 %v760
        %v837 = vpop.f32.mrf.mxu0
        %v838 = vadd.f32 %v737, %v837
        %v839 = vpop.f32.mrf.mxu0
        %v840 = vadd.f32 %v739, %v839
        %841 = vmatprep.mubr.f32.mxu0 0.0
        %842 = vmatmul.mubr.f32.gmra.mxu0 %v763
        %v843 = vpop.f32.mrf.mxu0
        %v844 = vadd.f32 %v743, %v843
        %v845 = vpop.f32.mrf.mxu0
        %v846 = vadd.f32 %v745, %v845
        %847 = vmatprep.mubr.f32.mxu0 0.0
        %848 = vmatmul.mubr.f32.gmra.mxu0 %v766
        %v849 = vpop.f32.mrf.mxu0
        %v850 = vadd.f32 %v749, %v849
        %v851 = vpop.f32.mrf.mxu0
        %v852 = vadd.f32 %v751, %v851
        %853 = vmatprep.mubr.f32.mxu0 0.0
        %854 = vmatmul.mubr.f32.gmra.mxu0 %v769
        %v855 = vpop.f32.mrf.mxu0
        %v856 = vadd.f32 %v755, %v855
        %v857 = vpop.f32.mrf.mxu0
        %v858 = vadd.f32 %v757, %v857
        %859 = vdwg.mxu0
        %v860 = vld [vmem:[%s599 + $0x2] sm:$0xff]
        %v861 = vld [vmem:[%s599 + $0xa] sm:$0xff]
        %v862 = vld [vmem:[%s599 + $0x12] sm:$0xff]
        %v863 = vld [vmem:[%s599 + $0x1a] sm:$0xf]
        %s864 = scalar_lea.vmem %s1, 384
        %v865 = vld [vmem:[%s864] sm:$0xff]
        %v866 = vld [vmem:[%s864 + $0x8] sm:$0xff]
        %v867 = vld [vmem:[%s864 + $0x10] sm:$0xff]
        %v868 = vld [vmem:[%s864 + $0x18] sm:$0xff]
        %v869 = vld [vmem:[%s864 + $0x20] sm:$0xff]
        %v870 = vld [vmem:[%s864 + $0x28] sm:$0xff]
        %v871 = vld [vmem:[%s864 + $0x30] sm:$0xff]
        %v872 = vld [vmem:[%s864 + $0x38] sm:$0xff]
        %v873 = vld [vmem:[%s864 + $0x40] sm:$0xff]
        %v874 = vld [vmem:[%s864 + $0x48] sm:$0xff]
        %v875 = vld [vmem:[%s864 + $0x50] sm:$0xff]
        %v876 = vld [vmem:[%s864 + $0x58] sm:$0xff]
        %v877 = vld [vmem:[%s864 + $0x60] sm:$0xff]
        %v878 = vld [vmem:[%s864 + $0x68] sm:$0xff]
        %v879 = vld [vmem:[%s864 + $0x70] sm:$0xff]
        %v880 = vld [vmem:[%s864 + $0x78] sm:$0xff]
        %v881 = vld [vmem:[%s864 + $0x80] sm:$0xff]
        %v882 = vld [vmem:[%s864 + $0x88] sm:$0xff]
        %v883 = vld [vmem:[%s864 + $0x90] sm:$0xff]
        %v884 = vld [vmem:[%s864 + $0x98] sm:$0xff]
        %v885 = vld [vmem:[%s864 + $0xa0] sm:$0xff]
        %v886 = vld [vmem:[%s864 + $0xa8] sm:$0xff]
        %v887 = vld [vmem:[%s864 + $0xb0] sm:$0xff]
        %v888 = vld [vmem:[%s864 + $0xb8] sm:$0xff]
        %v890 = vsel %vm657, %v860, 0
        %v893 = vsel %vm657, %v861, 0
        %v896 = vsel %vm657, %v862, 0
        %v899 = vsel %vm657, %v863, 0
        %901 = vmatprep.subr.mxu0 0.0
        %902 = vmatpush1.msra.mxu0 0.0
        %903 = vmatprep.subr.mxu0 0.0
        %904 = vmatpush1.msra.mxu0 0.0
        %905 = vmatprep.subr.mxu0 0.0
        %906 = vmatpush1.msra.mxu0 0.0
        %907 = vmatprep.subr.mxu0 0.0
        %908 = vmatpush1.msra.mxu0 0.0
        %909 = vmatprep.subr.mxu0 %v888
        %910 = vmatpush1.msra.mxu0 %v887
        %911 = vmatprep.subr.mxu0 %v886
        %912 = vmatpush1.msra.mxu0 %v885
        %913 = vmatprep.subr.mxu0 %v884
        %914 = vmatpush1.msra.mxu0 %v883
        %915 = vmatprep.subr.mxu0 %v882
        %916 = vmatpush1.msra.mxu0 %v881
        %917 = vmatprep.subr.mxu0 %v880
        %918 = vmatpush1.msra.mxu0 %v879
        %919 = vmatprep.subr.mxu0 %v878
        %920 = vmatpush1.msra.mxu0 %v877
        %921 = vmatprep.subr.mxu0 %v876
        %922 = vmatpush1.msra.mxu0 %v875
        %923 = vmatprep.subr.mxu0 %v874
        %924 = vmatpush1.msra.mxu0 %v873
        %925 = vmatprep.subr.mxu0 %v872
        %926 = vmatpush1.msra.mxu0 %v871
        %927 = vmatprep.subr.mxu0 %v870
        %928 = vmatpush1.msra.mxu0 %v869
        %929 = vmatprep.subr.mxu0 %v868
        %930 = vmatpush1.msra.mxu0 %v867
        %931 = vmatprep.subr.mxu0 %v866
        %932 = vmatpush1.msra.mxu0 %v865
        %933 = vmatprep.subr.mxu0 0.0
        %934 = vmatpush2.msra.mxu0 0.0
        %935 = vmatprep.subr.mxu0 0.0
        %936 = vmatpush2.msra.mxu0 0.0
        %937 = vmatprep.subr.mxu0 0.0
        %938 = vmatpush2.msra.mxu0 0.0
        %939 = vmatprep.subr.mxu0 0.0
        %940 = vmatpush2.msra.mxu0 0.0
        %941 = vmatprep.subr.mxu0 0.0
        %942 = vmatpush2.msra.mxu0 0.0
        %943 = vmatprep.subr.mxu0 0.0
        %944 = vmatpush2.msra.mxu0 0.0
        %945 = vmatprep.subr.mxu0 0.0
        %946 = vmatpush2.msra.mxu0 0.0
        %947 = vmatprep.subr.mxu0 0.0
        %948 = vmatpush2.msra.mxu0 0.0
        %949 = vmatprep.subr.mxu0 0.0
        %950 = vmatpush2.msra.mxu0 0.0
        %951 = vmatprep.subr.mxu0 0.0
        %952 = vmatpush2.msra.mxu0 0.0
        %953 = vmatprep.subr.mxu0 0.0
        %954 = vmatpush2.msra.mxu0 0.0
        %955 = vmatprep.subr.mxu0 0.0
        %956 = vmatpush2.msra.mxu0 0.0
        %957 = vmatprep.subr.mxu0 0.0
        %958 = vmatpush2.msra.mxu0 0.0
        %959 = vmatprep.subr.mxu0 0.0
        %960 = vmatpush2.msra.mxu0 0.0
        %961 = vmatprep.subr.mxu0 0.0
        %962 = vmatpush2.msra.mxu0 0.0
        %963 = vmatprep.subr.mxu0 0.0
        %964 = vmatpush2.msra.mxu0 0.0
        %965 = vmatprep.mubr.f32.mxu0 0.0
        %966 = vmatmul.mubr.f32.gmra.mxu0 %v890
        %v967 = vpop.f32.mrf.mxu0
        %v968 = vadd.f32 0.0, %v967
        %v969 = vpop.f32.mrf.mxu0
        %v970 = vadd.f32 0.0, %v969
        %971 = vmatprep.mubr.f32.mxu0 0.0
        %972 = vmatmul.mubr.f32.gmra.mxu0 %v893
        %v973 = vpop.f32.mrf.mxu0
        %v974 = vadd.f32 0.0, %v973
        %v975 = vpop.f32.mrf.mxu0
        %v976 = vadd.f32 0.0, %v975
        %977 = vmatprep.mubr.f32.mxu0 0.0
        %978 = vmatmul.mubr.f32.gmra.mxu0 %v896
        %v979 = vpop.f32.mrf.mxu0
        %v980 = vadd.f32 0.0, %v979
        %v981 = vpop.f32.mrf.mxu0
        %v982 = vadd.f32 0.0, %v981
        %983 = vmatprep.mubr.f32.mxu0 0.0
        %984 = vmatmul.mubr.f32.gmra.mxu0 %v899
        %v985 = vpop.f32.mrf.mxu0
        %v986 = vadd.f32 0.0, %v985
        %v987 = vpop.f32.mrf.mxu0
        %v988 = vadd.f32 0.0, %v987
        %989 = vdwg.mxu0
        %v990 = vadd.f32 %v838, %v968
        %v991 = vadd.f32 %v840, %v970
        %v992 = vadd.f32 %v844, %v974
        %v993 = vadd.f32 %v846, %v976
        %v994 = vadd.f32 %v850, %v980
        %v995 = vadd.f32 %v852, %v982
        %v996 = vadd.f32 %v856, %v986
        %v997 = vadd.f32 %v858, %v988
        %v998 = vld [vmem:[%s599 + $0x3] sm:$0xff]
        %v999 = vld [vmem:[%s599 + $0xb] sm:$0xff]
        %v1000 = vld [vmem:[%s599 + $0x13] sm:$0xff]
        %v1001 = vld [vmem:[%s599 + $0x1b] sm:$0xf]
        %s1002 = scalar_lea.vmem %s1, 576
        %v1003 = vld [vmem:[%s1002] sm:$0xff]
        %v1004 = vld [vmem:[%s1002 + $0x8] sm:$0xff]
        %v1005 = vld [vmem:[%s1002 + $0x10] sm:$0xff]
        %v1006 = vld [vmem:[%s1002 + $0x18] sm:$0xff]
        %v1007 = vld [vmem:[%s1002 + $0x20] sm:$0xff]
        %v1008 = vld [vmem:[%s1002 + $0x28] sm:$0xff]
        %v1009 = vld [vmem:[%s1002 + $0x30] sm:$0xff]
        %v1010 = vld [vmem:[%s1002 + $0x38] sm:$0xff]
        %v1011 = vld [vmem:[%s1002 + $0x40] sm:$0xff]
        %v1012 = vld [vmem:[%s1002 + $0x48] sm:$0xff]
        %v1013 = vld [vmem:[%s1002 + $0x50] sm:$0xff]
        %v1014 = vld [vmem:[%s1002 + $0x58] sm:$0xff]
        %v1015 = vld [vmem:[%s1002 + $0x60] sm:$0xff]
        %v1016 = vld [vmem:[%s1002 + $0x68] sm:$0xff]
        %v1017 = vld [vmem:[%s1002 + $0x70] sm:$0xff]
        %v1018 = vld [vmem:[%s1002 + $0x78] sm:$0xff]
        %v1019 = vld [vmem:[%s1002 + $0x80] sm:$0xff]
        %v1020 = vld [vmem:[%s1002 + $0x88] sm:$0xff]
        %v1021 = vld [vmem:[%s1002 + $0x90] sm:$0xff]
        %v1022 = vld [vmem:[%s1002 + $0x98] sm:$0xff]
        %v1023 = vld [vmem:[%s1002 + $0xa0] sm:$0xff]
        %v1024 = vld [vmem:[%s1002 + $0xa8] sm:$0xff]
        %v1025 = vld [vmem:[%s1002 + $0xb0] sm:$0xff]
        %v1026 = vld [vmem:[%s1002 + $0xb8] sm:$0xff]
        %v1028 = vsel %vm657, %v998, 0
        %v1031 = vsel %vm657, %v999, 0
        %v1034 = vsel %vm657, %v1000, 0
        %v1037 = vsel %vm657, %v1001, 0
        %1039 = vmatprep.subr.mxu0 0.0
        %1040 = vmatpush1.msra.mxu0 0.0
        %1041 = vmatprep.subr.mxu0 0.0
        %1042 = vmatpush1.msra.mxu0 0.0
        %1043 = vmatprep.subr.mxu0 0.0
        %1044 = vmatpush1.msra.mxu0 0.0
        %1045 = vmatprep.subr.mxu0 0.0
        %1046 = vmatpush1.msra.mxu0 0.0
        %1047 = vmatprep.subr.mxu0 %v1026
        %1048 = vmatpush1.msra.mxu0 %v1025
        %1049 = vmatprep.subr.mxu0 %v1024
        %1050 = vmatpush1.msra.mxu0 %v1023
        %1051 = vmatprep.subr.mxu0 %v1022
        %1052 = vmatpush1.msra.mxu0 %v1021
        %1053 = vmatprep.subr.mxu0 %v1020
        %1054 = vmatpush1.msra.mxu0 %v1019
        %1055 = vmatprep.subr.mxu0 %v1018
        %1056 = vmatpush1.msra.mxu0 %v1017
        %1057 = vmatprep.subr.mxu0 %v1016
        %1058 = vmatpush1.msra.mxu0 %v1015
        %1059 = vmatprep.subr.mxu0 %v1014
        %1060 = vmatpush1.msra.mxu0 %v1013
        %1061 = vmatprep.subr.mxu0 %v1012
        %1062 = vmatpush1.msra.mxu0 %v1011
        %1063 = vmatprep.subr.mxu0 %v1010
        %1064 = vmatpush1.msra.mxu0 %v1009
        %1065 = vmatprep.subr.mxu0 %v1008
        %1066 = vmatpush1.msra.mxu0 %v1007
        %1067 = vmatprep.subr.mxu0 %v1006
        %1068 = vmatpush1.msra.mxu0 %v1005
        %1069 = vmatprep.subr.mxu0 %v1004
        %1070 = vmatpush1.msra.mxu0 %v1003
        %1071 = vmatprep.subr.mxu0 0.0
        %1072 = vmatpush2.msra.mxu0 0.0
        %1073 = vmatprep.subr.mxu0 0.0
        %1074 = vmatpush2.msra.mxu0 0.0
        %1075 = vmatprep.subr.mxu0 0.0
        %1076 = vmatpush2.msra.mxu0 0.0
        %1077 = vmatprep.subr.mxu0 0.0
        %1078 = vmatpush2.msra.mxu0 0.0
        %1079 = vmatprep.subr.mxu0 0.0
        %1080 = vmatpush2.msra.mxu0 0.0
        %1081 = vmatprep.subr.mxu0 0.0
        %1082 = vmatpush2.msra.mxu0 0.0
        %1083 = vmatprep.subr.mxu0 0.0
        %1084 = vmatpush2.msra.mxu0 0.0
        %1085 = vmatprep.subr.mxu0 0.0
        %1086 = vmatpush2.msra.mxu0 0.0
        %1087 = vmatprep.subr.mxu0 0.0
        %1088 = vmatpush2.msra.mxu0 0.0
        %1089 = vmatprep.subr.mxu0 0.0
        %1090 = vmatpush2.msra.mxu0 0.0
        %1091 = vmatprep.subr.mxu0 0.0
        %1092 = vmatpush2.msra.mxu0 0.0
        %1093 = vmatprep.subr.mxu0 0.0
        %1094 = vmatpush2.msra.mxu0 0.0
        %1095 = vmatprep.subr.mxu0 0.0
        %1096 = vmatpush2.msra.mxu0 0.0
        %1097 = vmatprep.subr.mxu0 0.0
        %1098 = vmatpush2.msra.mxu0 0.0
        %1099 = vmatprep.subr.mxu0 0.0
        %1100 = vmatpush2.msra.mxu0 0.0
        %1101 = vmatprep.subr.mxu0 0.0
        %1102 = vmatpush2.msra.mxu0 0.0
        %1103 = vmatprep.mubr.f32.mxu0 0.0
        %1104 = vmatmul.mubr.f32.gmra.mxu0 %v1028
        %v1105 = vpop.f32.mrf.mxu0
        %v1106 = vadd.f32 0.0, %v1105
        %v1107 = vpop.f32.mrf.mxu0
        %v1108 = vadd.f32 0.0, %v1107
        %1109 = vmatprep.mubr.f32.mxu0 0.0
        %1110 = vmatmul.mubr.f32.gmra.mxu0 %v1031
        %v1111 = vpop.f32.mrf.mxu0
        %v1112 = vadd.f32 0.0, %v1111
        %v1113 = vpop.f32.mrf.mxu0
        %v1114 = vadd.f32 0.0, %v1113
        %1115 = vmatprep.mubr.f32.mxu0 0.0
        %1116 = vmatmul.mubr.f32.gmra.mxu0 %v1034
        %v1117 = vpop.f32.mrf.mxu0
        %v1118 = vadd.f32 0.0, %v1117
        %v1119 = vpop.f32.mrf.mxu0
        %v1120 = vadd.f32 0.0, %v1119
        %1121 = vmatprep.mubr.f32.mxu0 0.0
        %1122 = vmatmul.mubr.f32.gmra.mxu0 %v1037
        %v1123 = vpop.f32.mrf.mxu0
        %v1124 = vadd.f32 0.0, %v1123
        %v1125 = vpop.f32.mrf.mxu0
        %v1126 = vadd.f32 0.0, %v1125
        %1127 = vdwg.mxu0
        %v1128 = vadd.f32 %v990, %v1106
        %v1129 = vadd.f32 %v991, %v1108
        %v1130 = vadd.f32 %v992, %v1112
        %v1131 = vadd.f32 %v993, %v1114
        %v1132 = vadd.f32 %v994, %v1118
        %v1133 = vadd.f32 %v995, %v1120
        %v1134 = vadd.f32 %v996, %v1124
        %v1135 = vadd.f32 %v997, %v1126
        %v1136 = vld [vmem:[%s599 + $0x4] sm:$0xff]
        %v1137 = vld [vmem:[%s599 + $0xc] sm:$0xff]
        %v1138 = vld [vmem:[%s599 + $0x14] sm:$0xff]
        %v1139 = vld [vmem:[%s599 + $0x1c] sm:$0xf]
        %s1140 = scalar_lea.vmem %s1, 768
        %v1141 = vld [vmem:[%s1140] sm:$0xff]
        %v1142 = vld [vmem:[%s1140 + $0x8] sm:$0xff]
        %v1143 = vld [vmem:[%s1140 + $0x10] sm:$0xff]
        %v1144 = vld [vmem:[%s1140 + $0x18] sm:$0xff]
        %v1145 = vld [vmem:[%s1140 + $0x20] sm:$0xff]
        %v1146 = vld [vmem:[%s1140 + $0x28] sm:$0xff]
        %v1147 = vld [vmem:[%s1140 + $0x30] sm:$0xff]
        %v1148 = vld [vmem:[%s1140 + $0x38] sm:$0xff]
        %v1149 = vld [vmem:[%s1140 + $0x40] sm:$0xff]
        %v1150 = vld [vmem:[%s1140 + $0x48] sm:$0xff]
        %v1151 = vld [vmem:[%s1140 + $0x50] sm:$0xff]
        %v1152 = vld [vmem:[%s1140 + $0x58] sm:$0xff]
        %v1153 = vld [vmem:[%s1140 + $0x60] sm:$0xff]
        %v1154 = vld [vmem:[%s1140 + $0x68] sm:$0xff]
        %v1155 = vld [vmem:[%s1140 + $0x70] sm:$0xff]
        %v1156 = vld [vmem:[%s1140 + $0x78] sm:$0xff]
        %v1157 = vld [vmem:[%s1140 + $0x80] sm:$0xff]
        %v1158 = vld [vmem:[%s1140 + $0x88] sm:$0xff]
        %v1159 = vld [vmem:[%s1140 + $0x90] sm:$0xff]
        %v1160 = vld [vmem:[%s1140 + $0x98] sm:$0xff]
        %v1161 = vld [vmem:[%s1140 + $0xa0] sm:$0xff]
        %v1162 = vld [vmem:[%s1140 + $0xa8] sm:$0xff]
        %v1163 = vld [vmem:[%s1140 + $0xb0] sm:$0xff]
        %v1164 = vld [vmem:[%s1140 + $0xb8] sm:$0xff]
        %v1166 = vsel %vm657, %v1136, 0
        %v1169 = vsel %vm657, %v1137, 0
        %v1172 = vsel %vm657, %v1138, 0
        %v1175 = vsel %vm657, %v1139, 0
        %1177 = vmatprep.subr.mxu0 0.0
        %1178 = vmatpush1.msra.mxu0 0.0
        %1179 = vmatprep.subr.mxu0 0.0
        %1180 = vmatpush1.msra.mxu0 0.0
        %1181 = vmatprep.subr.mxu0 0.0
        %1182 = vmatpush1.msra.mxu0 0.0
        %1183 = vmatprep.subr.mxu0 0.0
        %1184 = vmatpush1.msra.mxu0 0.0
        %1185 = vmatprep.subr.mxu0 %v1164
        %1186 = vmatpush1.msra.mxu0 %v1163
        %1187 = vmatprep.subr.mxu0 %v1162
        %1188 = vmatpush1.msra.mxu0 %v1161
        %1189 = vmatprep.subr.mxu0 %v1160
        %1190 = vmatpush1.msra.mxu0 %v1159
        %1191 = vmatprep.subr.mxu0 %v1158
        %1192 = vmatpush1.msra.mxu0 %v1157
        %1193 = vmatprep.subr.mxu0 %v1156
        %1194 = vmatpush1.msra.mxu0 %v1155
        %1195 = vmatprep.subr.mxu0 %v1154
        %1196 = vmatpush1.msra.mxu0 %v1153
        %1197 = vmatprep.subr.mxu0 %v1152
        %1198 = vmatpush1.msra.mxu0 %v1151
        %1199 = vmatprep.subr.mxu0 %v1150
        %1200 = vmatpush1.msra.mxu0 %v1149
        %1201 = vmatprep.subr.mxu0 %v1148
        %1202 = vmatpush1.msra.mxu0 %v1147
        %1203 = vmatprep.subr.mxu0 %v1146
        %1204 = vmatpush1.msra.mxu0 %v1145
        %1205 = vmatprep.subr.mxu0 %v1144
        %1206 = vmatpush1.msra.mxu0 %v1143
        %1207 = vmatprep.subr.mxu0 %v1142
        %1208 = vmatpush1.msra.mxu0 %v1141
        %1209 = vmatprep.subr.mxu0 0.0
        %1210 = vmatpush2.msra.mxu0 0.0
        %1211 = vmatprep.subr.mxu0 0.0
        %1212 = vmatpush2.msra.mxu0 0.0
        %1213 = vmatprep.subr.mxu0 0.0
        %1214 = vmatpush2.msra.mxu0 0.0
        %1215 = vmatprep.subr.mxu0 0.0
        %1216 = vmatpush2.msra.mxu0 0.0
        %1217 = vmatprep.subr.mxu0 0.0
        %1218 = vmatpush2.msra.mxu0 0.0
        %1219 = vmatprep.subr.mxu0 0.0
        %1220 = vmatpush2.msra.mxu0 0.0
        %1221 = vmatprep.subr.mxu0 0.0
        %1222 = vmatpush2.msra.mxu0 0.0
        %1223 = vmatprep.subr.mxu0 0.0
        %1224 = vmatpush2.msra.mxu0 0.0
        %1225 = vmatprep.subr.mxu0 0.0
        %1226 = vmatpush2.msra.mxu0 0.0
        %1227 = vmatprep.subr.mxu0 0.0
        %1228 = vmatpush2.msra.mxu0 0.0
        %1229 = vmatprep.subr.mxu0 0.0
        %1230 = vmatpush2.msra.mxu0 0.0
        %1231 = vmatprep.subr.mxu0 0.0
        %1232 = vmatpush2.msra.mxu0 0.0
        %1233 = vmatprep.subr.mxu0 0.0
        %1234 = vmatpush2.msra.mxu0 0.0
        %1235 = vmatprep.subr.mxu0 0.0
        %1236 = vmatpush2.msra.mxu0 0.0
        %1237 = vmatprep.subr.mxu0 0.0
        %1238 = vmatpush2.msra.mxu0 0.0
        %1239 = vmatprep.subr.mxu0 0.0
        %1240 = vmatpush2.msra.mxu0 0.0
        %1241 = vmatprep.mubr.f32.mxu0 0.0
        %1242 = vmatmul.mubr.f32.gmra.mxu0 %v1166
        %v1243 = vpop.f32.mrf.mxu0
        %v1244 = vadd.f32 0.0, %v1243
        %v1245 = vpop.f32.mrf.mxu0
        %v1246 = vadd.f32 0.0, %v1245
        %1247 = vmatprep.mubr.f32.mxu0 0.0
        %1248 = vmatmul.mubr.f32.gmra.mxu0 %v1169
        %v1249 = vpop.f32.mrf.mxu0
        %v1250 = vadd.f32 0.0, %v1249
        %v1251 = vpop.f32.mrf.mxu0
        %v1252 = vadd.f32 0.0, %v1251
        %1253 = vmatprep.mubr.f32.mxu0 0.0
        %1254 = vmatmul.mubr.f32.gmra.mxu0 %v1172
        %v1255 = vpop.f32.mrf.mxu0
        %v1256 = vadd.f32 0.0, %v1255
        %v1257 = vpop.f32.mrf.mxu0
        %v1258 = vadd.f32 0.0, %v1257
        %1259 = vmatprep.mubr.f32.mxu0 0.0
        %1260 = vmatmul.mubr.f32.gmra.mxu0 %v1175
        %v1261 = vpop.f32.mrf.mxu0
        %v1262 = vadd.f32 0.0, %v1261
        %v1263 = vpop.f32.mrf.mxu0
        %v1264 = vadd.f32 0.0, %v1263
        %1265 = vdwg.mxu0
        %v1266 = vadd.f32 %v1128, %v1244
        %v1267 = vadd.f32 %v1129, %v1246
        %v1268 = vadd.f32 %v1130, %v1250
        %v1269 = vadd.f32 %v1131, %v1252
        %v1270 = vadd.f32 %v1132, %v1256
        %v1271 = vadd.f32 %v1133, %v1258
        %v1272 = vadd.f32 %v1134, %v1262
        %v1273 = vadd.f32 %v1135, %v1264
        %v1274 = vld [vmem:[%s2] sm:$0x3]
        %v1276 = vlaneseq
        %v1277 = vshrl.u32 %v1276, 7
        %v1278 = vsub.s32 0, %v1277
        %v1279 = vrot.slane %v1274, %v1278
        %v1280 = vlaneseq
        %v1281 = vshrl.u32 %v1280, 7
        %v1282 = vsub.s32 1, %v1281
        %v1283 = vrot.slane %v1274, %v1282
        %v1286 = vadd.f32 %v1266, %v1279
        %v1287 = vadd.f32 %v1267, %v1283
        %v1288 = vadd.f32 %v1268, %v1279
        %v1289 = vadd.f32 %v1269, %v1283
        %v1290 = vadd.f32 %v1270, %v1279
        %v1291 = vadd.f32 %v1271, %v1283
        %v1292 = vadd.f32 %v1272, %v1279
        %v1293 = vadd.f32 %v1273, %v1283
        %v1294 = vmax.f32 %v1286, 0.0
        %v1295 = vmax.f32 %v1287, 0.0
        %v1296 = vmax.f32 %v1288, 0.0
        %v1297 = vmax.f32 %v1289, 0.0
        %v1298 = vmax.f32 %v1290, 0.0
        %v1299 = vmax.f32 %v1291, 0.0
        %v1300 = vmax.f32 %v1292, 0.0
        %v1301 = vmax.f32 %v1293, 0.0
        %v1302 = vld [vmem:[%s3] sm:$0xff]
        %v1303 = vld [vmem:[%s3 + $0x8] sm:$0x3f]
        %vm1304 = vcmask 228352
        %v1306 = vsel %vm1304, %v1302, 0
        %v1309 = vsel %vm1304, %v1303, 0
        %vm1311 = vcmask 1043456
        %v1313 = vsel %vm1311, %v1300, 0
        %v1316 = vsel %vm1311, %v1301, 0
        %1318 = vmatprep.subr.mxu0 0.0
        %1319 = vmatpush1.msra.mxu0 0.0
        %1320 = vmatprep.subr.mxu0 0.0
        %1321 = vmatpush1.msra.mxu0 0.0
        %1322 = vmatprep.subr.mxu0 0.0
        %1323 = vmatpush1.msra.mxu0 0.0
        %1324 = vmatprep.subr.mxu0 0.0
        %1325 = vmatpush1.msra.mxu0 0.0
        %1326 = vmatprep.subr.mxu0 0.0
        %1327 = vmatpush1.msra.mxu0 0.0
        %1328 = vmatprep.subr.mxu0 0.0
        %1329 = vmatpush1.msra.mxu0 0.0
        %1330 = vmatprep.subr.mxu0 0.0
        %1331 = vmatpush1.msra.mxu0 0.0
        %1332 = vmatprep.subr.mxu0 0.0
        %1333 = vmatpush1.msra.mxu0 0.0
        %1334 = vmatprep.subr.mxu0 0.0
        %1335 = vmatpush1.msra.mxu0 0.0
        %1336 = vmatprep.subr.mxu0 0.0
        %1337 = vmatpush1.msra.mxu0 0.0
        %1338 = vmatprep.subr.mxu0 0.0
        %1339 = vmatpush1.msra.mxu0 0.0
        %1340 = vmatprep.subr.mxu0 0.0
        %1341 = vmatpush1.msra.mxu0 0.0
        %1342 = vmatprep.subr.mxu0 %v1316
        %1343 = vmatpush1.msra.mxu0 %v1313
        %1344 = vmatprep.subr.mxu0 %v1299
        %1345 = vmatpush1.msra.mxu0 %v1298
        %1346 = vmatprep.subr.mxu0 %v1297
        %1347 = vmatpush1.msra.mxu0 %v1296
        %1348 = vmatprep.subr.mxu0 %v1295
        %1349 = vmatpush1.msra.mxu0 %v1294
        %1350 = vmatprep.subr.mxu0 0.0
        %1351 = vmatpush2.msra.mxu0 0.0
        %1352 = vmatprep.subr.mxu0 0.0
        %1353 = vmatpush2.msra.mxu0 0.0
        %1354 = vmatprep.subr.mxu0 0.0
        %1355 = vmatpush2.msra.mxu0 0.0
        %1356 = vmatprep.subr.mxu0 0.0
        %1357 = vmatpush2.msra.mxu0 0.0
        %1358 = vmatprep.subr.mxu0 0.0
        %1359 = vmatpush2.msra.mxu0 0.0
        %1360 = vmatprep.subr.mxu0 0.0
        %1361 = vmatpush2.msra.mxu0 0.0
        %1362 = vmatprep.subr.mxu0 0.0
        %1363 = vmatpush2.msra.mxu0 0.0
        %1364 = vmatprep.subr.mxu0 0.0
        %1365 = vmatpush2.msra.mxu0 0.0
        %1366 = vmatprep.subr.mxu0 0.0
        %1367 = vmatpush2.msra.mxu0 0.0
        %1368 = vmatprep.subr.mxu0 0.0
        %1369 = vmatpush2.msra.mxu0 0.0
        %1370 = vmatprep.subr.mxu0 0.0
        %1371 = vmatpush2.msra.mxu0 0.0
        %1372 = vmatprep.subr.mxu0 0.0
        %1373 = vmatpush2.msra.mxu0 0.0
        %1374 = vmatprep.subr.mxu0 0.0
        %1375 = vmatpush2.msra.mxu0 0.0
        %1376 = vmatprep.subr.mxu0 0.0
        %1377 = vmatpush2.msra.mxu0 0.0
        %1378 = vmatprep.subr.mxu0 0.0
        %1379 = vmatpush2.msra.mxu0 0.0
        %1380 = vmatprep.subr.mxu0 0.0
        %1381 = vmatpush2.msra.mxu0 0.0
        %1382 = vmatprep.mubr.f32.mxu0 0.0
        %1383 = vmatmul.mubr.f32.gmra.mxu0 %v1306
        %v1384 = vpop.f32.mrf.mxu0
        %v1385 = vadd.f32 0.0, %v1384
        %v1386 = vpop.f32.mrf.mxu0
        %v1387 = vadd.f32 0.0, %v1386
        %1388 = vmatprep.mubr.f32.mxu0 0.0
        %1389 = vmatmul.mubr.f32.gmra.mxu0 %v1309
        %v1390 = vpop.f32.mrf.mxu0
        %v1391 = vadd.f32 0.0, %v1390
        %v1392 = vpop.f32.mrf.mxu0
        %v1393 = vadd.f32 0.0, %v1392
        %1394 = vdwg.mxu0
        %v1395 = vld [vmem:[%s4] sm:$0xff]
        %v1396 = vld [vmem:[%s4 + $0x8] sm:$0x3f]
        %v1398 = vsel %vm1304, %v1395, 0
        %v1401 = vsel %vm1304, %v1396, 0
        %1403 = vmatprep.subr.mxu0 0.0
        %1404 = vmatpush1.msra.mxu0 0.0
        %1405 = vmatprep.subr.mxu0 0.0
        %1406 = vmatpush1.msra.mxu0 0.0
        %1407 = vmatprep.subr.mxu0 0.0
        %1408 = vmatpush1.msra.mxu0 0.0
        %1409 = vmatprep.subr.mxu0 0.0
        %1410 = vmatpush1.msra.mxu0 0.0
        %1411 = vmatprep.subr.mxu0 0.0
        %1412 = vmatpush1.msra.mxu0 0.0
        %1413 = vmatprep.subr.mxu0 0.0
        %1414 = vmatpush1.msra.mxu0 0.0
        %1415 = vmatprep.subr.mxu0 0.0
        %1416 = vmatpush1.msra.mxu0 0.0
        %1417 = vmatprep.subr.mxu0 0.0
        %1418 = vmatpush1.msra.mxu0 0.0
        %1419 = vmatprep.subr.mxu0 0.0
        %1420 = vmatpush1.msra.mxu0 0.0
        %1421 = vmatprep.subr.mxu0 0.0
        %1422 = vmatpush1.msra.mxu0 0.0
        %1423 = vmatprep.subr.mxu0 0.0
        %1424 = vmatpush1.msra.mxu0 0.0
        %1425 = vmatprep.subr.mxu0 0.0
        %1426 = vmatpush1.msra.mxu0 0.0
        %1427 = vmatprep.subr.mxu0 %v1316
        %1428 = vmatpush1.msra.mxu0 %v1313
        %1429 = vmatprep.subr.mxu0 %v1299
        %1430 = vmatpush1.msra.mxu0 %v1298
        %1431 = vmatprep.subr.mxu0 %v1297
        %1432 = vmatpush1.msra.mxu0 %v1296
        %1433 = vmatprep.subr.mxu0 %v1295
        %1434 = vmatpush1.msra.mxu0 %v1294
        %1435 = vmatprep.subr.mxu0 0.0
        %1436 = vmatpush2.msra.mxu0 0.0
        %1437 = vmatprep.subr.mxu0 0.0
        %1438 = vmatpush2.msra.mxu0 0.0
        %1439 = vmatprep.subr.mxu0 0.0
        %1440 = vmatpush2.msra.mxu0 0.0
        %1441 = vmatprep.subr.mxu0 0.0
        %1442 = vmatpush2.msra.mxu0 0.0
        %1443 = vmatprep.subr.mxu0 0.0
        %1444 = vmatpush2.msra.mxu0 0.0
        %1445 = vmatprep.subr.mxu0 0.0
        %1446 = vmatpush2.msra.mxu0 0.0
        %1447 = vmatprep.subr.mxu0 0.0
        %1448 = vmatpush2.msra.mxu0 0.0
        %1449 = vmatprep.subr.mxu0 0.0
        %1450 = vmatpush2.msra.mxu0 0.0
        %1451 = vmatprep.subr.mxu0 0.0
        %1452 = vmatpush2.msra.mxu0 0.0
        %1453 = vmatprep.subr.mxu0 0.0
        %1454 = vmatpush2.msra.mxu0 0.0
        %1455 = vmatprep.subr.mxu0 0.0
        %1456 = vmatpush2.msra.mxu0 0.0
        %1457 = vmatprep.subr.mxu0 0.0
        %1458 = vmatpush2.msra.mxu0 0.0
        %1459 = vmatprep.subr.mxu0 0.0
        %1460 = vmatpush2.msra.mxu0 0.0
        %1461 = vmatprep.subr.mxu0 0.0
        %1462 = vmatpush2.msra.mxu0 0.0
        %1463 = vmatprep.subr.mxu0 0.0
        %1464 = vmatpush2.msra.mxu0 0.0
        %1465 = vmatprep.subr.mxu0 0.0
        %1466 = vmatpush2.msra.mxu0 0.0
        %1467 = vmatprep.mubr.f32.mxu0 0.0
        %1468 = vmatmul.mubr.f32.gmra.mxu0 %v1398
        %v1469 = vpop.f32.mrf.mxu0
        %v1470 = vadd.f32 0.0, %v1469
        %v1471 = vpop.f32.mrf.mxu0
        %v1472 = vadd.f32 0.0, %v1471
        %1473 = vmatprep.mubr.f32.mxu0 0.0
        %1474 = vmatmul.mubr.f32.gmra.mxu0 %v1401
        %v1475 = vpop.f32.mrf.mxu0
        %v1476 = vadd.f32 0.0, %v1475
        %v1477 = vpop.f32.mrf.mxu0
        %v1478 = vadd.f32 0.0, %v1477
        %1479 = vdwg.mxu0
        %v1480 = vmax.f32 %v1385, %v1470
        %v1481 = vmax.f32 %v1387, %v1472
        %v1482 = vmax.f32 %v1391, %v1476
        %v1483 = vmax.f32 %v1393, %v1478
        %v1484 = vld [vmem:[%s5] sm:$0xff]
        %v1485 = vld [vmem:[%s5 + $0x8] sm:$0xff]
        %v1486 = vld [vmem:[%s5 + $0x10] sm:$0xff]
        %v1487 = vld [vmem:[%s5 + $0x18] sm:$0xff]
        %v1488 = vld [vmem:[%s5 + $0x20] sm:$0xff]
        %v1489 = vld [vmem:[%s5 + $0x28] sm:$0xff]
        %v1490 = vld [vmem:[%s5 + $0x30] sm:$0xff]
        %v1491 = vld [vmem:[%s5 + $0x38] sm:$0xff]
        %v1492 = vld [vmem:[%s5 + $0x40] sm:$0xff]
        %v1493 = vld [vmem:[%s5 + $0x48] sm:$0xff]
        %v1494 = vld [vmem:[%s5 + $0x50] sm:$0xff]
        %v1495 = vld [vmem:[%s5 + $0x58] sm:$0xff]
        %v1496 = vld [vmem:[%s5 + $0x60] sm:$0xff]
        %v1497 = vld [vmem:[%s5 + $0x68] sm:$0xff]
        %v1498 = vld [vmem:[%s5 + $0x70] sm:$0xff]
        %v1499 = vld [vmem:[%s5 + $0x78] sm:$0xff]
        %v1500 = vld [vmem:[%s5 + $0x80] sm:$0xff]
        %v1501 = vld [vmem:[%s5 + $0x88] sm:$0xff]
        %v1502 = vld [vmem:[%s5 + $0x90] sm:$0xff]
        %v1503 = vld [vmem:[%s5 + $0x98] sm:$0xff]
        %v1504 = vld [vmem:[%s5 + $0xa0] sm:$0xff]
        %vm1505 = vcmask 326656
        %v1507 = vsel %vm1505, %v1481, 0
        %v1510 = vsel %vm1505, %v1483, 0
        %1512 = vmatprep.subr.mxu0 0.0
        %1513 = vmatpush1.msra.mxu0 %v1499
        %1514 = vmatprep.subr.mxu0 0.0
        %1515 = vmatpush1.msra.mxu0 %v1498
        %1516 = vmatprep.subr.mxu0 0.0
        %1517 = vmatpush1.msra.mxu0 %v1497
        %1518 = vmatprep.subr.mxu0 0.0
        %1519 = vmatpush1.msra.mxu0 %v1496
        %1520 = vmatprep.subr.mxu0 0.0
        %1521 = vmatpush1.msra.mxu0 %v1495
        %1522 = vmatprep.subr.mxu0 0.0
        %1523 = vmatpush1.msra.mxu0 %v1494
        %1524 = vmatprep.subr.mxu0 0.0
        %1525 = vmatpush1.msra.mxu0 %v1493
        %1526 = vmatprep.subr.mxu0 0.0
        %1527 = vmatpush1.msra.mxu0 %v1492
        %1528 = vmatprep.subr.mxu0 0.0
        %1529 = vmatpush1.msra.mxu0 %v1491
        %1530 = vmatprep.subr.mxu0 0.0
        %1531 = vmatpush1.msra.mxu0 %v1490
        %1532 = vmatprep.subr.mxu0 0.0
        %1533 = vmatpush1.msra.mxu0 %v1489
        %1534 = vmatprep.subr.mxu0 0.0
        %1535 = vmatpush1.msra.mxu0 %v1488
        %1536 = vmatprep.subr.mxu0 0.0
        %1537 = vmatpush1.msra.mxu0 %v1487
        %1538 = vmatprep.subr.mxu0 0.0
        %1539 = vmatpush1.msra.mxu0 %v1486
        %1540 = vmatprep.subr.mxu0 0.0
        %1541 = vmatpush1.msra.mxu0 %v1485
        %1542 = vmatprep.subr.mxu0 0.0
        %1543 = vmatpush1.msra.mxu0 %v1484
        %1544 = vmatprep.subr.mxu0 0.0
        %1545 = vmatpush2.msra.mxu0 0.0
        %1546 = vmatprep.subr.mxu0 0.0
        %1547 = vmatpush2.msra.mxu0 0.0
        %1548 = vmatprep.subr.mxu0 0.0
        %1549 = vmatpush2.msra.mxu0 0.0
        %1550 = vmatprep.subr.mxu0 0.0
        %1551 = vmatpush2.msra.mxu0 0.0
        %1552 = vmatprep.subr.mxu0 0.0
        %1553 = vmatpush2.msra.mxu0 0.0
        %1554 = vmatprep.subr.mxu0 0.0
        %1555 = vmatpush2.msra.mxu0 0.0
        %1556 = vmatprep.subr.mxu0 0.0
        %1557 = vmatpush2.msra.mxu0 0.0
        %1558 = vmatprep.subr.mxu0 0.0
        %1559 = vmatpush2.msra.mxu0 0.0
        %1560 = vmatprep.subr.mxu0 0.0
        %1561 = vmatpush2.msra.mxu0 0.0
        %1562 = vmatprep.subr.mxu0 0.0
        %1563 = vmatpush2.msra.mxu0 0.0
        %1564 = vmatprep.subr.mxu0 0.0
        %1565 = vmatpush2.msra.mxu0 0.0
        %1566 = vmatprep.subr.mxu0 0.0
        %1567 = vmatpush2.msra.mxu0 %v1504
        %1568 = vmatprep.subr.mxu0 0.0
        %1569 = vmatpush2.msra.mxu0 %v1503
        %1570 = vmatprep.subr.mxu0 0.0
        %1571 = vmatpush2.msra.mxu0 %v1502
        %1572 = vmatprep.subr.mxu0 0.0
        %1573 = vmatpush2.msra.mxu0 %v1501
        %1574 = vmatprep.subr.mxu0 0.0
        %1575 = vmatpush2.msra.mxu0 %v1500
        %1576 = vmatprep.mubr.f32.mxu0 %v1507
        %1577 = vmatmul.mubr.f32.gmra.mxu0 %v1480
        %v1578 = vpop.f32.mrf.mxu0
        %v1579 = vadd.f32 0.0, %v1578
        %v1580 = vpop.f32.mrf.mxu0
        %1581 = vmatprep.mubr.f32.mxu0 %v1510
        %1582 = vmatmul.mubr.f32.gmra.mxu0 %v1482
        %v1583 = vpop.f32.mrf.mxu0
        %v1584 = vadd.f32 0.0, %v1583
        %v1585 = vpop.f32.mrf.mxu0
        %1586 = vdwg.mxu0
        %v1587 = vld [vmem:[%s6] sm:$0xff]
        %v1588 = vld [vmem:[%s6 + $0x8] sm:$0xff]
        %v1589 = vld [vmem:[%s6 + $0x10] sm:$0xff]
        %v1590 = vld [vmem:[%s6 + $0x18] sm:$0xff]
        %v1591 = vld [vmem:[%s6 + $0x20] sm:$0xff]
        %v1592 = vld [vmem:[%s6 + $0x28] sm:$0xff]
        %v1593 = vld [vmem:[%s6 + $0x30] sm:$0xff]
        %v1594 = vld [vmem:[%s6 + $0x38] sm:$0xff]
        %v1595 = vld [vmem:[%s6 + $0x40] sm:$0xff]
        %v1596 = vld [vmem:[%s6 + $0x48] sm:$0xff]
        %v1597 = vld [vmem:[%s6 + $0x50] sm:$0xff]
        %v1598 = vld [vmem:[%s6 + $0x58] sm:$0xff]
        %v1599 = vld [vmem:[%s6 + $0x60] sm:$0xff]
        %v1600 = vld [vmem:[%s6 + $0x68] sm:$0xff]
        %v1601 = vld [vmem:[%s6 + $0x70] sm:$0xff]
        %v1602 = vld [vmem:[%s6 + $0x78] sm:$0xff]
        %v1603 = vld [vmem:[%s6 + $0x80] sm:$0xff]
        %v1604 = vld [vmem:[%s6 + $0x88] sm:$0xff]
        %v1605 = vld [vmem:[%s6 + $0x90] sm:$0xff]
        %v1606 = vld [vmem:[%s6 + $0x98] sm:$0xff]
        %v1607 = vld [vmem:[%s6 + $0xa0] sm:$0xff]
        %1608 = vmatprep.subr.mxu0 0.0
        %1609 = vmatpush1.msra.mxu0 %v1602
        %1610 = vmatprep.subr.mxu0 0.0
        %1611 = vmatpush1.msra.mxu0 %v1601
        %1612 = vmatprep.subr.mxu0 0.0
        %1613 = vmatpush1.msra.mxu0 %v1600
        %1614 = vmatprep.subr.mxu0 0.0
        %1615 = vmatpush1.msra.mxu0 %v1599
        %1616 = vmatprep.subr.mxu0 0.0
        %1617 = vmatpush1.msra.mxu0 %v1598
        %1618 = vmatprep.subr.mxu0 0.0
        %1619 = vmatpush1.msra.mxu0 %v1597
        %1620 = vmatprep.subr.mxu0 0.0
        %1621 = vmatpush1.msra.mxu0 %v1596
        %1622 = vmatprep.subr.mxu0 0.0
        %1623 = vmatpush1.msra.mxu0 %v1595
        %1624 = vmatprep.subr.mxu0 0.0
        %1625 = vmatpush1.msra.mxu0 %v1594
        %1626 = vmatprep.subr.mxu0 0.0
        %1627 = vmatpush1.msra.mxu0 %v1593
        %1628 = vmatprep.subr.mxu0 0.0
        %1629 = vmatpush1.msra.mxu0 %v1592
        %1630 = vmatprep.subr.mxu0 0.0
        %1631 = vmatpush1.msra.mxu0 %v1591
        %1632 = vmatprep.subr.mxu0 0.0
        %1633 = vmatpush1.msra.mxu0 %v1590
        %1634 = vmatprep.subr.mxu0 0.0
        %1635 = vmatpush1.msra.mxu0 %v1589
        %1636 = vmatprep.subr.mxu0 0.0
        %1637 = vmatpush1.msra.mxu0 %v1588
        %1638 = vmatprep.subr.mxu0 0.0
        %1639 = vmatpush1.msra.mxu0 %v1587
        %1640 = vmatprep.subr.mxu0 0.0
        %1641 = vmatpush2.msra.mxu0 0.0
        %1642 = vmatprep.subr.mxu0 0.0
        %1643 = vmatpush2.msra.mxu0 0.0
        %1644 = vmatprep.subr.mxu0 0.0
        %1645 = vmatpush2.msra.mxu0 0.0
        %1646 = vmatprep.subr.mxu0 0.0
        %1647 = vmatpush2.msra.mxu0 0.0
        %1648 = vmatprep.subr.mxu0 0.0
        %1649 = vmatpush2.msra.mxu0 0.0
        %1650 = vmatprep.subr.mxu0 0.0
        %1651 = vmatpush2.msra.mxu0 0.0
        %1652 = vmatprep.subr.mxu0 0.0
        %1653 = vmatpush2.msra.mxu0 0.0
        %1654 = vmatprep.subr.mxu0 0.0
        %1655 = vmatpush2.msra.mxu0 0.0
        %1656 = vmatprep.subr.mxu0 0.0
        %1657 = vmatpush2.msra.mxu0 0.0
        %1658 = vmatprep.subr.mxu0 0.0
        %1659 = vmatpush2.msra.mxu0 0.0
        %1660 = vmatprep.subr.mxu0 0.0
        %1661 = vmatpush2.msra.mxu0 0.0
        %1662 = vmatprep.subr.mxu0 0.0
        %1663 = vmatpush2.msra.mxu0 %v1607
        %1664 = vmatprep.subr.mxu0 0.0
        %1665 = vmatpush2.msra.mxu0 %v1606
        %1666 = vmatprep.subr.mxu0 0.0
        %1667 = vmatpush2.msra.mxu0 %v1605
        %1668 = vmatprep.subr.mxu0 0.0
        %1669 = vmatpush2.msra.mxu0 %v1604
        %1670 = vmatprep.subr.mxu0 0.0
        %1671 = vmatpush2.msra.mxu0 %v1603
        %1672 = vmatprep.mubr.f32.mxu0 %v1507
        %1673 = vmatmul.mubr.f32.gmra.mxu0 %v1480
        %v1674 = vpop.f32.mrf.mxu0
        %v1675 = vadd.f32 0.0, %v1674
        %v1676 = vpop.f32.mrf.mxu0
        %1677 = vmatprep.mubr.f32.mxu0 %v1510
        %1678 = vmatmul.mubr.f32.gmra.mxu0 %v1482
        %v1679 = vpop.f32.mrf.mxu0
        %v1680 = vadd.f32 0.0, %v1679
        %v1681 = vpop.f32.mrf.mxu0
        %1682 = vdwg.mxu0
        %v1683 = vmax.f32 %v1579, %v1675
        %v1684 = vmax.f32 %v1584, %v1680
        %vm1685 = vcmask 687104
        %1686 = vst.msk [vmem:[#allocation2] sm:$0xff] %vm1685, %v1683
        %vm1687 = vcmask 685056
        %1688 = vst.msk [vmem:[#allocation2 + $0x8] sm:$0x3f] %vm1687, %v1684
        %v1689 = vld [vmem:[#allocation2] sm:$0xff]
        %v1690 = vld [vmem:[#allocation2 + $0x8] sm:$0x3]
        %v1691 = vld [vmem:[%s7] sm:$0xff]
        %v1692 = vld [vmem:[%s7 + $0x8] sm:$0xff]
        %v1693 = vld [vmem:[%s7 + $0x10] sm:$0xff]
        %v1694 = vld [vmem:[%s7 + $0x18] sm:$0xff]
        %v1695 = vld [vmem:[%s7 + $0x20] sm:$0xff]
        %v1696 = vld [vmem:[%s7 + $0x28] sm:$0xff]
        %v1697 = vld [vmem:[%s7 + $0x30] sm:$0xff]
        %v1698 = vld [vmem:[%s7 + $0x38] sm:$0xff]
        %v1699 = vld [vmem:[%s7 + $0x40] sm:$0xff]
        %v1700 = vld [vmem:[%s7 + $0x48] sm:$0xff]
        %v1701 = vld [vmem:[%s7 + $0x50] sm:$0xff]
        %v1702 = vld [vmem:[%s7 + $0x58] sm:$0xff]
        %v1703 = vld [vmem:[%s7 + $0x60] sm:$0xff]
        %v1704 = vld [vmem:[%s7 + $0x68] sm:$0xff]
        %v1705 = vld [vmem:[%s7 + $0x70] sm:$0xff]
        %v1706 = vld [vmem:[%s7 + $0x78] sm:$0xff]
        %v1707 = vld [vmem:[%s7 + $0x80] sm:$0xff]
        %v1708 = vld [vmem:[%s7 + $0x88] sm:$0xff]
        %v1709 = vld [vmem:[%s7 + $0x90] sm:$0xff]
        %v1710 = vld [vmem:[%s7 + $0x98] sm:$0xff]
        %v1711 = vld [vmem:[%s7 + $0xa0] sm:$0xf]
        %v1712 = vld [vmem:[%s7 + $0xa8] sm:$0xf]
        %v1713 = vld [vmem:[#allocation2 + $0x1] sm:$0xff]
        %v1714 = vld [vmem:[#allocation2 + $0x9] sm:$0x3]
        %s1715 = scalar_lea.vmem %s7, 176
        %v1716 = vld [vmem:[%s1715] sm:$0xff]
        %v1717 = vld [vmem:[%s1715 + $0x8] sm:$0xff]
        %v1718 = vld [vmem:[%s1715 + $0x10] sm:$0xff]
        %v1719 = vld [vmem:[%s1715 + $0x18] sm:$0xff]
        %v1720 = vld [vmem:[%s1715 + $0x20] sm:$0xff]
        %v1721 = vld [vmem:[%s1715 + $0x28] sm:$0xff]
        %v1722 = vld [vmem:[%s1715 + $0x30] sm:$0xff]
        %v1723 = vld [vmem:[%s1715 + $0x38] sm:$0xff]
        %v1724 = vld [vmem:[%s1715 + $0x40] sm:$0xff]
        %v1725 = vld [vmem:[%s1715 + $0x48] sm:$0xff]
        %v1726 = vld [vmem:[%s1715 + $0x50] sm:$0xff]
        %v1727 = vld [vmem:[%s1715 + $0x58] sm:$0xff]
        %v1728 = vld [vmem:[%s1715 + $0x60] sm:$0xff]
        %v1729 = vld [vmem:[%s1715 + $0x68] sm:$0xff]
        %v1730 = vld [vmem:[%s1715 + $0x70] sm:$0xff]
        %v1731 = vld [vmem:[%s1715 + $0x78] sm:$0xff]
        %v1732 = vld [vmem:[%s1715 + $0x80] sm:$0xff]
        %v1733 = vld [vmem:[%s1715 + $0x88] sm:$0xff]
        %v1734 = vld [vmem:[%s1715 + $0x90] sm:$0xff]
        %v1735 = vld [vmem:[%s1715 + $0x98] sm:$0xff]
        %v1736 = vld [vmem:[%s1715 + $0xa0] sm:$0xf]
        %v1737 = vld [vmem:[%s1715 + $0xa8] sm:$0xf]
        %v1739 = vsel %vm1685, %v1713, 0
        %v1742 = vsel %vm1685, %v1714, 0
        %v1745 = vsel %vm1311, %v1736, 0
        %v1748 = vsel %vm1311, %v1737, 0
        %1750 = vmatprep.subr.mxu0 0.0
        %1751 = vmatpush1.msra.mxu0 0.0
        %1752 = vmatprep.subr.mxu0 0.0
        %1753 = vmatpush1.msra.mxu0 0.0
        %1754 = vmatprep.subr.mxu0 0.0
        %1755 = vmatpush1.msra.mxu0 0.0
        %1756 = vmatprep.subr.mxu0 0.0
        %1757 = vmatpush1.msra.mxu0 0.0
        %1758 = vmatprep.subr.mxu0 0.0
        %1759 = vmatpush1.msra.mxu0 0.0
        %1760 = vmatprep.subr.mxu0 %v1748
        %1761 = vmatpush1.msra.mxu0 %v1745
        %1762 = vmatprep.subr.mxu0 %v1735
        %1763 = vmatpush1.msra.mxu0 %v1734
        %1764 = vmatprep.subr.mxu0 %v1733
        %1765 = vmatpush1.msra.mxu0 %v1732
        %1766 = vmatprep.subr.mxu0 %v1731
        %1767 = vmatpush1.msra.mxu0 %v1730
        %1768 = vmatprep.subr.mxu0 %v1729
        %1769 = vmatpush1.msra.mxu0 %v1728
        %1770 = vmatprep.subr.mxu0 %v1727
        %1771 = vmatpush1.msra.mxu0 %v1726
        %1772 = vmatprep.subr.mxu0 %v1725
        %1773 = vmatpush1.msra.mxu0 %v1724
        %1774 = vmatprep.subr.mxu0 %v1723
        %1775 = vmatpush1.msra.mxu0 %v1722
        %1776 = vmatprep.subr.mxu0 %v1721
        %1777 = vmatpush1.msra.mxu0 %v1720
        %1778 = vmatprep.subr.mxu0 %v1719
        %1779 = vmatpush1.msra.mxu0 %v1718
        %1780 = vmatprep.subr.mxu0 %v1717
        %1781 = vmatpush1.msra.mxu0 %v1716
        %1782 = vmatprep.subr.mxu0 0.0
        %1783 = vmatpush2.msra.mxu0 0.0
        %1784 = vmatprep.subr.mxu0 0.0
        %1785 = vmatpush2.msra.mxu0 0.0
        %1786 = vmatprep.subr.mxu0 0.0
        %1787 = vmatpush2.msra.mxu0 0.0
        %1788 = vmatprep.subr.mxu0 0.0
        %1789 = vmatpush2.msra.mxu0 0.0
        %1790 = vmatprep.subr.mxu0 0.0
        %1791 = vmatpush2.msra.mxu0 0.0
        %1792 = vmatprep.subr.mxu0 0.0
        %1793 = vmatpush2.msra.mxu0 0.0
        %1794 = vmatprep.subr.mxu0 0.0
        %1795 = vmatpush2.msra.mxu0 0.0
        %1796 = vmatprep.subr.mxu0 0.0
        %1797 = vmatpush2.msra.mxu0 0.0
        %1798 = vmatprep.subr.mxu0 0.0
        %1799 = vmatpush2.msra.mxu0 0.0
        %1800 = vmatprep.subr.mxu0 0.0
        %1801 = vmatpush2.msra.mxu0 0.0
        %1802 = vmatprep.subr.mxu0 0.0
        %1803 = vmatpush2.msra.mxu0 0.0
        %1804 = vmatprep.subr.mxu0 0.0
        %1805 = vmatpush2.msra.mxu0 0.0
        %1806 = vmatprep.subr.mxu0 0.0
        %1807 = vmatpush2.msra.mxu0 0.0
        %1808 = vmatprep.subr.mxu0 0.0
        %1809 = vmatpush2.msra.mxu0 0.0
        %1810 = vmatprep.subr.mxu0 0.0
        %1811 = vmatpush2.msra.mxu0 0.0
        %1812 = vmatprep.subr.mxu0 0.0
        %1813 = vmatpush2.msra.mxu0 0.0
        %1814 = vmatprep.mubr.f32.mxu0 0.0
        %1815 = vmatmul.mubr.f32.gmra.mxu0 %v1739
        %v1816 = vpop.f32.mrf.mxu0
        %v1817 = vadd.f32 0.0, %v1816
        %v1818 = vpop.f32.mrf.mxu0
        %v1819 = vadd.f32 0.0, %v1818
        %1820 = vmatprep.mubr.f32.mxu0 0.0
        %1821 = vmatmul.mubr.f32.gmra.mxu0 %v1742
        %v1822 = vpop.f32.mrf.mxu0
        %v1823 = vadd.f32 0.0, %v1822
        %v1824 = vpop.f32.mrf.mxu0
        %v1825 = vadd.f32 0.0, %v1824
        %1826 = vdwg.mxu0
        %v1828 = vsel %vm1685, %v1689, 0
        %v1831 = vsel %vm1685, %v1690, 0
        %v1834 = vsel %vm1311, %v1711, 0
        %v1837 = vsel %vm1311, %v1712, 0
        %1839 = vmatprep.subr.mxu0 0.0
        %1840 = vmatpush1.msra.mxu0 0.0
        %1841 = vmatprep.subr.mxu0 0.0
        %1842 = vmatpush1.msra.mxu0 0.0
        %1843 = vmatprep.subr.mxu0 0.0
        %1844 = vmatpush1.msra.mxu0 0.0
        %1845 = vmatprep.subr.mxu0 0.0
        %1846 = vmatpush1.msra.mxu0 0.0
        %1847 = vmatprep.subr.mxu0 0.0
        %1848 = vmatpush1.msra.mxu0 0.0
        %1849 = vmatprep.subr.mxu0 %v1837
        %1850 = vmatpush1.msra.mxu0 %v1834
        %1851 = vmatprep.subr.mxu0 %v1710
        %1852 = vmatpush1.msra.mxu0 %v1709
        %1853 = vmatprep.subr.mxu0 %v1708
        %1854 = vmatpush1.msra.mxu0 %v1707
        %1855 = vmatprep.subr.mxu0 %v1706
        %1856 = vmatpush1.msra.mxu0 %v1705
        %1857 = vmatprep.subr.mxu0 %v1704
        %1858 = vmatpush1.msra.mxu0 %v1703
        %1859 = vmatprep.subr.mxu0 %v1702
        %1860 = vmatpush1.msra.mxu0 %v1701
        %1861 = vmatprep.subr.mxu0 %v1700
        %1862 = vmatpush1.msra.mxu0 %v1699
        %1863 = vmatprep.subr.mxu0 %v1698
        %1864 = vmatpush1.msra.mxu0 %v1697
        %1865 = vmatprep.subr.mxu0 %v1696
        %1866 = vmatpush1.msra.mxu0 %v1695
        %1867 = vmatprep.subr.mxu0 %v1694
        %1868 = vmatpush1.msra.mxu0 %v1693
        %1869 = vmatprep.subr.mxu0 %v1692
        %1870 = vmatpush1.msra.mxu0 %v1691
        %1871 = vmatprep.subr.mxu0 0.0
        %1872 = vmatpush2.msra.mxu0 0.0
        %1873 = vmatprep.subr.mxu0 0.0
        %1874 = vmatpush2.msra.mxu0 0.0
        %1875 = vmatprep.subr.mxu0 0.0
        %1876 = vmatpush2.msra.mxu0 0.0
        %1877 = vmatprep.subr.mxu0 0.0
        %1878 = vmatpush2.msra.mxu0 0.0
        %1879 = vmatprep.subr.mxu0 0.0
        %1880 = vmatpush2.msra.mxu0 0.0
        %1881 = vmatprep.subr.mxu0 0.0
        %1882 = vmatpush2.msra.mxu0 0.0
        %1883 = vmatprep.subr.mxu0 0.0
        %1884 = vmatpush2.msra.mxu0 0.0
        %1885 = vmatprep.subr.mxu0 0.0
        %1886 = vmatpush2.msra.mxu0 0.0
        %1887 = vmatprep.subr.mxu0 0.0
        %1888 = vmatpush2.msra.mxu0 0.0
        %1889 = vmatprep.subr.mxu0 0.0
        %1890 = vmatpush2.msra.mxu0 0.0
        %1891 = vmatprep.subr.mxu0 0.0
        %1892 = vmatpush2.msra.mxu0 0.0
        %1893 = vmatprep.subr.mxu0 0.0
        %1894 = vmatpush2.msra.mxu0 0.0
        %1895 = vmatprep.subr.mxu0 0.0
        %1896 = vmatpush2.msra.mxu0 0.0
        %1897 = vmatprep.subr.mxu0 0.0
        %1898 = vmatpush2.msra.mxu0 0.0
        %1899 = vmatprep.subr.mxu0 0.0
        %1900 = vmatpush2.msra.mxu0 0.0
        %1901 = vmatprep.subr.mxu0 0.0
        %1902 = vmatpush2.msra.mxu0 0.0
        %1903 = vmatprep.mubr.f32.mxu0 0.0
        %1904 = vmatmul.mubr.f32.gmra.mxu0 %v1828
        %v1905 = vpop.f32.mrf.mxu0
        %v1906 = vadd.f32 %v1817, %v1905
        %v1907 = vpop.f32.mrf.mxu0
        %v1908 = vadd.f32 %v1819, %v1907
        %1909 = vmatprep.mubr.f32.mxu0 0.0
        %1910 = vmatmul.mubr.f32.gmra.mxu0 %v1831
        %v1911 = vpop.f32.mrf.mxu0
        %v1912 = vadd.f32 %v1823, %v1911
        %v1913 = vpop.f32.mrf.mxu0
        %v1914 = vadd.f32 %v1825, %v1913
        %1915 = vdwg.mxu0
        %v1916 = vld [vmem:[#allocation2 + $0x2] sm:$0xff]
        %v1917 = vld [vmem:[#allocation2 + $0xa] sm:$0x3]
        %s1918 = scalar_lea.vmem %s7, 352
        %v1919 = vld [vmem:[%s1918] sm:$0xff]
        %v1920 = vld [vmem:[%s1918 + $0x8] sm:$0xff]
        %v1921 = vld [vmem:[%s1918 + $0x10] sm:$0xff]
        %v1922 = vld [vmem:[%s1918 + $0x18] sm:$0xff]
        %v1923 = vld [vmem:[%s1918 + $0x20] sm:$0xff]
        %v1924 = vld [vmem:[%s1918 + $0x28] sm:$0xff]
        %v1925 = vld [vmem:[%s1918 + $0x30] sm:$0xff]
        %v1926 = vld [vmem:[%s1918 + $0x38] sm:$0xff]
        %v1927 = vld [vmem:[%s1918 + $0x40] sm:$0xff]
        %v1928 = vld [vmem:[%s1918 + $0x48] sm:$0xff]
        %v1929 = vld [vmem:[%s1918 + $0x50] sm:$0xff]
        %v1930 = vld [vmem:[%s1918 + $0x58] sm:$0xff]
        %v1931 = vld [vmem:[%s1918 + $0x60] sm:$0xff]
        %v1932 = vld [vmem:[%s1918 + $0x68] sm:$0xff]
        %v1933 = vld [vmem:[%s1918 + $0x70] sm:$0xff]
        %v1934 = vld [vmem:[%s1918 + $0x78] sm:$0xff]
        %v1935 = vld [vmem:[%s1918 + $0x80] sm:$0xff]
        %v1936 = vld [vmem:[%s1918 + $0x88] sm:$0xff]
        %v1937 = vld [vmem:[%s1918 + $0x90] sm:$0xff]
        %v1938 = vld [vmem:[%s1918 + $0x98] sm:$0xff]
        %v1939 = vld [vmem:[%s1918 + $0xa0] sm:$0xf]
        %v1940 = vld [vmem:[%s1918 + $0xa8] sm:$0xf]
        %v1942 = vsel %vm1685, %v1916, 0
        %v1945 = vsel %vm1685, %v1917, 0
        %v1948 = vsel %vm1311, %v1939, 0
        %v1951 = vsel %vm1311, %v1940, 0
        %1953 = vmatprep.subr.mxu0 0.0
        %1954 = vmatpush1.msra.mxu0 0.0
        %1955 = vmatprep.subr.mxu0 0.0
        %1956 = vmatpush1.msra.mxu0 0.0
        %1957 = vmatprep.subr.mxu0 0.0
        %1958 = vmatpush1.msra.mxu0 0.0
        %1959 = vmatprep.subr.mxu0 0.0
        %1960 = vmatpush1.msra.mxu0 0.0
        %1961 = vmatprep.subr.mxu0 0.0
        %1962 = vmatpush1.msra.mxu0 0.0
        %1963 = vmatprep.subr.mxu0 %v1951
        %1964 = vmatpush1.msra.mxu0 %v1948
        %1965 = vmatprep.subr.mxu0 %v1938
        %1966 = vmatpush1.msra.mxu0 %v1937
        %1967 = vmatprep.subr.mxu0 %v1936
        %1968 = vmatpush1.msra.mxu0 %v1935
        %1969 = vmatprep.subr.mxu0 %v1934
        %1970 = vmatpush1.msra.mxu0 %v1933
        %1971 = vmatprep.subr.mxu0 %v1932
        %1972 = vmatpush1.msra.mxu0 %v1931
        %1973 = vmatprep.subr.mxu0 %v1930
        %1974 = vmatpush1.msra.mxu0 %v1929
        %1975 = vmatprep.subr.mxu0 %v1928
        %1976 = vmatpush1.msra.mxu0 %v1927
        %1977 = vmatprep.subr.mxu0 %v1926
        %1978 = vmatpush1.msra.mxu0 %v1925
        %1979 = vmatprep.subr.mxu0 %v1924
        %1980 = vmatpush1.msra.mxu0 %v1923
        %1981 = vmatprep.subr.mxu0 %v1922
        %1982 = vmatpush1.msra.mxu0 %v1921
        %1983 = vmatprep.subr.mxu0 %v1920
        %1984 = vmatpush1.msra.mxu0 %v1919
        %1985 = vmatprep.subr.mxu0 0.0
        %1986 = vmatpush2.msra.mxu0 0.0
        %1987 = vmatprep.subr.mxu0 0.0
        %1988 = vmatpush2.msra.mxu0 0.0
        %1989 = vmatprep.subr.mxu0 0.0
        %1990 = vmatpush2.msra.mxu0 0.0
        %1991 = vmatprep.subr.mxu0 0.0
        %1992 = vmatpush2.msra.mxu0 0.0
        %1993 = vmatprep.subr.mxu0 0.0
        %1994 = vmatpush2.msra.mxu0 0.0
        %1995 = vmatprep.subr.mxu0 0.0
        %1996 = vmatpush2.msra.mxu0 0.0
        %1997 = vmatprep.subr.mxu0 0.0
        %1998 = vmatpush2.msra.mxu0 0.0
        %1999 = vmatprep.subr.mxu0 0.0
        %2000 = vmatpush2.msra.mxu0 0.0
        %2001 = vmatprep.subr.mxu0 0.0
        %2002 = vmatpush2.msra.mxu0 0.0
        %2003 = vmatprep.subr.mxu0 0.0
        %2004 = vmatpush2.msra.mxu0 0.0
        %2005 = vmatprep.subr.mxu0 0.0
        %2006 = vmatpush2.msra.mxu0 0.0
        %2007 = vmatprep.subr.mxu0 0.0
        %2008 = vmatpush2.msra.mxu0 0.0
        %2009 = vmatprep.subr.mxu0 0.0
        %2010 = vmatpush2.msra.mxu0 0.0
        %2011 = vmatprep.subr.mxu0 0.0
        %2012 = vmatpush2.msra.mxu0 0.0
        %2013 = vmatprep.subr.mxu0 0.0
        %2014 = vmatpush2.msra.mxu0 0.0
        %2015 = vmatprep.subr.mxu0 0.0
        %2016 = vmatpush2.msra.mxu0 0.0
        %2017 = vmatprep.mubr.f32.mxu0 0.0
        %2018 = vmatmul.mubr.f32.gmra.mxu0 %v1942
        %v2019 = vpop.f32.mrf.mxu0
        %v2020 = vadd.f32 0.0, %v2019
        %v2021 = vpop.f32.mrf.mxu0
        %v2022 = vadd.f32 0.0, %v2021
        %2023 = vmatprep.mubr.f32.mxu0 0.0
        %2024 = vmatmul.mubr.f32.gmra.mxu0 %v1945
        %v2025 = vpop.f32.mrf.mxu0
        %v2026 = vadd.f32 0.0, %v2025
        %v2027 = vpop.f32.mrf.mxu0
        %v2028 = vadd.f32 0.0, %v2027
        %2029 = vdwg.mxu0
        %v2030 = vadd.f32 %v1906, %v2020
        %v2031 = vadd.f32 %v1908, %v2022
        %v2032 = vadd.f32 %v1912, %v2026
        %v2033 = vadd.f32 %v1914, %v2028
        %v2034 = vld [vmem:[#allocation2 + $0x3] sm:$0xff]
        %v2035 = vld [vmem:[#allocation2 + $0xb] sm:$0x3]
        %s2036 = scalar_lea.vmem %s7, 528
        %v2037 = vld [vmem:[%s2036] sm:$0xff]
        %v2038 = vld [vmem:[%s2036 + $0x8] sm:$0xff]
        %v2039 = vld [vmem:[%s2036 + $0x10] sm:$0xff]
        %v2040 = vld [vmem:[%s2036 + $0x18] sm:$0xff]
        %v2041 = vld [vmem:[%s2036 + $0x20] sm:$0xff]
        %v2042 = vld [vmem:[%s2036 + $0x28] sm:$0xff]
        %v2043 = vld [vmem:[%s2036 + $0x30] sm:$0xff]
        %v2044 = vld [vmem:[%s2036 + $0x38] sm:$0xff]
        %v2045 = vld [vmem:[%s2036 + $0x40] sm:$0xff]
        %v2046 = vld [vmem:[%s2036 + $0x48] sm:$0xff]
        %v2047 = vld [vmem:[%s2036 + $0x50] sm:$0xff]
        %v2048 = vld [vmem:[%s2036 + $0x58] sm:$0xff]
        %v2049 = vld [vmem:[%s2036 + $0x60] sm:$0xff]
        %v2050 = vld [vmem:[%s2036 + $0x68] sm:$0xff]
        %v2051 = vld [vmem:[%s2036 + $0x70] sm:$0xff]
        %v2052 = vld [vmem:[%s2036 + $0x78] sm:$0xff]
        %v2053 = vld [vmem:[%s2036 + $0x80] sm:$0xff]
        %v2054 = vld [vmem:[%s2036 + $0x88] sm:$0xff]
        %v2055 = vld [vmem:[%s2036 + $0x90] sm:$0xff]
        %v2056 = vld [vmem:[%s2036 + $0x98] sm:$0xff]
        %v2057 = vld [vmem:[%s2036 + $0xa0] sm:$0xf]
        %v2058 = vld [vmem:[%s2036 + $0xa8] sm:$0xf]
        %v2060 = vsel %vm1685, %v2034, 0
        %v2063 = vsel %vm1685, %v2035, 0
        %v2066 = vsel %vm1311, %v2057, 0
        %v2069 = vsel %vm1311, %v2058, 0
        %2071 = vmatprep.subr.mxu0 0.0
        %2072 = vmatpush1.msra.mxu0 0.0
        %2073 = vmatprep.subr.mxu0 0.0
        %2074 = vmatpush1.msra.mxu0 0.0
        %2075 = vmatprep.subr.mxu0 0.0
        %2076 = vmatpush1.msra.mxu0 0.0
        %2077 = vmatprep.subr.mxu0 0.0
        %2078 = vmatpush1.msra.mxu0 0.0
        %2079 = vmatprep.subr.mxu0 0.0
        %2080 = vmatpush1.msra.mxu0 0.0
        %2081 = vmatprep.subr.mxu0 %v2069
        %2082 = vmatpush1.msra.mxu0 %v2066
        %2083 = vmatprep.subr.mxu0 %v2056
        %2084 = vmatpush1.msra.mxu0 %v2055
        %2085 = vmatprep.subr.mxu0 %v2054
        %2086 = vmatpush1.msra.mxu0 %v2053
        %2087 = vmatprep.subr.mxu0 %v2052
        %2088 = vmatpush1.msra.mxu0 %v2051
        %2089 = vmatprep.subr.mxu0 %v2050
        %2090 = vmatpush1.msra.mxu0 %v2049
        %2091 = vmatprep.subr.mxu0 %v2048
        %2092 = vmatpush1.msra.mxu0 %v2047
        %2093 = vmatprep.subr.mxu0 %v2046
        %2094 = vmatpush1.msra.mxu0 %v2045
        %2095 = vmatprep.subr.mxu0 %v2044
        %2096 = vmatpush1.msra.mxu0 %v2043
        %2097 = vmatprep.subr.mxu0 %v2042
        %2098 = vmatpush1.msra.mxu0 %v2041
        %2099 = vmatprep.subr.mxu0 %v2040
        %2100 = vmatpush1.msra.mxu0 %v2039
        %2101 = vmatprep.subr.mxu0 %v2038
        %2102 = vmatpush1.msra.mxu0 %v2037
        %2103 = vmatprep.subr.mxu0 0.0
        %2104 = vmatpush2.msra.mxu0 0.0
        %2105 = vmatprep.subr.mxu0 0.0
        %2106 = vmatpush2.msra.mxu0 0.0
        %2107 = vmatprep.subr.mxu0 0.0
        %2108 = vmatpush2.msra.mxu0 0.0
        %2109 = vmatprep.subr.mxu0 0.0
        %2110 = vmatpush2.msra.mxu0 0.0
        %2111 = vmatprep.subr.mxu0 0.0
        %2112 = vmatpush2.msra.mxu0 0.0
        %2113 = vmatprep.subr.mxu0 0.0
        %2114 = vmatpush2.msra.mxu0 0.0
        %2115 = vmatprep.subr.mxu0 0.0
        %2116 = vmatpush2.msra.mxu0 0.0
        %2117 = vmatprep.subr.mxu0 0.0
        %2118 = vmatpush2.msra.mxu0 0.0
        %2119 = vmatprep.subr.mxu0 0.0
        %2120 = vmatpush2.msra.mxu0 0.0
        %2121 = vmatprep.subr.mxu0 0.0
        %2122 = vmatpush2.msra.mxu0 0.0
        %2123 = vmatprep.subr.mxu0 0.0
        %2124 = vmatpush2.msra.mxu0 0.0
        %2125 = vmatprep.subr.mxu0 0.0
        %2126 = vmatpush2.msra.mxu0 0.0
        %2127 = vmatprep.subr.mxu0 0.0
        %2128 = vmatpush2.msra.mxu0 0.0
        %2129 = vmatprep.subr.mxu0 0.0
        %2130 = vmatpush2.msra.mxu0 0.0
        %2131 = vmatprep.subr.mxu0 0.0
        %2132 = vmatpush2.msra.mxu0 0.0
        %2133 = vmatprep.subr.mxu0 0.0
        %2134 = vmatpush2.msra.mxu0 0.0
        %2135 = vmatprep.mubr.f32.mxu0 0.0
        %2136 = vmatmul.mubr.f32.gmra.mxu0 %v2060
        %v2137 = vpop.f32.mrf.mxu0
        %v2138 = vadd.f32 0.0, %v2137
        %v2139 = vpop.f32.mrf.mxu0
        %v2140 = vadd.f32 0.0, %v2139
        %2141 = vmatprep.mubr.f32.mxu0 0.0
        %2142 = vmatmul.mubr.f32.gmra.mxu0 %v2063
        %v2143 = vpop.f32.mrf.mxu0
        %v2144 = vadd.f32 0.0, %v2143
        %v2145 = vpop.f32.mrf.mxu0
        %v2146 = vadd.f32 0.0, %v2145
        %2147 = vdwg.mxu0
        %v2148 = vadd.f32 %v2030, %v2138
        %v2149 = vadd.f32 %v2031, %v2140
        %v2150 = vadd.f32 %v2032, %v2144
        %v2151 = vadd.f32 %v2033, %v2146
        %v2152 = vld [vmem:[#allocation2 + $0x4] sm:$0xff]
        %v2153 = vld [vmem:[#allocation2 + $0xc] sm:$0x3]
        %s2154 = scalar_lea.vmem %s7, 704
        %v2155 = vld [vmem:[%s2154] sm:$0xff]
        %v2156 = vld [vmem:[%s2154 + $0x8] sm:$0xff]
        %v2157 = vld [vmem:[%s2154 + $0x10] sm:$0xff]
        %v2158 = vld [vmem:[%s2154 + $0x18] sm:$0xff]
        %v2159 = vld [vmem:[%s2154 + $0x20] sm:$0xff]
        %v2160 = vld [vmem:[%s2154 + $0x28] sm:$0xff]
        %v2161 = vld [vmem:[%s2154 + $0x30] sm:$0xff]
        %v2162 = vld [vmem:[%s2154 + $0x38] sm:$0xff]
        %v2163 = vld [vmem:[%s2154 + $0x40] sm:$0xff]
        %v2164 = vld [vmem:[%s2154 + $0x48] sm:$0xff]
        %v2165 = vld [vmem:[%s2154 + $0x50] sm:$0xff]
        %v2166 = vld [vmem:[%s2154 + $0x58] sm:$0xff]
        %v2167 = vld [vmem:[%s2154 + $0x60] sm:$0xff]
        %v2168 = vld [vmem:[%s2154 + $0x68] sm:$0xff]
        %v2169 = vld [vmem:[%s2154 + $0x70] sm:$0xff]
        %v2170 = vld [vmem:[%s2154 + $0x78] sm:$0xff]
        %v2171 = vld [vmem:[%s2154 + $0x80] sm:$0xff]
        %v2172 = vld [vmem:[%s2154 + $0x88] sm:$0xff]
        %v2173 = vld [vmem:[%s2154 + $0x90] sm:$0xff]
        %v2174 = vld [vmem:[%s2154 + $0x98] sm:$0xff]
        %v2175 = vld [vmem:[%s2154 + $0xa0] sm:$0xf]
        %v2176 = vld [vmem:[%s2154 + $0xa8] sm:$0xf]
        %v2178 = vsel %vm1685, %v2152, 0
        %v2181 = vsel %vm1685, %v2153, 0
        %v2184 = vsel %vm1311, %v2175, 0
        %v2187 = vsel %vm1311, %v2176, 0
        %2189 = vmatprep.subr.mxu0 0.0
        %2190 = vmatpush1.msra.mxu0 0.0
        %2191 = vmatprep.subr.mxu0 0.0
        %2192 = vmatpush1.msra.mxu0 0.0
        %2193 = vmatprep.subr.mxu0 0.0
        %2194 = vmatpush1.msra.mxu0 0.0
        %2195 = vmatprep.subr.mxu0 0.0
        %2196 = vmatpush1.msra.mxu0 0.0
        %2197 = vmatprep.subr.mxu0 0.0
        %2198 = vmatpush1.msra.mxu0 0.0
        %2199 = vmatprep.subr.mxu0 %v2187
        %2200 = vmatpush1.msra.mxu0 %v2184
        %2201 = vmatprep.subr.mxu0 %v2174
        %2202 = vmatpush1.msra.mxu0 %v2173
        %2203 = vmatprep.subr.mxu0 %v2172
        %2204 = vmatpush1.msra.mxu0 %v2171
        %2205 = vmatprep.subr.mxu0 %v2170
        %2206 = vmatpush1.msra.mxu0 %v2169
        %2207 = vmatprep.subr.mxu0 %v2168
        %2208 = vmatpush1.msra.mxu0 %v2167
        %2209 = vmatprep.subr.mxu0 %v2166
        %2210 = vmatpush1.msra.mxu0 %v2165
        %2211 = vmatprep.subr.mxu0 %v2164
        %2212 = vmatpush1.msra.mxu0 %v2163
        %2213 = vmatprep.subr.mxu0 %v2162
        %2214 = vmatpush1.msra.mxu0 %v2161
        %2215 = vmatprep.subr.mxu0 %v2160
        %2216 = vmatpush1.msra.mxu0 %v2159
        %2217 = vmatprep.subr.mxu0 %v2158
        %2218 = vmatpush1.msra.mxu0 %v2157
        %2219 = vmatprep.subr.mxu0 %v2156
        %2220 = vmatpush1.msra.mxu0 %v2155
        %2221 = vmatprep.subr.mxu0 0.0
        %2222 = vmatpush2.msra.mxu0 0.0
        %2223 = vmatprep.subr.mxu0 0.0
        %2224 = vmatpush2.msra.mxu0 0.0
        %2225 = vmatprep.subr.mxu0 0.0
        %2226 = vmatpush2.msra.mxu0 0.0
        %2227 = vmatprep.subr.mxu0 0.0
        %2228 = vmatpush2.msra.mxu0 0.0
        %2229 = vmatprep.subr.mxu0 0.0
        %2230 = vmatpush2.msra.mxu0 0.0
        %2231 = vmatprep.subr.mxu0 0.0
        %2232 = vmatpush2.msra.mxu0 0.0
        %2233 = vmatprep.subr.mxu0 0.0
        %2234 = vmatpush2.msra.mxu0 0.0
        %2235 = vmatprep.subr.mxu0 0.0
        %2236 = vmatpush2.msra.mxu0 0.0
        %2237 = vmatprep.subr.mxu0 0.0
        %2238 = vmatpush2.msra.mxu0 0.0
        %2239 = vmatprep.subr.mxu0 0.0
        %2240 = vmatpush2.msra.mxu0 0.0
        %2241 = vmatprep.subr.mxu0 0.0
        %2242 = vmatpush2.msra.mxu0 0.0
        %2243 = vmatprep.subr.mxu0 0.0
        %2244 = vmatpush2.msra.mxu0 0.0
        %2245 = vmatprep.subr.mxu0 0.0
        %2246 = vmatpush2.msra.mxu0 0.0
        %2247 = vmatprep.subr.mxu0 0.0
        %2248 = vmatpush2.msra.mxu0 0.0
        %2249 = vmatprep.subr.mxu0 0.0
        %2250 = vmatpush2.msra.mxu0 0.0
        %2251 = vmatprep.subr.mxu0 0.0
        %2252 = vmatpush2.msra.mxu0 0.0
        %2253 = vmatprep.mubr.f32.mxu0 0.0
        %2254 = vmatmul.mubr.f32.gmra.mxu0 %v2178
        %v2255 = vpop.f32.mrf.mxu0
        %v2256 = vadd.f32 0.0, %v2255
        %v2257 = vpop.f32.mrf.mxu0
        %v2258 = vadd.f32 0.0, %v2257
        %2259 = vmatprep.mubr.f32.mxu0 0.0
        %2260 = vmatmul.mubr.f32.gmra.mxu0 %v2181
        %v2261 = vpop.f32.mrf.mxu0
        %v2262 = vadd.f32 0.0, %v2261
        %v2263 = vpop.f32.mrf.mxu0
        %v2264 = vadd.f32 0.0, %v2263
        %2265 = vdwg.mxu0
        %v2266 = vadd.f32 %v2148, %v2256
        %v2267 = vadd.f32 %v2149, %v2258
        %v2268 = vadd.f32 %v2150, %v2262
        %v2269 = vadd.f32 %v2151, %v2264
        %v2270 = vld [vmem:[%s8] sm:$0x3]
        %v2272 = vlaneseq
        %v2273 = vshrl.u32 %v2272, 7
        %v2274 = vsub.s32 0, %v2273
        %v2275 = vrot.slane %v2270, %v2274
        %v2276 = vlaneseq
        %v2277 = vshrl.u32 %v2276, 7
        %v2278 = vsub.s32 1, %v2277
        %v2279 = vrot.slane %v2270, %v2278
        %v2282 = vadd.f32 %v2266, %v2275
        %v2283 = vadd.f32 %v2267, %v2279
        %v2284 = vadd.f32 %v2268, %v2275
        %v2285 = vadd.f32 %v2269, %v2279
        %v2286 = vmax.f32 %v2282, 0.0
        %v2287 = vmax.f32 %v2283, 0.0
        %v2288 = vmax.f32 %v2284, 0.0
        %v2289 = vmax.f32 %v2285, 0.0
        %v2290 = vld [vmem:[%s9] sm:$0x1f]
        %vm2291 = vcmask 80896
        %v2293 = vsel %vm2291, %v2290, 0
        %vm2295 = vcmask 1041408
        %v2297 = vsel %vm2295, %v2288, 0
        %v2300 = vsel %vm2295, %v2289, 0
        %2302 = vmatprep.subr.mxu0 0.0
        %2303 = vmatpush1.msra.mxu0 0.0
        %2304 = vmatprep.subr.mxu0 0.0
        %2305 = vmatpush1.msra.mxu0 0.0
        %2306 = vmatprep.subr.mxu0 0.0
        %2307 = vmatpush1.msra.mxu0 0.0
        %2308 = vmatprep.subr.mxu0 0.0
        %2309 = vmatpush1.msra.mxu0 0.0
        %2310 = vmatprep.subr.mxu0 0.0
        %2311 = vmatpush1.msra.mxu0 0.0
        %2312 = vmatprep.subr.mxu0 0.0
        %2313 = vmatpush1.msra.mxu0 0.0
        %2314 = vmatprep.subr.mxu0 0.0
        %2315 = vmatpush1.msra.mxu0 0.0
        %2316 = vmatprep.subr.mxu0 0.0
        %2317 = vmatpush1.msra.mxu0 0.0
        %2318 = vmatprep.subr.mxu0 0.0
        %2319 = vmatpush1.msra.mxu0 0.0
        %2320 = vmatprep.subr.mxu0 0.0
        %2321 = vmatpush1.msra.mxu0 0.0
        %2322 = vmatprep.subr.mxu0 0.0
        %2323 = vmatpush1.msra.mxu0 0.0
        %2324 = vmatprep.subr.mxu0 0.0
        %2325 = vmatpush1.msra.mxu0 0.0
        %2326 = vmatprep.subr.mxu0 0.0
        %2327 = vmatpush1.msra.mxu0 0.0
        %2328 = vmatprep.subr.mxu0 0.0
        %2329 = vmatpush1.msra.mxu0 0.0
        %2330 = vmatprep.subr.mxu0 %v2300
        %2331 = vmatpush1.msra.mxu0 %v2297
        %2332 = vmatprep.subr.mxu0 %v2287
        %2333 = vmatpush1.msra.mxu0 %v2286
        %2334 = vmatprep.subr.mxu0 0.0
        %2335 = vmatpush2.msra.mxu0 0.0
        %2336 = vmatprep.subr.mxu0 0.0
        %2337 = vmatpush2.msra.mxu0 0.0
        %2338 = vmatprep.subr.mxu0 0.0
        %2339 = vmatpush2.msra.mxu0 0.0
        %2340 = vmatprep.subr.mxu0 0.0
        %2341 = vmatpush2.msra.mxu0 0.0
        %2342 = vmatprep.subr.mxu0 0.0
        %2343 = vmatpush2.msra.mxu0 0.0
        %2344 = vmatprep.subr.mxu0 0.0
        %2345 = vmatpush2.msra.mxu0 0.0
        %2346 = vmatprep.subr.mxu0 0.0
        %2347 = vmatpush2.msra.mxu0 0.0
        %2348 = vmatprep.subr.mxu0 0.0
        %2349 = vmatpush2.msra.mxu0 0.0
        %2350 = vmatprep.subr.mxu0 0.0
        %2351 = vmatpush2.msra.mxu0 0.0
        %2352 = vmatprep.subr.mxu0 0.0
        %2353 = vmatpush2.msra.mxu0 0.0
        %2354 = vmatprep.subr.mxu0 0.0
        %2355 = vmatpush2.msra.mxu0 0.0
        %2356 = vmatprep.subr.mxu0 0.0
        %2357 = vmatpush2.msra.mxu0 0.0
        %2358 = vmatprep.subr.mxu0 0.0
        %2359 = vmatpush2.msra.mxu0 0.0
        %2360 = vmatprep.subr.mxu0 0.0
        %2361 = vmatpush2.msra.mxu0 0.0
        %2362 = vmatprep.subr.mxu0 0.0
        %2363 = vmatpush2.msra.mxu0 0.0
        %2364 = vmatprep.subr.mxu0 0.0
        %2365 = vmatpush2.msra.mxu0 0.0
        %2366 = vmatprep.mubr.f32.mxu0 0.0
        %2367 = vmatmul.mubr.f32.gmra.mxu0 %v2293
        %v2368 = vpop.f32.mrf.mxu0
        %v2369 = vadd.f32 0.0, %v2368
        %v2370 = vpop.f32.mrf.mxu0
        %v2371 = vadd.f32 0.0, %v2370
        %2372 = vdwg.mxu0
        %v2373 = vld [vmem:[%s10] sm:$0x1f]
        %v2375 = vsel %vm2291, %v2373, 0
        %2377 = vmatprep.subr.mxu0 0.0
        %2378 = vmatpush1.msra.mxu0 0.0
        %2379 = vmatprep.subr.mxu0 0.0
        %2380 = vmatpush1.msra.mxu0 0.0
        %2381 = vmatprep.subr.mxu0 0.0
        %2382 = vmatpush1.msra.mxu0 0.0
        %2383 = vmatprep.subr.mxu0 0.0
        %2384 = vmatpush1.msra.mxu0 0.0
        %2385 = vmatprep.subr.mxu0 0.0
        %2386 = vmatpush1.msra.mxu0 0.0
        %2387 = vmatprep.subr.mxu0 0.0
        %2388 = vmatpush1.msra.mxu0 0.0
        %2389 = vmatprep.subr.mxu0 0.0
        %2390 = vmatpush1.msra.mxu0 0.0
        %2391 = vmatprep.subr.mxu0 0.0
        %2392 = vmatpush1.msra.mxu0 0.0
        %2393 = vmatprep.subr.mxu0 0.0
        %2394 = vmatpush1.msra.mxu0 0.0
        %2395 = vmatprep.subr.mxu0 0.0
        %2396 = vmatpush1.msra.mxu0 0.0
        %2397 = vmatprep.subr.mxu0 0.0
        %2398 = vmatpush1.msra.mxu0 0.0
        %2399 = vmatprep.subr.mxu0 0.0
        %2400 = vmatpush1.msra.mxu0 0.0
        %2401 = vmatprep.subr.mxu0 0.0
        %2402 = vmatpush1.msra.mxu0 0.0
        %2403 = vmatprep.subr.mxu0 0.0
        %2404 = vmatpush1.msra.mxu0 0.0
        %2405 = vmatprep.subr.mxu0 %v2300
        %2406 = vmatpush1.msra.mxu0 %v2297
        %2407 = vmatprep.subr.mxu0 %v2287
        %2408 = vmatpush1.msra.mxu0 %v2286
        %2409 = vmatprep.subr.mxu0 0.0
        %2410 = vmatpush2.msra.mxu0 0.0
        %2411 = vmatprep.subr.mxu0 0.0
        %2412 = vmatpush2.msra.mxu0 0.0
        %2413 = vmatprep.subr.mxu0 0.0
        %2414 = vmatpush2.msra.mxu0 0.0
        %2415 = vmatprep.subr.mxu0 0.0
        %2416 = vmatpush2.msra.mxu0 0.0
        %2417 = vmatprep.subr.mxu0 0.0
        %2418 = vmatpush2.msra.mxu0 0.0
        %2419 = vmatprep.subr.mxu0 0.0
        %2420 = vmatpush2.msra.mxu0 0.0
        %2421 = vmatprep.subr.mxu0 0.0
        %2422 = vmatpush2.msra.mxu0 0.0
        %2423 = vmatprep.subr.mxu0 0.0
        %2424 = vmatpush2.msra.mxu0 0.0
        %2425 = vmatprep.subr.mxu0 0.0
        %2426 = vmatpush2.msra.mxu0 0.0
        %2427 = vmatprep.subr.mxu0 0.0
        %2428 = vmatpush2.msra.mxu0 0.0
        %2429 = vmatprep.subr.mxu0 0.0
        %2430 = vmatpush2.msra.mxu0 0.0
        %2431 = vmatprep.subr.mxu0 0.0
        %2432 = vmatpush2.msra.mxu0 0.0
        %2433 = vmatprep.subr.mxu0 0.0
        %2434 = vmatpush2.msra.mxu0 0.0
        %2435 = vmatprep.subr.mxu0 0.0
        %2436 = vmatpush2.msra.mxu0 0.0
        %2437 = vmatprep.subr.mxu0 0.0
        %2438 = vmatpush2.msra.mxu0 0.0
        %2439 = vmatprep.subr.mxu0 0.0
        %2440 = vmatpush2.msra.mxu0 0.0
        %2441 = vmatprep.mubr.f32.mxu0 0.0
        %2442 = vmatmul.mubr.f32.gmra.mxu0 %v2375
        %v2443 = vpop.f32.mrf.mxu0
        %v2444 = vadd.f32 0.0, %v2443
        %v2445 = vpop.f32.mrf.mxu0
        %v2446 = vadd.f32 0.0, %v2445
        %2447 = vdwg.mxu0
        %v2448 = vmax.f32 %v2369, %v2444
        %v2449 = vmax.f32 %v2371, %v2446
        %v2450 = vld [vmem:[%s11] sm:$0xff]
        %v2451 = vld [vmem:[%s11 + $0x8] sm:$0xff]
        %v2452 = vld [vmem:[%s11 + $0x10] sm:$0xff]
        %v2453 = vld [vmem:[%s11 + $0x18] sm:$0xff]
        %v2454 = vld [vmem:[%s11 + $0x20] sm:$0xff]
        %v2455 = vld [vmem:[%s11 + $0x28] sm:$0xff]
        %v2456 = vld [vmem:[%s11 + $0x30] sm:$0xff]
        %v2457 = vld [vmem:[%s11 + $0x38] sm:$0xff]
        %v2458 = vld [vmem:[%s11 + $0x40] sm:$0xff]
        %v2459 = vld [vmem:[%s11 + $0x48] sm:$0xff]
        %v2460 = vld [vmem:[%s11 + $0x50] sm:$0xff]
        %v2461 = vld [vmem:[%s11 + $0x58] sm:$0xff]
        %v2462 = vld [vmem:[%s11 + $0x60] sm:$0xff]
        %v2463 = vld [vmem:[%s11 + $0x68] sm:$0xff]
        %v2464 = vld [vmem:[%s11 + $0x70] sm:$0xff]
        %v2465 = vld [vmem:[%s11 + $0x78] sm:$0xff]
        %v2466 = vld [vmem:[%s11 + $0x80] sm:$0xff]
        %v2467 = vld [vmem:[%s11 + $0x88] sm:$0xff]
        %v2468 = vld [vmem:[%s11 + $0x90] sm:$0xff]
        %v2469 = vld [vmem:[%s11 + $0x98] sm:$0xff]
        %vm2470 = vcmask 261120
        %v2472 = vsel %vm2470, %v2449, 0
        %2474 = vmatprep.subr.mxu0 0.0
        %2475 = vmatpush1.msra.mxu0 %v2465
        %2476 = vmatprep.subr.mxu0 0.0
        %2477 = vmatpush1.msra.mxu0 %v2464
        %2478 = vmatprep.subr.mxu0 0.0
        %2479 = vmatpush1.msra.mxu0 %v2463
        %2480 = vmatprep.subr.mxu0 0.0
        %2481 = vmatpush1.msra.mxu0 %v2462
        %2482 = vmatprep.subr.mxu0 0.0
        %2483 = vmatpush1.msra.mxu0 %v2461
        %2484 = vmatprep.subr.mxu0 0.0
        %2485 = vmatpush1.msra.mxu0 %v2460
        %2486 = vmatprep.subr.mxu0 0.0
        %2487 = vmatpush1.msra.mxu0 %v2459
        %2488 = vmatprep.subr.mxu0 0.0
        %2489 = vmatpush1.msra.mxu0 %v2458
        %2490 = vmatprep.subr.mxu0 0.0
        %2491 = vmatpush1.msra.mxu0 %v2457
        %2492 = vmatprep.subr.mxu0 0.0
        %2493 = vmatpush1.msra.mxu0 %v2456
        %2494 = vmatprep.subr.mxu0 0.0
        %2495 = vmatpush1.msra.mxu0 %v2455
        %2496 = vmatprep.subr.mxu0 0.0
        %2497 = vmatpush1.msra.mxu0 %v2454
        %2498 = vmatprep.subr.mxu0 0.0
        %2499 = vmatpush1.msra.mxu0 %v2453
        %2500 = vmatprep.subr.mxu0 0.0
        %2501 = vmatpush1.msra.mxu0 %v2452
        %2502 = vmatprep.subr.mxu0 0.0
        %2503 = vmatpush1.msra.mxu0 %v2451
        %2504 = vmatprep.subr.mxu0 0.0
        %2505 = vmatpush1.msra.mxu0 %v2450
        %2506 = vmatprep.subr.mxu0 0.0
        %2507 = vmatpush2.msra.mxu0 0.0
        %2508 = vmatprep.subr.mxu0 0.0
        %2509 = vmatpush2.msra.mxu0 0.0
        %2510 = vmatprep.subr.mxu0 0.0
        %2511 = vmatpush2.msra.mxu0 0.0
        %2512 = vmatprep.subr.mxu0 0.0
        %2513 = vmatpush2.msra.mxu0 0.0
        %2514 = vmatprep.subr.mxu0 0.0
        %2515 = vmatpush2.msra.mxu0 0.0
        %2516 = vmatprep.subr.mxu0 0.0
        %2517 = vmatpush2.msra.mxu0 0.0
        %2518 = vmatprep.subr.mxu0 0.0
        %2519 = vmatpush2.msra.mxu0 0.0
        %2520 = vmatprep.subr.mxu0 0.0
        %2521 = vmatpush2.msra.mxu0 0.0
        %2522 = vmatprep.subr.mxu0 0.0
        %2523 = vmatpush2.msra.mxu0 0.0
        %2524 = vmatprep.subr.mxu0 0.0
        %2525 = vmatpush2.msra.mxu0 0.0
        %2526 = vmatprep.subr.mxu0 0.0
        %2527 = vmatpush2.msra.mxu0 0.0
        %2528 = vmatprep.subr.mxu0 0.0
        %2529 = vmatpush2.msra.mxu0 0.0
        %2530 = vmatprep.subr.mxu0 0.0
        %2531 = vmatpush2.msra.mxu0 %v2469
        %2532 = vmatprep.subr.mxu0 0.0
        %2533 = vmatpush2.msra.mxu0 %v2468
        %2534 = vmatprep.subr.mxu0 0.0
        %2535 = vmatpush2.msra.mxu0 %v2467
        %2536 = vmatprep.subr.mxu0 0.0
        %2537 = vmatpush2.msra.mxu0 %v2466
        %2538 = vmatprep.mubr.f32.mxu0 %v2472
        %2539 = vmatmul.mubr.f32.gmra.mxu0 %v2448
        %v2540 = vpop.f32.mrf.mxu0
        %v2541 = vadd.f32 0.0, %v2540
        %v2542 = vpop.f32.mrf.mxu0
        %2543 = vdwg.mxu0
        %v2544 = vld [vmem:[%s12] sm:$0xff]
        %v2545 = vld [vmem:[%s12 + $0x8] sm:$0xff]
        %v2546 = vld [vmem:[%s12 + $0x10] sm:$0xff]
        %v2547 = vld [vmem:[%s12 + $0x18] sm:$0xff]
        %v2548 = vld [vmem:[%s12 + $0x20] sm:$0xff]
        %v2549 = vld [vmem:[%s12 + $0x28] sm:$0xff]
        %v2550 = vld [vmem:[%s12 + $0x30] sm:$0xff]
        %v2551 = vld [vmem:[%s12 + $0x38] sm:$0xff]
        %v2552 = vld [vmem:[%s12 + $0x40] sm:$0xff]
        %v2553 = vld [vmem:[%s12 + $0x48] sm:$0xff]
        %v2554 = vld [vmem:[%s12 + $0x50] sm:$0xff]
        %v2555 = vld [vmem:[%s12 + $0x58] sm:$0xff]
        %v2556 = vld [vmem:[%s12 + $0x60] sm:$0xff]
        %v2557 = vld [vmem:[%s12 + $0x68] sm:$0xff]
        %v2558 = vld [vmem:[%s12 + $0x70] sm:$0xff]
        %v2559 = vld [vmem:[%s12 + $0x78] sm:$0xff]
        %v2560 = vld [vmem:[%s12 + $0x80] sm:$0xff]
        %v2561 = vld [vmem:[%s12 + $0x88] sm:$0xff]
        %v2562 = vld [vmem:[%s12 + $0x90] sm:$0xff]
        %v2563 = vld [vmem:[%s12 + $0x98] sm:$0xff]
        %2564 = vmatprep.subr.mxu0 0.0
        %2565 = vmatpush1.msra.mxu0 %v2559
        %2566 = vmatprep.subr.mxu0 0.0
        %2567 = vmatpush1.msra.mxu0 %v2558
        %2568 = vmatprep.subr.mxu0 0.0
        %2569 = vmatpush1.msra.mxu0 %v2557
        %2570 = vmatprep.subr.mxu0 0.0
        %2571 = vmatpush1.msra.mxu0 %v2556
        %2572 = vmatprep.subr.mxu0 0.0
        %2573 = vmatpush1.msra.mxu0 %v2555
        %2574 = vmatprep.subr.mxu0 0.0
        %2575 = vmatpush1.msra.mxu0 %v2554
        %2576 = vmatprep.subr.mxu0 0.0
        %2577 = vmatpush1.msra.mxu0 %v2553
        %2578 = vmatprep.subr.mxu0 0.0
        %2579 = vmatpush1.msra.mxu0 %v2552
        %2580 = vmatprep.subr.mxu0 0.0
        %2581 = vmatpush1.msra.mxu0 %v2551
        %2582 = vmatprep.subr.mxu0 0.0
        %2583 = vmatpush1.msra.mxu0 %v2550
        %2584 = vmatprep.subr.mxu0 0.0
        %2585 = vmatpush1.msra.mxu0 %v2549
        %2586 = vmatprep.subr.mxu0 0.0
        %2587 = vmatpush1.msra.mxu0 %v2548
        %2588 = vmatprep.subr.mxu0 0.0
        %2589 = vmatpush1.msra.mxu0 %v2547
        %2590 = vmatprep.subr.mxu0 0.0
        %2591 = vmatpush1.msra.mxu0 %v2546
        %2592 = vmatprep.subr.mxu0 0.0
        %2593 = vmatpush1.msra.mxu0 %v2545
        %2594 = vmatprep.subr.mxu0 0.0
        %2595 = vmatpush1.msra.mxu0 %v2544
        %2596 = vmatprep.subr.mxu0 0.0
        %2597 = vmatpush2.msra.mxu0 0.0
        %2598 = vmatprep.subr.mxu0 0.0
        %2599 = vmatpush2.msra.mxu0 0.0
        %2600 = vmatprep.subr.mxu0 0.0
        %2601 = vmatpush2.msra.mxu0 0.0
        %2602 = vmatprep.subr.mxu0 0.0
        %2603 = vmatpush2.msra.mxu0 0.0
        %2604 = vmatprep.subr.mxu0 0.0
        %2605 = vmatpush2.msra.mxu0 0.0
        %2606 = vmatprep.subr.mxu0 0.0
        %2607 = vmatpush2.msra.mxu0 0.0
        %2608 = vmatprep.subr.mxu0 0.0
        %2609 = vmatpush2.msra.mxu0 0.0
        %2610 = vmatprep.subr.mxu0 0.0
        %2611 = vmatpush2.msra.mxu0 0.0
        %2612 = vmatprep.subr.mxu0 0.0
        %2613 = vmatpush2.msra.mxu0 0.0
        %2614 = vmatprep.subr.mxu0 0.0
        %2615 = vmatpush2.msra.mxu0 0.0
        %2616 = vmatprep.subr.mxu0 0.0
        %2617 = vmatpush2.msra.mxu0 0.0
        %2618 = vmatprep.subr.mxu0 0.0
        %2619 = vmatpush2.msra.mxu0 0.0
        %2620 = vmatprep.subr.mxu0 0.0
        %2621 = vmatpush2.msra.mxu0 %v2563
        %2622 = vmatprep.subr.mxu0 0.0
        %2623 = vmatpush2.msra.mxu0 %v2562
        %2624 = vmatprep.subr.mxu0 0.0
        %2625 = vmatpush2.msra.mxu0 %v2561
        %2626 = vmatprep.subr.mxu0 0.0
        %2627 = vmatpush2.msra.mxu0 %v2560
        %2628 = vmatprep.mubr.f32.mxu0 %v2472
        %2629 = vmatmul.mubr.f32.gmra.mxu0 %v2448
        %v2630 = vpop.f32.mrf.mxu0
        %v2631 = vadd.f32 0.0, %v2630
        %v2632 = vpop.f32.mrf.mxu0
        %2633 = vdwg.mxu0
        %v2634 = vmax.f32 %v2541, %v2631
        %vm2635 = vcmask 651264
        %2636 = vst.msk [vmem:[#allocation3] sm:$0x1f] %vm2635, %v2634
        %v2637 = vld [vmem:[%s14] sm:$0x1]
        %v2638 = vld [vmem:[#allocation3] sm:$0x1]
        %v2639 = vld [vmem:[%s13] sm:$0xff]
        %v2640 = vld [vmem:[%s13 + $0x8] sm:$0xff]
        %v2641 = vld [vmem:[%s13 + $0x10] sm:$0xff]
        %v2642 = vld [vmem:[%s13 + $0x18] sm:$0xff]
        %v2643 = vld [vmem:[%s13 + $0x20] sm:$0xff]
        %v2644 = vld [vmem:[%s13 + $0x28] sm:$0xff]
        %v2645 = vld [vmem:[%s13 + $0x30] sm:$0xff]
        %v2646 = vld [vmem:[%s13 + $0x38] sm:$0xff]
        %v2647 = vld [vmem:[%s13 + $0x40] sm:$0xff]
        %v2648 = vld [vmem:[%s13 + $0x48] sm:$0xff]
        %vm2649 = vcmask 654336
        %v2651 = vsel %vm2649, %v2638, 0
        %2653 = vmatprep.subr.mxu0 0.0
        %2654 = vmatpush1.msra.mxu0 0.0
        %2655 = vmatprep.subr.mxu0 0.0
        %2656 = vmatpush1.msra.mxu0 0.0
        %2657 = vmatprep.subr.mxu0 0.0
        %2658 = vmatpush1.msra.mxu0 0.0
        %2659 = vmatprep.subr.mxu0 0.0
        %2660 = vmatpush1.msra.mxu0 0.0
        %2661 = vmatprep.subr.mxu0 0.0
        %2662 = vmatpush1.msra.mxu0 0.0
        %2663 = vmatprep.subr.mxu0 0.0
        %2664 = vmatpush1.msra.mxu0 0.0
        %2665 = vmatprep.subr.mxu0 0.0
        %2666 = vmatpush1.msra.mxu0 %v2648
        %2667 = vmatprep.subr.mxu0 0.0
        %2668 = vmatpush1.msra.mxu0 %v2647
        %2669 = vmatprep.subr.mxu0 0.0
        %2670 = vmatpush1.msra.mxu0 %v2646
        %2671 = vmatprep.subr.mxu0 0.0
        %2672 = vmatpush1.msra.mxu0 %v2645
        %2673 = vmatprep.subr.mxu0 0.0
        %2674 = vmatpush1.msra.mxu0 %v2644
        %2675 = vmatprep.subr.mxu0 0.0
        %2676 = vmatpush1.msra.mxu0 %v2643
        %2677 = vmatprep.subr.mxu0 0.0
        %2678 = vmatpush1.msra.mxu0 %v2642
        %2679 = vmatprep.subr.mxu0 0.0
        %2680 = vmatpush1.msra.mxu0 %v2641
        %2681 = vmatprep.subr.mxu0 0.0
        %2682 = vmatpush1.msra.mxu0 %v2640
        %2683 = vmatprep.subr.mxu0 0.0
        %2684 = vmatpush1.msra.mxu0 %v2639
        %2685 = vmatprep.subr.mxu0 0.0
        %2686 = vmatpush2.msra.mxu0 0.0
        %2687 = vmatprep.subr.mxu0 0.0
        %2688 = vmatpush2.msra.mxu0 0.0
        %2689 = vmatprep.subr.mxu0 0.0
        %2690 = vmatpush2.msra.mxu0 0.0
        %2691 = vmatprep.subr.mxu0 0.0
        %2692 = vmatpush2.msra.mxu0 0.0
        %2693 = vmatprep.subr.mxu0 0.0
        %2694 = vmatpush2.msra.mxu0 0.0
        %2695 = vmatprep.subr.mxu0 0.0
        %2696 = vmatpush2.msra.mxu0 0.0
        %2697 = vmatprep.subr.mxu0 0.0
        %2698 = vmatpush2.msra.mxu0 0.0
        %2699 = vmatprep.subr.mxu0 0.0
        %2700 = vmatpush2.msra.mxu0 0.0
        %2701 = vmatprep.subr.mxu0 0.0
        %2702 = vmatpush2.msra.mxu0 0.0
        %2703 = vmatprep.subr.mxu0 0.0
        %2704 = vmatpush2.msra.mxu0 0.0
        %2705 = vmatprep.subr.mxu0 0.0
        %2706 = vmatpush2.msra.mxu0 0.0
        %2707 = vmatprep.subr.mxu0 0.0
        %2708 = vmatpush2.msra.mxu0 0.0
        %2709 = vmatprep.subr.mxu0 0.0
        %2710 = vmatpush2.msra.mxu0 0.0
        %2711 = vmatprep.subr.mxu0 0.0
        %2712 = vmatpush2.msra.mxu0 0.0
        %2713 = vmatprep.subr.mxu0 0.0
        %2714 = vmatpush2.msra.mxu0 0.0
        %2715 = vmatprep.subr.mxu0 0.0
        %2716 = vmatpush2.msra.mxu0 0.0
        %2717 = vmatprep.mubr.f32.mxu0 0.0
        %2718 = vmatmul.mubr.f32.gmra.mxu0 %v2651
        %v2719 = vpop.f32.mrf.mxu0
        %v2720 = vadd.f32 0.0, %v2719
        %v2721 = vpop.f32.mrf.mxu0
        %2722 = vdwg.mxu0
        %v2723 = vadd.f32 %v2637, %v2720
        %v2724 = vld [vmem:[#allocation3 + $0x1] sm:$0x1]
        %s2725 = scalar_lea.vmem %s13, 80
        %v2726 = vld [vmem:[%s2725] sm:$0xff]
        %v2727 = vld [vmem:[%s2725 + $0x8] sm:$0xff]
        %v2728 = vld [vmem:[%s2725 + $0x10] sm:$0xff]
        %v2729 = vld [vmem:[%s2725 + $0x18] sm:$0xff]
        %v2730 = vld [vmem:[%s2725 + $0x20] sm:$0xff]
        %v2731 = vld [vmem:[%s2725 + $0x28] sm:$0xff]
        %v2732 = vld [vmem:[%s2725 + $0x30] sm:$0xff]
        %v2733 = vld [vmem:[%s2725 + $0x38] sm:$0xff]
        %v2734 = vld [vmem:[%s2725 + $0x40] sm:$0xff]
        %v2735 = vld [vmem:[%s2725 + $0x48] sm:$0xff]
        %v2737 = vsel %vm2649, %v2724, 0
        %2739 = vmatprep.subr.mxu0 0.0
        %2740 = vmatpush1.msra.mxu0 0.0
        %2741 = vmatprep.subr.mxu0 0.0
        %2742 = vmatpush1.msra.mxu0 0.0
        %2743 = vmatprep.subr.mxu0 0.0
        %2744 = vmatpush1.msra.mxu0 0.0
        %2745 = vmatprep.subr.mxu0 0.0
        %2746 = vmatpush1.msra.mxu0 0.0
        %2747 = vmatprep.subr.mxu0 0.0
        %2748 = vmatpush1.msra.mxu0 0.0
        %2749 = vmatprep.subr.mxu0 0.0
        %2750 = vmatpush1.msra.mxu0 0.0
        %2751 = vmatprep.subr.mxu0 0.0
        %2752 = vmatpush1.msra.mxu0 %v2735
        %2753 = vmatprep.subr.mxu0 0.0
        %2754 = vmatpush1.msra.mxu0 %v2734
        %2755 = vmatprep.subr.mxu0 0.0
        %2756 = vmatpush1.msra.mxu0 %v2733
        %2757 = vmatprep.subr.mxu0 0.0
        %2758 = vmatpush1.msra.mxu0 %v2732
        %2759 = vmatprep.subr.mxu0 0.0
        %2760 = vmatpush1.msra.mxu0 %v2731
        %2761 = vmatprep.subr.mxu0 0.0
        %2762 = vmatpush1.msra.mxu0 %v2730
        %2763 = vmatprep.subr.mxu0 0.0
        %2764 = vmatpush1.msra.mxu0 %v2729
        %2765 = vmatprep.subr.mxu0 0.0
        %2766 = vmatpush1.msra.mxu0 %v2728
        %2767 = vmatprep.subr.mxu0 0.0
        %2768 = vmatpush1.msra.mxu0 %v2727
        %2769 = vmatprep.subr.mxu0 0.0
        %2770 = vmatpush1.msra.mxu0 %v2726
        %2771 = vmatprep.subr.mxu0 0.0
        %2772 = vmatpush2.msra.mxu0 0.0
        %2773 = vmatprep.subr.mxu0 0.0
        %2774 = vmatpush2.msra.mxu0 0.0
        %2775 = vmatprep.subr.mxu0 0.0
        %2776 = vmatpush2.msra.mxu0 0.0
        %2777 = vmatprep.subr.mxu0 0.0
        %2778 = vmatpush2.msra.mxu0 0.0
        %2779 = vmatprep.subr.mxu0 0.0
        %2780 = vmatpush2.msra.mxu0 0.0
        %2781 = vmatprep.subr.mxu0 0.0
        %2782 = vmatpush2.msra.mxu0 0.0
        %2783 = vmatprep.subr.mxu0 0.0
        %2784 = vmatpush2.msra.mxu0 0.0
        %2785 = vmatprep.subr.mxu0 0.0
        %2786 = vmatpush2.msra.mxu0 0.0
        %2787 = vmatprep.subr.mxu0 0.0
        %2788 = vmatpush2.msra.mxu0 0.0
        %2789 = vmatprep.subr.mxu0 0.0
        %2790 = vmatpush2.msra.mxu0 0.0
        %2791 = vmatprep.subr.mxu0 0.0
        %2792 = vmatpush2.msra.mxu0 0.0
        %2793 = vmatprep.subr.mxu0 0.0
        %2794 = vmatpush2.msra.mxu0 0.0
        %2795 = vmatprep.subr.mxu0 0.0
        %2796 = vmatpush2.msra.mxu0 0.0
        %2797 = vmatprep.subr.mxu0 0.0
        %2798 = vmatpush2.msra.mxu0 0.0
        %2799 = vmatprep.subr.mxu0 0.0
        %2800 = vmatpush2.msra.mxu0 0.0
        %2801 = vmatprep.subr.mxu0 0.0
        %2802 = vmatpush2.msra.mxu0 0.0
        %2803 = vmatprep.mubr.f32.mxu0 0.0
        %2804 = vmatmul.mubr.f32.gmra.mxu0 %v2737
        %v2805 = vpop.f32.mrf.mxu0
        %v2806 = vadd.f32 0.0, %v2805
        %v2807 = vpop.f32.mrf.mxu0
        %2808 = vdwg.mxu0
        %v2809 = vadd.f32 %v2723, %v2806
        %v2810 = vld [vmem:[#allocation3 + $0x2] sm:$0x1]
        %s2811 = scalar_lea.vmem %s13, 160
        %v2812 = vld [vmem:[%s2811] sm:$0xff]
        %v2813 = vld [vmem:[%s2811 + $0x8] sm:$0xff]
        %v2814 = vld [vmem:[%s2811 + $0x10] sm:$0xff]
        %v2815 = vld [vmem:[%s2811 + $0x18] sm:$0xff]
        %v2816 = vld [vmem:[%s2811 + $0x20] sm:$0xff]
        %v2817 = vld [vmem:[%s2811 + $0x28] sm:$0xff]
        %v2818 = vld [vmem:[%s2811 + $0x30] sm:$0xff]
        %v2819 = vld [vmem:[%s2811 + $0x38] sm:$0xff]
        %v2820 = vld [vmem:[%s2811 + $0x40] sm:$0xff]
        %v2821 = vld [vmem:[%s2811 + $0x48] sm:$0xff]
        %v2823 = vsel %vm2649, %v2810, 0
        %2825 = vmatprep.subr.mxu0 0.0
        %2826 = vmatpush1.msra.mxu0 0.0
        %2827 = vmatprep.subr.mxu0 0.0
        %2828 = vmatpush1.msra.mxu0 0.0
        %2829 = vmatprep.subr.mxu0 0.0
        %2830 = vmatpush1.msra.mxu0 0.0
        %2831 = vmatprep.subr.mxu0 0.0
        %2832 = vmatpush1.msra.mxu0 0.0
        %2833 = vmatprep.subr.mxu0 0.0
        %2834 = vmatpush1.msra.mxu0 0.0
        %2835 = vmatprep.subr.mxu0 0.0
        %2836 = vmatpush1.msra.mxu0 0.0
        %2837 = vmatprep.subr.mxu0 0.0
        %2838 = vmatpush1.msra.mxu0 %v2821
        %2839 = vmatprep.subr.mxu0 0.0
        %2840 = vmatpush1.msra.mxu0 %v2820
        %2841 = vmatprep.subr.mxu0 0.0
        %2842 = vmatpush1.msra.mxu0 %v2819
        %2843 = vmatprep.subr.mxu0 0.0
        %2844 = vmatpush1.msra.mxu0 %v2818
        %2845 = vmatprep.subr.mxu0 0.0
        %2846 = vmatpush1.msra.mxu0 %v2817
        %2847 = vmatprep.subr.mxu0 0.0
        %2848 = vmatpush1.msra.mxu0 %v2816
        %2849 = vmatprep.subr.mxu0 0.0
        %2850 = vmatpush1.msra.mxu0 %v2815
        %2851 = vmatprep.subr.mxu0 0.0
        %2852 = vmatpush1.msra.mxu0 %v2814
        %2853 = vmatprep.subr.mxu0 0.0
        %2854 = vmatpush1.msra.mxu0 %v2813
        %2855 = vmatprep.subr.mxu0 0.0
        %2856 = vmatpush1.msra.mxu0 %v2812
        %2857 = vmatprep.subr.mxu0 0.0
        %2858 = vmatpush2.msra.mxu0 0.0
        %2859 = vmatprep.subr.mxu0 0.0
        %2860 = vmatpush2.msra.mxu0 0.0
        %2861 = vmatprep.subr.mxu0 0.0
        %2862 = vmatpush2.msra.mxu0 0.0
        %2863 = vmatprep.subr.mxu0 0.0
        %2864 = vmatpush2.msra.mxu0 0.0
        %2865 = vmatprep.subr.mxu0 0.0
        %2866 = vmatpush2.msra.mxu0 0.0
        %2867 = vmatprep.subr.mxu0 0.0
        %2868 = vmatpush2.msra.mxu0 0.0
        %2869 = vmatprep.subr.mxu0 0.0
        %2870 = vmatpush2.msra.mxu0 0.0
        %2871 = vmatprep.subr.mxu0 0.0
        %2872 = vmatpush2.msra.mxu0 0.0
        %2873 = vmatprep.subr.mxu0 0.0
        %2874 = vmatpush2.msra.mxu0 0.0
        %2875 = vmatprep.subr.mxu0 0.0
        %2876 = vmatpush2.msra.mxu0 0.0
        %2877 = vmatprep.subr.mxu0 0.0
        %2878 = vmatpush2.msra.mxu0 0.0
        %2879 = vmatprep.subr.mxu0 0.0
        %2880 = vmatpush2.msra.mxu0 0.0
        %2881 = vmatprep.subr.mxu0 0.0
        %2882 = vmatpush2.msra.mxu0 0.0
        %2883 = vmatprep.subr.mxu0 0.0
        %2884 = vmatpush2.msra.mxu0 0.0
        %2885 = vmatprep.subr.mxu0 0.0
        %2886 = vmatpush2.msra.mxu0 0.0
        %2887 = vmatprep.subr.mxu0 0.0
        %2888 = vmatpush2.msra.mxu0 0.0
        %2889 = vmatprep.mubr.f32.mxu0 0.0
        %2890 = vmatmul.mubr.f32.gmra.mxu0 %v2823
        %v2891 = vpop.f32.mrf.mxu0
        %v2892 = vadd.f32 0.0, %v2891
        %v2893 = vpop.f32.mrf.mxu0
        %2894 = vdwg.mxu0
        %v2895 = vadd.f32 %v2809, %v2892
        %v2896 = vld [vmem:[#allocation3 + $0x3] sm:$0x1]
        %s2897 = scalar_lea.vmem %s13, 240
        %v2898 = vld [vmem:[%s2897] sm:$0xff]
        %v2899 = vld [vmem:[%s2897 + $0x8] sm:$0xff]
        %v2900 = vld [vmem:[%s2897 + $0x10] sm:$0xff]
        %v2901 = vld [vmem:[%s2897 + $0x18] sm:$0xff]
        %v2902 = vld [vmem:[%s2897 + $0x20] sm:$0xff]
        %v2903 = vld [vmem:[%s2897 + $0x28] sm:$0xff]
        %v2904 = vld [vmem:[%s2897 + $0x30] sm:$0xff]
        %v2905 = vld [vmem:[%s2897 + $0x38] sm:$0xff]
        %v2906 = vld [vmem:[%s2897 + $0x40] sm:$0xff]
        %v2907 = vld [vmem:[%s2897 + $0x48] sm:$0xff]
        %v2909 = vsel %vm2649, %v2896, 0
        %2911 = vmatprep.subr.mxu0 0.0
        %2912 = vmatpush1.msra.mxu0 0.0
        %2913 = vmatprep.subr.mxu0 0.0
        %2914 = vmatpush1.msra.mxu0 0.0
        %2915 = vmatprep.subr.mxu0 0.0
        %2916 = vmatpush1.msra.mxu0 0.0
        %2917 = vmatprep.subr.mxu0 0.0
        %2918 = vmatpush1.msra.mxu0 0.0
        %2919 = vmatprep.subr.mxu0 0.0
        %2920 = vmatpush1.msra.mxu0 0.0
        %2921 = vmatprep.subr.mxu0 0.0
        %2922 = vmatpush1.msra.mxu0 0.0
        %2923 = vmatprep.subr.mxu0 0.0
        %2924 = vmatpush1.msra.mxu0 %v2907
        %2925 = vmatprep.subr.mxu0 0.0
        %2926 = vmatpush1.msra.mxu0 %v2906
        %2927 = vmatprep.subr.mxu0 0.0
        %2928 = vmatpush1.msra.mxu0 %v2905
        %2929 = vmatprep.subr.mxu0 0.0
        %2930 = vmatpush1.msra.mxu0 %v2904
        %2931 = vmatprep.subr.mxu0 0.0
        %2932 = vmatpush1.msra.mxu0 %v2903
        %2933 = vmatprep.subr.mxu0 0.0
        %2934 = vmatpush1.msra.mxu0 %v2902
        %2935 = vmatprep.subr.mxu0 0.0
        %2936 = vmatpush1.msra.mxu0 %v2901
        %2937 = vmatprep.subr.mxu0 0.0
        %2938 = vmatpush1.msra.mxu0 %v2900
        %2939 = vmatprep.subr.mxu0 0.0
        %2940 = vmatpush1.msra.mxu0 %v2899
        %2941 = vmatprep.subr.mxu0 0.0
        %2942 = vmatpush1.msra.mxu0 %v2898
        %2943 = vmatprep.subr.mxu0 0.0
        %2944 = vmatpush2.msra.mxu0 0.0
        %2945 = vmatprep.subr.mxu0 0.0
        %2946 = vmatpush2.msra.mxu0 0.0
        %2947 = vmatprep.subr.mxu0 0.0
        %2948 = vmatpush2.msra.mxu0 0.0
        %2949 = vmatprep.subr.mxu0 0.0
        %2950 = vmatpush2.msra.mxu0 0.0
        %2951 = vmatprep.subr.mxu0 0.0
        %2952 = vmatpush2.msra.mxu0 0.0
        %2953 = vmatprep.subr.mxu0 0.0
        %2954 = vmatpush2.msra.mxu0 0.0
        %2955 = vmatprep.subr.mxu0 0.0
        %2956 = vmatpush2.msra.mxu0 0.0
        %2957 = vmatprep.subr.mxu0 0.0
        %2958 = vmatpush2.msra.mxu0 0.0
        %2959 = vmatprep.subr.mxu0 0.0
        %2960 = vmatpush2.msra.mxu0 0.0
        %2961 = vmatprep.subr.mxu0 0.0
        %2962 = vmatpush2.msra.mxu0 0.0
        %2963 = vmatprep.subr.mxu0 0.0
        %2964 = vmatpush2.msra.mxu0 0.0
        %2965 = vmatprep.subr.mxu0 0.0
        %2966 = vmatpush2.msra.mxu0 0.0
        %2967 = vmatprep.subr.mxu0 0.0
        %2968 = vmatpush2.msra.mxu0 0.0
        %2969 = vmatprep.subr.mxu0 0.0
        %2970 = vmatpush2.msra.mxu0 0.0
        %2971 = vmatprep.subr.mxu0 0.0
        %2972 = vmatpush2.msra.mxu0 0.0
        %2973 = vmatprep.subr.mxu0 0.0
        %2974 = vmatpush2.msra.mxu0 0.0
        %2975 = vmatprep.mubr.f32.mxu0 0.0
        %2976 = vmatmul.mubr.f32.gmra.mxu0 %v2909
        %v2977 = vpop.f32.mrf.mxu0
        %v2978 = vadd.f32 0.0, %v2977
        %v2979 = vpop.f32.mrf.mxu0
        %2980 = vdwg.mxu0
        %v2981 = vadd.f32 %v2895, %v2978
        %v2982 = vld [vmem:[#allocation3 + $0x4] sm:$0x1]
        %s2983 = scalar_lea.vmem %s13, 320
        %v2984 = vld [vmem:[%s2983] sm:$0xff]
        %v2985 = vld [vmem:[%s2983 + $0x8] sm:$0xff]
        %v2986 = vld [vmem:[%s2983 + $0x10] sm:$0xff]
        %v2987 = vld [vmem:[%s2983 + $0x18] sm:$0xff]
        %v2988 = vld [vmem:[%s2983 + $0x20] sm:$0xff]
        %v2989 = vld [vmem:[%s2983 + $0x28] sm:$0xff]
        %v2990 = vld [vmem:[%s2983 + $0x30] sm:$0xff]
        %v2991 = vld [vmem:[%s2983 + $0x38] sm:$0xff]
        %v2992 = vld [vmem:[%s2983 + $0x40] sm:$0xff]
        %v2993 = vld [vmem:[%s2983 + $0x48] sm:$0xff]
        %v2995 = vsel %vm2649, %v2982, 0
        %2997 = vmatprep.subr.mxu0 0.0
        %2998 = vmatpush1.msra.mxu0 0.0
        %2999 = vmatprep.subr.mxu0 0.0
        %3000 = vmatpush1.msra.mxu0 0.0
        %3001 = vmatprep.subr.mxu0 0.0
        %3002 = vmatpush1.msra.mxu0 0.0
        %3003 = vmatprep.subr.mxu0 0.0
        %3004 = vmatpush1.msra.mxu0 0.0
        %3005 = vmatprep.subr.mxu0 0.0
        %3006 = vmatpush1.msra.mxu0 0.0
        %3007 = vmatprep.subr.mxu0 0.0
        %3008 = vmatpush1.msra.mxu0 0.0
        %3009 = vmatprep.subr.mxu0 0.0
        %3010 = vmatpush1.msra.mxu0 %v2993
        %3011 = vmatprep.subr.mxu0 0.0
        %3012 = vmatpush1.msra.mxu0 %v2992
        %3013 = vmatprep.subr.mxu0 0.0
        %3014 = vmatpush1.msra.mxu0 %v2991
        %3015 = vmatprep.subr.mxu0 0.0
        %3016 = vmatpush1.msra.mxu0 %v2990
        %3017 = vmatprep.subr.mxu0 0.0
        %3018 = vmatpush1.msra.mxu0 %v2989
        %3019 = vmatprep.subr.mxu0 0.0
        %3020 = vmatpush1.msra.mxu0 %v2988
        %3021 = vmatprep.subr.mxu0 0.0
        %3022 = vmatpush1.msra.mxu0 %v2987
        %3023 = vmatprep.subr.mxu0 0.0
        %3024 = vmatpush1.msra.mxu0 %v2986
        %3025 = vmatprep.subr.mxu0 0.0
        %3026 = vmatpush1.msra.mxu0 %v2985
        %3027 = vmatprep.subr.mxu0 0.0
        %3028 = vmatpush1.msra.mxu0 %v2984
        %3029 = vmatprep.subr.mxu0 0.0
        %3030 = vmatpush2.msra.mxu0 0.0
        %3031 = vmatprep.subr.mxu0 0.0
        %3032 = vmatpush2.msra.mxu0 0.0
        %3033 = vmatprep.subr.mxu0 0.0
        %3034 = vmatpush2.msra.mxu0 0.0
        %3035 = vmatprep.subr.mxu0 0.0
        %3036 = vmatpush2.msra.mxu0 0.0
        %3037 = vmatprep.subr.mxu0 0.0
        %3038 = vmatpush2.msra.mxu0 0.0
        %3039 = vmatprep.subr.mxu0 0.0
        %3040 = vmatpush2.msra.mxu0 0.0
        %3041 = vmatprep.subr.mxu0 0.0
        %3042 = vmatpush2.msra.mxu0 0.0
        %3043 = vmatprep.subr.mxu0 0.0
        %3044 = vmatpush2.msra.mxu0 0.0
        %3045 = vmatprep.subr.mxu0 0.0
        %3046 = vmatpush2.msra.mxu0 0.0
        %3047 = vmatprep.subr.mxu0 0.0
        %3048 = vmatpush2.msra.mxu0 0.0
        %3049 = vmatprep.subr.mxu0 0.0
        %3050 = vmatpush2.msra.mxu0 0.0
        %3051 = vmatprep.subr.mxu0 0.0
        %3052 = vmatpush2.msra.mxu0 0.0
        %3053 = vmatprep.subr.mxu0 0.0
        %3054 = vmatpush2.msra.mxu0 0.0
        %3055 = vmatprep.subr.mxu0 0.0
        %3056 = vmatpush2.msra.mxu0 0.0
        %3057 = vmatprep.subr.mxu0 0.0
        %3058 = vmatpush2.msra.mxu0 0.0
        %3059 = vmatprep.subr.mxu0 0.0
        %3060 = vmatpush2.msra.mxu0 0.0
        %3061 = vmatprep.mubr.f32.mxu0 0.0
        %3062 = vmatmul.mubr.f32.gmra.mxu0 %v2995
        %v3063 = vpop.f32.mrf.mxu0
        %v3064 = vadd.f32 0.0, %v3063
        %v3065 = vpop.f32.mrf.mxu0
        %3066 = vdwg.mxu0
        %v3067 = vadd.f32 %v2981, %v3064
        %v3068 = vmax.f32 %v3067, 0.0
        %v3069 = vld [vmem:[%s15] sm:$0xff]
        %v3070 = vld [vmem:[%s15 + $0x8] sm:$0xff]
        %v3071 = vld [vmem:[%s15 + $0x10] sm:$0xff]
        %v3072 = vld [vmem:[%s15 + $0x18] sm:$0xff]
        %v3073 = vld [vmem:[%s15 + $0x20] sm:$0xff]
        %v3074 = vld [vmem:[%s15 + $0x28] sm:$0xff]
        %v3075 = vld [vmem:[%s15 + $0x30] sm:$0xff]
        %v3076 = vld [vmem:[%s15 + $0x38] sm:$0xff]
        %v3077 = vld [vmem:[%s15 + $0x40] sm:$0xff]
        %v3078 = vld [vmem:[%s15 + $0x48] sm:$0xff]
        %v3079 = vld [vmem:[%s15 + $0x50] sm:$0xff]
        %v3080 = vld [vmem:[%s15 + $0x58] sm:$0xff]
        %v3081 = vld [vmem:[%s15 + $0x60] sm:$0xff]
        %v3082 = vld [vmem:[%s15 + $0x68] sm:$0xff]
        %v3083 = vld [vmem:[%s15 + $0x70] sm:$0xff]
        %v3084 = vld [vmem:[%s16] sm:$0x1]
        %vm3085 = vcmask 982016
        %v3087 = vsel %vm3085, %v3068, 0
        %3089 = vmatprep.subr.mxu0 0.0
        %3090 = vmatpush1.msra.mxu0 0.0
        %3091 = vmatprep.subr.mxu0 0.0
        %3092 = vmatpush1.msra.mxu0 %v3083
        %3093 = vmatprep.subr.mxu0 0.0
        %3094 = vmatpush1.msra.mxu0 %v3082
        %3095 = vmatprep.subr.mxu0 0.0
        %3096 = vmatpush1.msra.mxu0 %v3081
        %3097 = vmatprep.subr.mxu0 0.0
        %3098 = vmatpush1.msra.mxu0 %v3080
        %3099 = vmatprep.subr.mxu0 0.0
        %3100 = vmatpush1.msra.mxu0 %v3079
        %3101 = vmatprep.subr.mxu0 0.0
        %3102 = vmatpush1.msra.mxu0 %v3078
        %3103 = vmatprep.subr.mxu0 0.0
        %3104 = vmatpush1.msra.mxu0 %v3077
        %3105 = vmatprep.subr.mxu0 0.0
        %3106 = vmatpush1.msra.mxu0 %v3076
        %3107 = vmatprep.subr.mxu0 0.0
        %3108 = vmatpush1.msra.mxu0 %v3075
        %3109 = vmatprep.subr.mxu0 0.0
        %3110 = vmatpush1.msra.mxu0 %v3074
        %3111 = vmatprep.subr.mxu0 0.0
        %3112 = vmatpush1.msra.mxu0 %v3073
        %3113 = vmatprep.subr.mxu0 0.0
        %3114 = vmatpush1.msra.mxu0 %v3072
        %3115 = vmatprep.subr.mxu0 0.0
        %3116 = vmatpush1.msra.mxu0 %v3071
        %3117 = vmatprep.subr.mxu0 0.0
        %3118 = vmatpush1.msra.mxu0 %v3070
        %3119 = vmatprep.subr.mxu0 0.0
        %3120 = vmatpush1.msra.mxu0 %v3069
        %3121 = vmatprep.subr.mxu0 0.0
        %3122 = vmatpush2.msra.mxu0 0.0
        %3123 = vmatprep.subr.mxu0 0.0
        %3124 = vmatpush2.msra.mxu0 0.0
        %3125 = vmatprep.subr.mxu0 0.0
        %3126 = vmatpush2.msra.mxu0 0.0
        %3127 = vmatprep.subr.mxu0 0.0
        %3128 = vmatpush2.msra.mxu0 0.0
        %3129 = vmatprep.subr.mxu0 0.0
        %3130 = vmatpush2.msra.mxu0 0.0
        %3131 = vmatprep.subr.mxu0 0.0
        %3132 = vmatpush2.msra.mxu0 0.0
        %3133 = vmatprep.subr.mxu0 0.0
        %3134 = vmatpush2.msra.mxu0 0.0
        %3135 = vmatprep.subr.mxu0 0.0
        %3136 = vmatpush2.msra.mxu0 0.0
        %3137 = vmatprep.subr.mxu0 0.0
        %3138 = vmatpush2.msra.mxu0 0.0
        %3139 = vmatprep.subr.mxu0 0.0
        %3140 = vmatpush2.msra.mxu0 0.0
        %3141 = vmatprep.subr.mxu0 0.0
        %3142 = vmatpush2.msra.mxu0 0.0
        %3143 = vmatprep.subr.mxu0 0.0
        %3144 = vmatpush2.msra.mxu0 0.0
        %3145 = vmatprep.subr.mxu0 0.0
        %3146 = vmatpush2.msra.mxu0 0.0
        %3147 = vmatprep.subr.mxu0 0.0
        %3148 = vmatpush2.msra.mxu0 0.0
        %3149 = vmatprep.subr.mxu0 0.0
        %3150 = vmatpush2.msra.mxu0 0.0
        %3151 = vmatprep.subr.mxu0 0.0
        %3152 = vmatpush2.msra.mxu0 0.0
        %3153 = vmatprep.mubr.f32.mxu0 0.0
        %3154 = vmatmul.mubr.f32.gmra.mxu0 %v3087
        %v3155 = vpop.f32.mrf.mxu0
        %v3156 = vadd.f32 %v3084, %v3155
        %v3157 = vpop.f32.mrf.mxu0
        %3158 = vdwg.mxu0
        %v3159 = vmax.f32 %v3156, 0.0
        %v3160 = vld [vmem:[%s17] sm:$0xff]
        %v3161 = vld [vmem:[%s17 + $0x8] sm:$0xff]
        %v3162 = vld [vmem:[%s17 + $0x10] sm:$0xff]
        %v3163 = vld [vmem:[%s17 + $0x18] sm:$0xff]
        %v3164 = vld [vmem:[%s17 + $0x20] sm:$0xff]
        %v3165 = vld [vmem:[%s17 + $0x28] sm:$0xff]
        %v3166 = vld [vmem:[%s17 + $0x30] sm:$0xff]
        %v3167 = vld [vmem:[%s17 + $0x38] sm:$0xff]
        %v3168 = vld [vmem:[%s17 + $0x40] sm:$0xff]
        %v3169 = vld [vmem:[%s17 + $0x48] sm:$0xff]
        %v3170 = vld [vmem:[%s17 + $0x50] sm:$0xf]
        %v3171 = vld [vmem:[%s18] sm:$0x1]
        %v3173 = vsel %vm1685, %v3159, 0
        %v3176 = vsel %vm1311, %v3170, 0
        %3178 = vmatprep.subr.mxu0 0.0
        %3179 = vmatpush1.msra.mxu0 0.0
        %3180 = vmatprep.subr.mxu0 0.0
        %3181 = vmatpush1.msra.mxu0 0.0
        %3182 = vmatprep.subr.mxu0 0.0
        %3183 = vmatpush1.msra.mxu0 0.0
        %3184 = vmatprep.subr.mxu0 0.0
        %3185 = vmatpush1.msra.mxu0 0.0
        %3186 = vmatprep.subr.mxu0 0.0
        %3187 = vmatpush1.msra.mxu0 0.0
        %3188 = vmatprep.subr.mxu0 0.0
        %3189 = vmatpush1.msra.mxu0 %v3176
        %3190 = vmatprep.subr.mxu0 0.0
        %3191 = vmatpush1.msra.mxu0 %v3169
        %3192 = vmatprep.subr.mxu0 0.0
        %3193 = vmatpush1.msra.mxu0 %v3168
        %3194 = vmatprep.subr.mxu0 0.0
        %3195 = vmatpush1.msra.mxu0 %v3167
        %3196 = vmatprep.subr.mxu0 0.0
        %3197 = vmatpush1.msra.mxu0 %v3166
        %3198 = vmatprep.subr.mxu0 0.0
        %3199 = vmatpush1.msra.mxu0 %v3165
        %3200 = vmatprep.subr.mxu0 0.0
        %3201 = vmatpush1.msra.mxu0 %v3164
        %3202 = vmatprep.subr.mxu0 0.0
        %3203 = vmatpush1.msra.mxu0 %v3163
        %3204 = vmatprep.subr.mxu0 0.0
        %3205 = vmatpush1.msra.mxu0 %v3162
        %3206 = vmatprep.subr.mxu0 0.0
        %3207 = vmatpush1.msra.mxu0 %v3161
        %3208 = vmatprep.subr.mxu0 0.0
        %3209 = vmatpush1.msra.mxu0 %v3160
        %3210 = vmatprep.subr.mxu0 0.0
        %3211 = vmatpush2.msra.mxu0 0.0
        %3212 = vmatprep.subr.mxu0 0.0
        %3213 = vmatpush2.msra.mxu0 0.0
        %3214 = vmatprep.subr.mxu0 0.0
        %3215 = vmatpush2.msra.mxu0 0.0
        %3216 = vmatprep.subr.mxu0 0.0
        %3217 = vmatpush2.msra.mxu0 0.0
        %3218 = vmatprep.subr.mxu0 0.0
        %3219 = vmatpush2.msra.mxu0 0.0
        %3220 = vmatprep.subr.mxu0 0.0
        %3221 = vmatpush2.msra.mxu0 0.0
        %3222 = vmatprep.subr.mxu0 0.0
        %3223 = vmatpush2.msra.mxu0 0.0
        %3224 = vmatprep.subr.mxu0 0.0
        %3225 = vmatpush2.msra.mxu0 0.0
        %3226 = vmatprep.subr.mxu0 0.0
        %3227 = vmatpush2.msra.mxu0 0.0
        %3228 = vmatprep.subr.mxu0 0.0
        %3229 = vmatpush2.msra.mxu0 0.0
        %3230 = vmatprep.subr.mxu0 0.0
        %3231 = vmatpush2.msra.mxu0 0.0
        %3232 = vmatprep.subr.mxu0 0.0
        %3233 = vmatpush2.msra.mxu0 0.0
        %3234 = vmatprep.subr.mxu0 0.0
        %3235 = vmatpush2.msra.mxu0 0.0
        %3236 = vmatprep.subr.mxu0 0.0
        %3237 = vmatpush2.msra.mxu0 0.0
        %3238 = vmatprep.subr.mxu0 0.0
        %3239 = vmatpush2.msra.mxu0 0.0
        %3240 = vmatprep.subr.mxu0 0.0
        %3241 = vmatpush2.msra.mxu0 0.0
        %3242 = vmatprep.mubr.f32.mxu0 0.0
        %3243 = vmatmul.mubr.f32.gmra.mxu0 %v3173
        %v3244 = vpop.f32.mrf.mxu0
        %v3245 = vadd.f32 %v3171, %v3244
        %v3246 = vpop.f32.mrf.mxu0
        %3247 = vdwg.mxu0
        %3248 = vst [vmem:[%s594] sm:$0x1] %v3245
        %s3249 = sand.u32 %s445, 1
        %s3250 = scalar_lea.sflag [#allocation5], %s3249
        %s3251 = sand.u32 %s445, 1
        %s3252 = scalar_lea.vmem [#allocation4], %s3251
        // Predicated region
        $region97: #{net_forward.1} parent=95 // pred_check
          %p3253 = pneg %p455
        $region98: #{net_forward.1} parent=95 // pred_check_branch
          %3255 = sbr.rel (%p3253) target = $region100
        $region99: #{net_forward.1} parent=95 // pred_region
          %s3257 = ssub.s32 16, 16
          %3258 = vsyncadd %s3250, %s3257
          %s3259 = smul.addr %s33, 16
          %s3260 = scalar_lea.hbm %s19, %s3259
          %s3262 = sshll.u32 %s3252, 4
          %s3263 = int_to_ptr.vmem [resolvable:$true] %s3262
          %3265 = dma.vmem_to_hbm [thread:$0]  %s3263, 16, %s3260, %s3250
        $region100: #{net_forward.1} parent=95 // pred_fallthru
          _
      $region96: #{net_forward.1} parent=5 // pred_fallthru
        _
      %p3266 = scmp.le.s32.totalorder 2, %s28
      // Predicated region
      $region101: #{net_forward.1} parent=5 // pred_check
        %p3267 = pneg %p3266
      $region102: #{net_forward.1} parent=5 // pred_check_branch
        %3269 = sbr.rel (%p3267) target = $region104
      $region103: #{net_forward.1} parent=5 // pred_region
        %s3270 = ssub.s32 %s28, 2
        // Predicated region
        $region105: #{net_forward.1} parent=103 // pred_check
          %p3271 = pneg %p461
        $region106: #{net_forward.1} parent=103 // pred_check_branch
          %3273 = sbr.rel (%p3271) target = $region108
        $region107: #{net_forward.1} parent=103 // pred_region
          %s3274 = sand.u32 %s446, 1
          %s3275 = scalar_lea.sflag [#allocation5], %s3274
          %s3276 = sand.u32 %s446, 1
          %s3277 = scalar_lea.vmem [#allocation4], %s3276
          %3278 = dma.done %s3275, 16
        $region108: #{net_forward.1} parent=103 // pred_fallthru
          _
      $region104: #{net_forward.1} parent=5 // pred_fallthru
        _
    $region6: #{net_forward.1} parent=1 // loop_footer
      %s32 = sadd.s32 1, %s28
    $region7: #{net_forward.1} parent=1 // loop_footer_branch
      %27 = sbr.rel target = $region3
    $region8: #{net_forward.1} parent=1 // loop_exit
      _
    %3279 = vsyncpa [#allocation5], 1
    %s3280 = scalar_lea.sflag [#allocation5], 1
    %3281 = vsyncpa %s3280, 1

</llo_original>
